<compile_context>
chip_gen: v7x
topology: tpu7x:2x2x1
jax: 0.10.0
libtpu: 0.0.40
codegen_flags: <defaults>
</compile_context>

<pallas_src>
import functools

import jax
import jax.numpy as jnp
import numpy as np
from jax.experimental import pallas as pl
from jax.experimental.pallas import tpu as pltpu

EPS = 1e-5  # nn.InstanceNorm2d default eps


def _sam_kernel(lr_ref, ref_ref, masks_ref,
                w_lr_ref, w_rf_ref, b_sh_ref, w_gb_ref, b_gb_ref,
                out_ref, *, H, W, C, block_b):
    """SAM forward for `block_b` batch elements.

    lr_ref, ref_ref : (block_b, C, H*W)  channels on sublanes, spatial on lanes
    masks_ref       : (8, H*W)           per-tap boundary validity (non-center taps)
    w_lr_ref        : (9, C, C)          conv_shared weight, lr-channel half, per tap
    w_rf_ref        : (9, C, C)          conv_shared weight, ref-channel half, per tap
    b_sh_ref        : (C, 1)
    w_gb_ref        : (9, 2C, C)         fused [conv_gamma; conv_beta] weight per tap
    b_gb_ref        : (2C, 1)            fused [b_gamma; b_beta]
    """
    HW = H * W

    masks = masks_ref[...]          # (8, HW), loaded once, reused for all batch elems
    b_sh = b_sh_ref[...]            # (C, 1)
    b_gb = b_gb_ref[...]            # (2C, 1)

    taps = [(k, k // 3 - 1, k % 3 - 1) for k in range(9)]

    def shift(x, dy, dx):
        s = dy * W + dx
        return x if s == 0 else pltpu.roll(x, shift=(-s) % HW, axis=1)

    for bi in range(block_b):
        lr = lr_ref[bi]             # (C, HW)
        ref = ref_ref[bi]           # (C, HW)

        # ---- style = ReLU(conv_shared([lr, ref])), per-tap accumulation ----
        acc_s = jnp.zeros((C, HW), jnp.float32)
        for k, dy, dx in taps:
            part = (jnp.dot(w_lr_ref[k], shift(lr, dy, dx),
                            preferred_element_type=jnp.float32)
                    + jnp.dot(w_rf_ref[k], shift(ref, dy, dx),
                              preferred_element_type=jnp.float32))
            if k != 4:                       # mask the (C, HW) OUTPUT, not the 2C input
                m = k if k < 4 else k - 1
                part = part * masks[m:m + 1, :]
            acc_s = acc_s + part
        style = jnp.maximum(acc_s + b_sh, 0.0)           # (C, HW)

        # ---- fused gamma/beta conv: one dot per tap against shared rolled style ----
        acc_gb = jnp.zeros((2 * C, HW), jnp.float32)
        for k, dy, dx in taps:
            s_k = shift(style, dy, dx)
            if k != 4:                       # mask the C-row input (output is 2C rows)
                m = k if k < 4 else k - 1
                s_k = s_k * masks[m:m + 1, :]
            acc_gb = acc_gb + jnp.dot(w_gb_ref[k], s_k,
                                      preferred_element_type=jnp.float32)
        gb = acc_gb + b_gb                                # (2C, HW)
        gamma = gb[:C, :]
        beta = gb[C:, :]

        # ---- InstanceNorm2d(ref): biased variance, two-pass (dev needed anyway) ----
        r_mean = jnp.mean(ref, axis=1, keepdims=True)
        r_dev = ref - r_mean
        r_var = jnp.mean(r_dev * r_dev, axis=1, keepdims=True)
        ref_normed = r_dev * jax.lax.rsqrt(r_var + EPS)

        # ---- lr mean + unbiased (N-1) std from one pass of sums ----
        l_sum = jnp.sum(lr, axis=1, keepdims=True)
        l_sumsq = jnp.sum(lr * lr, axis=1, keepdims=True)
        l_mean = l_sum * (1.0 / HW)
        l_var = (l_sumsq - l_sum * l_mean) * (1.0 / (HW - 1))
        l_std = jnp.sqrt(jnp.maximum(l_var, 0.0))

        # use_residual=True path of the module
        out_ref[bi] = (ref_normed * (gamma + l_std)
                       + (beta + l_mean)).astype(out_ref.dtype)


def _per_tap_weights(w_hwio):
    """(3, 3, Cin, Cout) HWIO -> (9, Cout, Cin), tap index k = ky*3 + kx."""
    cin, cout = w_hwio.shape[2], w_hwio.shape[3]
    return jnp.transpose(w_hwio.reshape(9, cin, cout), (0, 2, 1))


def _build_tap_masks(H, W):
    """(8, H*W) f32 validity masks for the 8 non-center 3x3 taps (zero padding)."""
    HW = H * W
    yy = np.arange(HW) // W
    xx = np.arange(HW) % W
    rows = []
    for k in range(9):
        if k == 4:
            continue
        dy, dx = k // 3 - 1, k % 3 - 1
        ok = (yy + dy >= 0) & (yy + dy < H) & (xx + dx >= 0) & (xx + dx < W)
        rows.append(ok.astype(np.float32))
    return jnp.asarray(np.stack(rows, axis=0))


def sam_forward(lr_nchw, ref_nchw, params, *, block_b=1):
    """SAM forward (learnable=True, use_residual=True). NCHW in, NCHW out."""
    B, C, H, W = lr_nchw.shape
    HW = H * W
    assert HW > 1, "unbiased std needs H*W > 1"
    assert B % block_b == 0, "block_b must divide batch"

    # Free reshape: NCHW -> (B, C, H*W); no transposes needed in this layout.
    lr2 = lr_nchw.reshape(B, C, HW).astype(jnp.float32)
    ref2 = ref_nchw.reshape(B, C, HW).astype(jnp.float32)

    masks = _build_tap_masks(H, W)                                # (8, HW)

    w_lr = _per_tap_weights(params["w_shared"][:, :, :C, :])      # (9, C, C)
    w_rf = _per_tap_weights(params["w_shared"][:, :, C:, :])      # (9, C, C)
    b_sh = params["b_shared"].reshape(C, 1).astype(jnp.float32)
    # Fused [gamma; beta] weight: one (2C, C) matmul per tap, rows 0:C -> gamma.
    w_gb = jnp.concatenate([_per_tap_weights(params["w_gamma"]),
                            _per_tap_weights(params["w_beta"])], axis=1)  # (9, 2C, C)
    b_gb = jnp.concatenate([params["b_gamma"],
                            params["b_beta"]]).reshape(2 * C, 1).astype(jnp.float32)

    kernel = functools.partial(_sam_kernel, H=H, W=W, C=C, block_b=block_b)

    # TODO(synk): for large H*W (esp. v7x's 64 MiB VMEM), add a second grid axis
    # over row strips with a 1-row halo and set vmem_limit_bytes; at these shapes
    # a full image per grid step fits comfortably.
    # TODO(synk): optionally cast matmul operands to bf16 (f32 accumulation) on
    # v5e/v6e once a looser tolerance than 1e-4 is acceptable.
    out_flat = pl.pallas_call(
        kernel,
        out_shape=jax.ShapeDtypeStruct((B, C, HW), jnp.float32),
        grid_spec=pltpu.PrefetchScalarGridSpec(
            num_scalar_prefetch=0,
            grid=(B // block_b,),
            in_specs=[
                pl.BlockSpec((block_b, C, HW), lambda b: (b, 0, 0)),
                pl.BlockSpec((block_b, C, HW), lambda b: (b, 0, 0)),
                pl.BlockSpec((8, HW), lambda b: (0, 0)),
                pl.BlockSpec((9, C, C), lambda b: (0, 0, 0)),
                pl.BlockSpec((9, C, C), lambda b: (0, 0, 0)),
                pl.BlockSpec((C, 1), lambda b: (0, 0)),
                pl.BlockSpec((9, 2 * C, C), lambda b: (0, 0, 0)),
                pl.BlockSpec((2 * C, 1), lambda b: (0, 0)),
            ],
            out_specs=pl.BlockSpec((block_b, C, HW), lambda b: (b, 0, 0)),
        ),
        compiler_params=pltpu.CompilerParams(
            dimension_semantics=("parallel",)),  # batch blocks independent (v7x 2 TCs)
    )(lr2, ref2, masks, w_lr, w_rf, b_sh, w_gb, b_gb)

    return out_flat.reshape(B, C, H, W)


def sam_reference(lr_nchw, ref_nchw, params):
    """Pure-JAX reference matching the PyTorch forward exactly."""
    lr = jnp.transpose(lr_nchw, (0, 2, 3, 1)).astype(jnp.float32)
    ref = jnp.transpose(ref_nchw, (0, 2, 3, 1)).astype(jnp.float32)

    def conv(x, w, b):
        y = jax.lax.conv_general_dilated(
            x, w, window_strides=(1, 1), padding="SAME",
            dimension_numbers=("NHWC", "HWIO", "NHWC"))
        return y + b.reshape(1, 1, 1, -1)

    r_mean = ref.mean(axis=(1, 2), keepdims=True)
    r_var = ref.var(axis=(1, 2), keepdims=True)              # biased, as InstanceNorm2d
    ref_normed = (ref - r_mean) / jnp.sqrt(r_var + EPS)

    xcat = jnp.concatenate([lr, ref], axis=-1)
    style = jax.nn.relu(conv(xcat, params["w_shared"], params["b_shared"]))
    gamma = conv(style, params["w_gamma"], params["b_gamma"])
    beta = conv(style, params["w_beta"], params["b_beta"])

    lr_mean = lr.mean(axis=(1, 2), keepdims=True)
    lr_std = jnp.std(lr, axis=(1, 2), keepdims=True, ddof=1)  # torch.std (unbiased)

    gamma = gamma + lr_std
    beta = beta + lr_mean
    out = ref_normed * gamma + beta
    return jnp.transpose(out, (0, 3, 1, 2))


if __name__ == "__main__":
    nf, B, H, W = 4, 2, 16, 16
    key = jax.random.PRNGKey(0)
    k = jax.random.split(key, 8)

    lr = jax.random.normal(k[0], (B, nf, H, W), jnp.float32)
    ref = jax.random.normal(k[1], (B, nf, H, W), jnp.float32)

    # Deterministic synthetic parameters.
    # NOTE: the PyTorch __init__ zero-inits conv_gamma/conv_beta; we use small
    # non-zero values here so the conv path is numerically exercised.
    params = {
        "w_shared": jax.random.normal(k[2], (3, 3, 2 * nf, nf), jnp.float32) * 0.1,
        "b_shared": jax.random.normal(k[3], (nf,), jnp.float32) * 0.1,
        "w_gamma": jax.random.normal(k[4], (3, 3, nf, nf), jnp.float32) * 0.05,
        "b_gamma": jax.random.normal(k[5], (nf,), jnp.float32) * 0.05,
        "w_beta": jax.random.normal(k[6], (3, 3, nf, nf), jnp.float32) * 0.05,
        "b_beta": jax.random.normal(k[7], (nf,), jnp.float32) * 0.05,
    }

    out = jax.block_until_ready(sam_forward(lr, ref, params))
    expected = jax.block_until_ready(sam_reference(lr, ref, params))

    assert out.shape == (B, nf, H, W)
    np.testing.assert_allclose(np.asarray(out), np.asarray(expected),
                               rtol=1e-4, atol=1e-4)
    print("KERNEL_OK")
</pallas_src>

<mosaic_0001>
module attributes {stable_mosaic.version = 11 : i64} {
  func.func @_sam_kernel(%arg0: i32, %arg1: memref<1x4x256xf32, #tpu.memory_space<vmem>>, %arg2: memref<1x4x256xf32, #tpu.memory_space<vmem>>, %arg3: memref<8x256xf32, #tpu.memory_space<vmem>>, %arg4: memref<9x4x4xf32, #tpu.memory_space<vmem>>, %arg5: memref<9x4x4xf32, #tpu.memory_space<vmem>>, %arg6: memref<4x1xf32, #tpu.memory_space<vmem>>, %arg7: memref<9x8x4xf32, #tpu.memory_space<vmem>>, %arg8: memref<8x1xf32, #tpu.memory_space<vmem>>, %arg9: memref<1x4x256xf32, #tpu.memory_space<vmem>>) attributes {dimension_semantics = [#tpu.dimension_semantics<parallel>], iteration_bounds = array<i64: 2>, scalar_prefetch = 0 : i64, scratch_operands = 0 : i64, tpu.core_type = #tpu.core_type<tc>, window_params = [{transform_indices = @transform_0, window_bounds = array<i64: 1, 4, 256>}, {transform_indices = @transform_1, window_bounds = array<i64: 1, 4, 256>}, {pipeline_mode = #tpu.pipeline_mode<synchronous>, transform_indices = @transform_2, window_bounds = array<i64: 8, 256>}, {pipeline_mode = #tpu.pipeline_mode<synchronous>, transform_indices = @transform_3, window_bounds = array<i64: 9, 4, 4>}, {pipeline_mode = #tpu.pipeline_mode<synchronous>, transform_indices = @transform_4, window_bounds = array<i64: 9, 4, 4>}, {pipeline_mode = #tpu.pipeline_mode<synchronous>, transform_indices = @transform_5, window_bounds = array<i64: 4, 1>}, {pipeline_mode = #tpu.pipeline_mode<synchronous>, transform_indices = @transform_6, window_bounds = array<i64: 9, 8, 4>}, {pipeline_mode = #tpu.pipeline_mode<synchronous>, transform_indices = @transform_7, window_bounds = array<i64: 8, 1>}, {transform_indices = @transform_8, window_bounds = array<i64: 1, 4, 256>}]} {
    %c0 = arith.constant 0 : index
    %c0_0 = arith.constant 0 : index
    %0 = vector.load %arg3[%c0, %c0_0] : memref<8x256xf32, #tpu.memory_space<vmem>>, vector<8x256xf32>
    %c0_1 = arith.constant 0 : index
    %c0_2 = arith.constant 0 : index
    %1 = vector.load %arg6[%c0_1, %c0_2] : memref<4x1xf32, #tpu.memory_space<vmem>>, vector<4x1xf32>
    %c0_3 = arith.constant 0 : index
    %c0_4 = arith.constant 0 : index
    %2 = vector.load %arg8[%c0_3, %c0_4] : memref<8x1xf32, #tpu.memory_space<vmem>>, vector<8x1xf32>
    %c0_5 = arith.constant 0 : index
    %c0_6 = arith.constant 0 : index
    %c0_7 = arith.constant 0 : index
    %3 = vector.load %arg1[%c0_5, %c0_6, %c0_7] : memref<1x4x256xf32, #tpu.memory_space<vmem>>, vector<1x4x256xf32>
    %4 = vector.shape_cast %3 : vector<1x4x256xf32> to vector<4x256xf32>
    %c0_8 = arith.constant 0 : index
    %c0_9 = arith.constant 0 : index
    %c0_10 = arith.constant 0 : index
    %5 = vector.load %arg2[%c0_8, %c0_9, %c0_10] : memref<1x4x256xf32, #tpu.memory_space<vmem>>, vector<1x4x256xf32>
    %6 = vector.shape_cast %5 : vector<1x4x256xf32> to vector<4x256xf32>
    %cst = arith.constant 0.000000e+00 : f32
    %7 = vector.broadcast %cst : f32 to vector<4x256xf32>
    %c0_11 = arith.constant 0 : index
    %c0_12 = arith.constant 0 : index
    %c0_13 = arith.constant 0 : index
    %8 = vector.load %arg4[%c0_11, %c0_12, %c0_13] : memref<9x4x4xf32, #tpu.memory_space<vmem>>, vector<1x4x4xf32>
    %9 = vector.shape_cast %8 : vector<1x4x4xf32> to vector<4x4xf32>
    %c17_i32 = arith.constant 17 : i32
    %10 = tpu.dynamic_rotate %4 by %c17_i32 dim 1 : vector<4x256xf32>, i32 -> vector<4x256xf32>
    %cst_14 = arith.constant dense<0.000000e+00> : vector<4x256xf32>
    %11 = tpu.matmul %9, %10, %cst_14 {dimension_numbers = #tpu.dot_dimension_numbers<[1], [0], [0], [1], [0, 0, 1, 1], [], []>} : vector<4x4xf32>, vector<4x256xf32>, vector<4x256xf32> -> vector<4x256xf32>
    %c0_15 = arith.constant 0 : index
    %c0_16 = arith.constant 0 : index
    %c0_17 = arith.constant 0 : index
    %12 = vector.load %arg5[%c0_15, %c0_16, %c0_17] : memref<9x4x4xf32, #tpu.memory_space<vmem>>, vector<1x4x4xf32>
    %13 = vector.shape_cast %12 : vector<1x4x4xf32> to vector<4x4xf32>
    %c17_i32_18 = arith.constant 17 : i32
    %14 = tpu.dynamic_rotate %6 by %c17_i32_18 dim 1 : vector<4x256xf32>, i32 -> vector<4x256xf32>
    %cst_19 = arith.constant dense<0.000000e+00> : vector<4x256xf32>
    %15 = tpu.matmul %13, %14, %cst_19 {dimension_numbers = #tpu.dot_dimension_numbers<[1], [0], [0], [1], [0, 0, 1, 1], [], []>} : vector<4x4xf32>, vector<4x256xf32>, vector<4x256xf32> -> vector<4x256xf32>
    %16 = arith.addf %11, %15 : vector<4x256xf32>
    %17 = vector.extract_strided_slice %0 {offsets = [0, 0], sizes = [1, 256], strides = [1, 1]} : vector<8x256xf32> to vector<1x256xf32>
    %18 = vector.broadcast %17 : vector<1x256xf32> to vector<4x256xf32>
    %19 = arith.mulf %16, %18 : vector<4x256xf32>
    %20 = arith.addf %7, %19 : vector<4x256xf32>
    %c1 = arith.constant 1 : index
    %c0_20 = arith.constant 0 : index
    %c0_21 = arith.constant 0 : index
    %21 = vector.load %arg4[%c1, %c0_20, %c0_21] : memref<9x4x4xf32, #tpu.memory_space<vmem>>, vector<1x4x4xf32>
    %22 = vector.shape_cast %21 : vector<1x4x4xf32> to vector<4x4xf32>
    %c16_i32 = arith.constant 16 : i32
    %23 = tpu.dynamic_rotate %4 by %c16_i32 dim 1 : vector<4x256xf32>, i32 -> vector<4x256xf32>
    %cst_22 = arith.constant dense<0.000000e+00> : vector<4x256xf32>
    %24 = tpu.matmul %22, %23, %cst_22 {dimension_numbers = #tpu.dot_dimension_numbers<[1], [0], [0], [1], [0, 0, 1, 1], [], []>} : vector<4x4xf32>, vector<4x256xf32>, vector<4x256xf32> -> vector<4x256xf32>
    %c1_23 = arith.constant 1 : index
    %c0_24 = arith.constant 0 : index
    %c0_25 = arith.constant 0 : index
    %25 = vector.load %arg5[%c1_23, %c0_24, %c0_25] : memref<9x4x4xf32, #tpu.memory_space<vmem>>, vector<1x4x4xf32>
    %26 = vector.shape_cast %25 : vector<1x4x4xf32> to vector<4x4xf32>
    %c16_i32_26 = arith.constant 16 : i32
    %27 = tpu.dynamic_rotate %6 by %c16_i32_26 dim 1 : vector<4x256xf32>, i32 -> vector<4x256xf32>
    %cst_27 = arith.constant dense<0.000000e+00> : vector<4x256xf32>
    %28 = tpu.matmul %26, %27, %cst_27 {dimension_numbers = #tpu.dot_dimension_numbers<[1], [0], [0], [1], [0, 0, 1, 1], [], []>} : vector<4x4xf32>, vector<4x256xf32>, vector<4x256xf32> -> vector<4x256xf32>
    %29 = arith.addf %24, %28 : vector<4x256xf32>
    %30 = vector.extract_strided_slice %0 {offsets = [1, 0], sizes = [1, 256], strides = [1, 1]} : vector<8x256xf32> to vector<1x256xf32>
    %31 = vector.broadcast %30 : vector<1x256xf32> to vector<4x256xf32>
    %32 = arith.mulf %29, %31 : vector<4x256xf32>
    %33 = arith.addf %20, %32 : vector<4x256xf32>
    %c2 = arith.constant 2 : index
    %c0_28 = arith.constant 0 : index
    %c0_29 = arith.constant 0 : index
    %34 = vector.load %arg4[%c2, %c0_28, %c0_29] : memref<9x4x4xf32, #tpu.memory_space<vmem>>, vector<1x4x4xf32>
    %35 = vector.shape_cast %34 : vector<1x4x4xf32> to vector<4x4xf32>
    %c15_i32 = arith.constant 15 : i32
    %36 = tpu.dynamic_rotate %4 by %c15_i32 dim 1 : vector<4x256xf32>, i32 -> vector<4x256xf32>
    %cst_30 = arith.constant dense<0.000000e+00> : vector<4x256xf32>
    %37 = tpu.matmul %35, %36, %cst_30 {dimension_numbers = #tpu.dot_dimension_numbers<[1], [0], [0], [1], [0, 0, 1, 1], [], []>} : vector<4x4xf32>, vector<4x256xf32>, vector<4x256xf32> -> vector<4x256xf32>
    %c2_31 = arith.constant 2 : index
    %c0_32 = arith.constant 0 : index
    %c0_33 = arith.constant 0 : index
    %38 = vector.load %arg5[%c2_31, %c0_32, %c0_33] : memref<9x4x4xf32, #tpu.memory_space<vmem>>, vector<1x4x4xf32>
    %39 = vector.shape_cast %38 : vector<1x4x4xf32> to vector<4x4xf32>
    %c15_i32_34 = arith.constant 15 : i32
    %40 = tpu.dynamic_rotate %6 by %c15_i32_34 dim 1 : vector<4x256xf32>, i32 -> vector<4x256xf32>
    %cst_35 = arith.constant dense<0.000000e+00> : vector<4x256xf32>
    %41 = tpu.matmul %39, %40, %cst_35 {dimension_numbers = #tpu.dot_dimension_numbers<[1], [0], [0], [1], [0, 0, 1, 1], [], []>} : vector<4x4xf32>, vector<4x256xf32>, vector<4x256xf32> -> vector<4x256xf32>
    %42 = arith.addf %37, %41 : vector<4x256xf32>
    %43 = vector.extract_strided_slice %0 {offsets = [2, 0], sizes = [1, 256], strides = [1, 1]} : vector<8x256xf32> to vector<1x256xf32>
    %44 = vector.broadcast %43 : vector<1x256xf32> to vector<4x256xf32>
    %45 = arith.mulf %42, %44 : vector<4x256xf32>
    %46 = arith.addf %33, %45 : vector<4x256xf32>
    %c3 = arith.constant 3 : index
    %c0_36 = arith.constant 0 : index
    %c0_37 = arith.constant 0 : index
    %47 = vector.load %arg4[%c3, %c0_36, %c0_37] : memref<9x4x4xf32, #tpu.memory_space<vmem>>, vector<1x4x4xf32>
    %48 = vector.shape_cast %47 : vector<1x4x4xf32> to vector<4x4xf32>
    %c1_i32 = arith.constant 1 : i32
    %49 = tpu.dynamic_rotate %4 by %c1_i32 dim 1 : vector<4x256xf32>, i32 -> vector<4x256xf32>
    %cst_38 = arith.constant dense<0.000000e+00> : vector<4x256xf32>
    %50 = tpu.matmul %48, %49, %cst_38 {dimension_numbers = #tpu.dot_dimension_numbers<[1], [0], [0], [1], [0, 0, 1, 1], [], []>} : vector<4x4xf32>, vector<4x256xf32>, vector<4x256xf32> -> vector<4x256xf32>
    %c3_39 = arith.constant 3 : index
    %c0_40 = arith.constant 0 : index
    %c0_41 = arith.constant 0 : index
    %51 = vector.load %arg5[%c3_39, %c0_40, %c0_41] : memref<9x4x4xf32, #tpu.memory_space<vmem>>, vector<1x4x4xf32>
    %52 = vector.shape_cast %51 : vector<1x4x4xf32> to vector<4x4xf32>
    %c1_i32_42 = arith.constant 1 : i32
    %53 = tpu.dynamic_rotate %6 by %c1_i32_42 dim 1 : vector<4x256xf32>, i32 -> vector<4x256xf32>
    %cst_43 = arith.constant dense<0.000000e+00> : vector<4x256xf32>
    %54 = tpu.matmul %52, %53, %cst_43 {dimension_numbers = #tpu.dot_dimension_numbers<[1], [0], [0], [1], [0, 0, 1, 1], [], []>} : vector<4x4xf32>, vector<4x256xf32>, vector<4x256xf32> -> vector<4x256xf32>
    %55 = arith.addf %50, %54 : vector<4x256xf32>
    %56 = vector.extract_strided_slice %0 {offsets = [3, 0], sizes = [1, 256], strides = [1, 1]} : vector<8x256xf32> to vector<1x256xf32>
    %57 = vector.broadcast %56 : vector<1x256xf32> to vector<4x256xf32>
    %58 = arith.mulf %55, %57 : vector<4x256xf32>
    %59 = arith.addf %46, %58 : vector<4x256xf32>
    %c4 = arith.constant 4 : index
    %c0_44 = arith.constant 0 : index
    %c0_45 = arith.constant 0 : index
    %60 = vector.load %arg4[%c4, %c0_44, %c0_45] : memref<9x4x4xf32, #tpu.memory_space<vmem>>, vector<1x4x4xf32>
    %61 = vector.shape_cast %60 : vector<1x4x4xf32> to vector<4x4xf32>
    %cst_46 = arith.constant dense<0.000000e+00> : vector<4x256xf32>
    %62 = tpu.matmul %61, %4, %cst_46 {dimension_numbers = #tpu.dot_dimension_numbers<[1], [0], [0], [1], [0, 0, 1, 1], [], []>} : vector<4x4xf32>, vector<4x256xf32>, vector<4x256xf32> -> vector<4x256xf32>
    %c4_47 = arith.constant 4 : index
    %c0_48 = arith.constant 0 : index
    %c0_49 = arith.constant 0 : index
    %63 = vector.load %arg5[%c4_47, %c0_48, %c0_49] : memref<9x4x4xf32, #tpu.memory_space<vmem>>, vector<1x4x4xf32>
    %64 = vector.shape_cast %63 : vector<1x4x4xf32> to vector<4x4xf32>
    %cst_50 = arith.constant dense<0.000000e+00> : vector<4x256xf32>
    %65 = tpu.matmul %64, %6, %cst_50 {dimension_numbers = #tpu.dot_dimension_numbers<[1], [0], [0], [1], [0, 0, 1, 1], [], []>} : vector<4x4xf32>, vector<4x256xf32>, vector<4x256xf32> -> vector<4x256xf32>
    %66 = arith.addf %62, %65 : vector<4x256xf32>
    %67 = arith.addf %59, %66 : vector<4x256xf32>
    %c5 = arith.constant 5 : index
    %c0_51 = arith.constant 0 : index
    %c0_52 = arith.constant 0 : index
    %68 = vector.load %arg4[%c5, %c0_51, %c0_52] : memref<9x4x4xf32, #tpu.memory_space<vmem>>, vector<1x4x4xf32>
    %69 = vector.shape_cast %68 : vector<1x4x4xf32> to vector<4x4xf32>
    %c255_i32 = arith.constant 255 : i32
    %70 = tpu.dynamic_rotate %4 by %c255_i32 dim 1 : vector<4x256xf32>, i32 -> vector<4x256xf32>
    %cst_53 = arith.constant dense<0.000000e+00> : vector<4x256xf32>
    %71 = tpu.matmul %69, %70, %cst_53 {dimension_numbers = #tpu.dot_dimension_numbers<[1], [0], [0], [1], [0, 0, 1, 1], [], []>} : vector<4x4xf32>, vector<4x256xf32>, vector<4x256xf32> -> vector<4x256xf32>
    %c5_54 = arith.constant 5 : index
    %c0_55 = arith.constant 0 : index
    %c0_56 = arith.constant 0 : index
    %72 = vector.load %arg5[%c5_54, %c0_55, %c0_56] : memref<9x4x4xf32, #tpu.memory_space<vmem>>, vector<1x4x4xf32>
    %73 = vector.shape_cast %72 : vector<1x4x4xf32> to vector<4x4xf32>
    %c255_i32_57 = arith.constant 255 : i32
    %74 = tpu.dynamic_rotate %6 by %c255_i32_57 dim 1 : vector<4x256xf32>, i32 -> vector<4x256xf32>
    %cst_58 = arith.constant dense<0.000000e+00> : vector<4x256xf32>
    %75 = tpu.matmul %73, %74, %cst_58 {dimension_numbers = #tpu.dot_dimension_numbers<[1], [0], [0], [1], [0, 0, 1, 1], [], []>} : vector<4x4xf32>, vector<4x256xf32>, vector<4x256xf32> -> vector<4x256xf32>
    %76 = arith.addf %71, %75 : vector<4x256xf32>
    %77 = vector.extract_strided_slice %0 {offsets = [4, 0], sizes = [1, 256], strides = [1, 1]} : vector<8x256xf32> to vector<1x256xf32>
    %78 = vector.broadcast %77 : vector<1x256xf32> to vector<4x256xf32>
    %79 = arith.mulf %76, %78 : vector<4x256xf32>
    %80 = arith.addf %67, %79 : vector<4x256xf32>
    %c6 = arith.constant 6 : index
    %c0_59 = arith.constant 0 : index
    %c0_60 = arith.constant 0 : index
    %81 = vector.load %arg4[%c6, %c0_59, %c0_60] : memref<9x4x4xf32, #tpu.memory_space<vmem>>, vector<1x4x4xf32>
    %82 = vector.shape_cast %81 : vector<1x4x4xf32> to vector<4x4xf32>
    %c241_i32 = arith.constant 241 : i32
    %83 = tpu.dynamic_rotate %4 by %c241_i32 dim 1 : vector<4x256xf32>, i32 -> vector<4x256xf32>
    %cst_61 = arith.constant dense<0.000000e+00> : vector<4x256xf32>
    %84 = tpu.matmul %82, %83, %cst_61 {dimension_numbers = #tpu.dot_dimension_numbers<[1], [0], [0], [1], [0, 0, 1, 1], [], []>} : vector<4x4xf32>, vector<4x256xf32>, vector<4x256xf32> -> vector<4x256xf32>
    %c6_62 = arith.constant 6 : index
    %c0_63 = arith.constant 0 : index
    %c0_64 = arith.constant 0 : index
    %85 = vector.load %arg5[%c6_62, %c0_63, %c0_64] : memref<9x4x4xf32, #tpu.memory_space<vmem>>, vector<1x4x4xf32>
    %86 = vector.shape_cast %85 : vector<1x4x4xf32> to vector<4x4xf32>
    %c241_i32_65 = arith.constant 241 : i32
    %87 = tpu.dynamic_rotate %6 by %c241_i32_65 dim 1 : vector<4x256xf32>, i32 -> vector<4x256xf32>
    %cst_66 = arith.constant dense<0.000000e+00> : vector<4x256xf32>
    %88 = tpu.matmul %86, %87, %cst_66 {dimension_numbers = #tpu.dot_dimension_numbers<[1], [0], [0], [1], [0, 0, 1, 1], [], []>} : vector<4x4xf32>, vector<4x256xf32>, vector<4x256xf32> -> vector<4x256xf32>
    %89 = arith.addf %84, %88 : vector<4x256xf32>
    %90 = vector.extract_strided_slice %0 {offsets = [5, 0], sizes = [1, 256], strides = [1, 1]} : vector<8x256xf32> to vector<1x256xf32>
    %91 = vector.broadcast %90 : vector<1x256xf32> to vector<4x256xf32>
    %92 = arith.mulf %89, %91 : vector<4x256xf32>
    %93 = arith.addf %80, %92 : vector<4x256xf32>
    %c7 = arith.constant 7 : index
    %c0_67 = arith.constant 0 : index
    %c0_68 = arith.constant 0 : index
    %94 = vector.load %arg4[%c7, %c0_67, %c0_68] : memref<9x4x4xf32, #tpu.memory_space<vmem>>, vector<1x4x4xf32>
    %95 = vector.shape_cast %94 : vector<1x4x4xf32> to vector<4x4xf32>
    %c240_i32 = arith.constant 240 : i32
    %96 = tpu.dynamic_rotate %4 by %c240_i32 dim 1 : vector<4x256xf32>, i32 -> vector<4x256xf32>
    %cst_69 = arith.constant dense<0.000000e+00> : vector<4x256xf32>
    %97 = tpu.matmul %95, %96, %cst_69 {dimension_numbers = #tpu.dot_dimension_numbers<[1], [0], [0], [1], [0, 0, 1, 1], [], []>} : vector<4x4xf32>, vector<4x256xf32>, vector<4x256xf32> -> vector<4x256xf32>
    %c7_70 = arith.constant 7 : index
    %c0_71 = arith.constant 0 : index
    %c0_72 = arith.constant 0 : index
    %98 = vector.load %arg5[%c7_70, %c0_71, %c0_72] : memref<9x4x4xf32, #tpu.memory_space<vmem>>, vector<1x4x4xf32>
    %99 = vector.shape_cast %98 : vector<1x4x4xf32> to vector<4x4xf32>
    %c240_i32_73 = arith.constant 240 : i32
    %100 = tpu.dynamic_rotate %6 by %c240_i32_73 dim 1 : vector<4x256xf32>, i32 -> vector<4x256xf32>
    %cst_74 = arith.constant dense<0.000000e+00> : vector<4x256xf32>
    %101 = tpu.matmul %99, %100, %cst_74 {dimension_numbers = #tpu.dot_dimension_numbers<[1], [0], [0], [1], [0, 0, 1, 1], [], []>} : vector<4x4xf32>, vector<4x256xf32>, vector<4x256xf32> -> vector<4x256xf32>
    %102 = arith.addf %97, %101 : vector<4x256xf32>
    %103 = vector.extract_strided_slice %0 {offsets = [6, 0], sizes = [1, 256], strides = [1, 1]} : vector<8x256xf32> to vector<1x256xf32>
    %104 = vector.broadcast %103 : vector<1x256xf32> to vector<4x256xf32>
    %105 = arith.mulf %102, %104 : vector<4x256xf32>
    %106 = arith.addf %93, %105 : vector<4x256xf32>
    %c8 = arith.constant 8 : index
    %c0_75 = arith.constant 0 : index
    %c0_76 = arith.constant 0 : index
    %107 = vector.load %arg4[%c8, %c0_75, %c0_76] : memref<9x4x4xf32, #tpu.memory_space<vmem>>, vector<1x4x4xf32>
    %108 = vector.shape_cast %107 : vector<1x4x4xf32> to vector<4x4xf32>
    %c239_i32 = arith.constant 239 : i32
    %109 = tpu.dynamic_rotate %4 by %c239_i32 dim 1 : vector<4x256xf32>, i32 -> vector<4x256xf32>
    %cst_77 = arith.constant dense<0.000000e+00> : vector<4x256xf32>
    %110 = tpu.matmul %108, %109, %cst_77 {dimension_numbers = #tpu.dot_dimension_numbers<[1], [0], [0], [1], [0, 0, 1, 1], [], []>} : vector<4x4xf32>, vector<4x256xf32>, vector<4x256xf32> -> vector<4x256xf32>
    %c8_78 = arith.constant 8 : index
    %c0_79 = arith.constant 0 : index
    %c0_80 = arith.constant 0 : index
    %111 = vector.load %arg5[%c8_78, %c0_79, %c0_80] : memref<9x4x4xf32, #tpu.memory_space<vmem>>, vector<1x4x4xf32>
    %112 = vector.shape_cast %111 : vector<1x4x4xf32> to vector<4x4xf32>
    %c239_i32_81 = arith.constant 239 : i32
    %113 = tpu.dynamic_rotate %6 by %c239_i32_81 dim 1 : vector<4x256xf32>, i32 -> vector<4x256xf32>
    %cst_82 = arith.constant dense<0.000000e+00> : vector<4x256xf32>
    %114 = tpu.matmul %112, %113, %cst_82 {dimension_numbers = #tpu.dot_dimension_numbers<[1], [0], [0], [1], [0, 0, 1, 1], [], []>} : vector<4x4xf32>, vector<4x256xf32>, vector<4x256xf32> -> vector<4x256xf32>
    %115 = arith.addf %110, %114 : vector<4x256xf32>
    %116 = vector.extract_strided_slice %0 {offsets = [7, 0], sizes = [1, 256], strides = [1, 1]} : vector<8x256xf32> to vector<1x256xf32>
    %117 = vector.broadcast %116 : vector<1x256xf32> to vector<4x256xf32>
    %118 = arith.mulf %115, %117 : vector<4x256xf32>
    %119 = arith.addf %106, %118 : vector<4x256xf32>
    %120 = vector.broadcast %1 : vector<4x1xf32> to vector<4x256xf32>
    %121 = arith.addf %119, %120 : vector<4x256xf32>
    %cst_83 = arith.constant 0.000000e+00 : f32
    %122 = vector.broadcast %cst_83 : f32 to vector<4x256xf32>
    %123 = arith.maximumf %121, %122 : vector<4x256xf32>
    %cst_84 = arith.constant 0.000000e+00 : f32
    %124 = vector.broadcast %cst_84 : f32 to vector<8x256xf32>
    %c17_i32_85 = arith.constant 17 : i32
    %125 = tpu.dynamic_rotate %123 by %c17_i32_85 dim 1 : vector<4x256xf32>, i32 -> vector<4x256xf32>
    %126 = vector.extract_strided_slice %0 {offsets = [0, 0], sizes = [1, 256], strides = [1, 1]} : vector<8x256xf32> to vector<1x256xf32>
    %127 = vector.broadcast %126 : vector<1x256xf32> to vector<4x256xf32>
    %128 = arith.mulf %125, %127 : vector<4x256xf32>
    %c0_86 = arith.constant 0 : index
    %c0_87 = arith.constant 0 : index
    %c0_88 = arith.constant 0 : index
    %129 = vector.load %arg7[%c0_86, %c0_87, %c0_88] : memref<9x8x4xf32, #tpu.memory_space<vmem>>, vector<1x8x4xf32>
    %130 = vector.shape_cast %129 : vector<1x8x4xf32> to vector<8x4xf32>
    %cst_89 = arith.constant dense<0.000000e+00> : vector<8x256xf32>
    %131 = tpu.matmul %130, %128, %cst_89 {dimension_numbers = #tpu.dot_dimension_numbers<[1], [0], [0], [1], [0, 0, 1, 1], [], []>} : vector<8x4xf32>, vector<4x256xf32>, vector<8x256xf32> -> vector<8x256xf32>
    %132 = arith.addf %124, %131 : vector<8x256xf32>
    %c16_i32_90 = arith.constant 16 : i32
    %133 = tpu.dynamic_rotate %123 by %c16_i32_90 dim 1 : vector<4x256xf32>, i32 -> vector<4x256xf32>
    %134 = vector.extract_strided_slice %0 {offsets = [1, 0], sizes = [1, 256], strides = [1, 1]} : vector<8x256xf32> to vector<1x256xf32>
    %135 = vector.broadcast %134 : vector<1x256xf32> to vector<4x256xf32>
    %136 = arith.mulf %133, %135 : vector<4x256xf32>
    %c1_91 = arith.constant 1 : index
    %c0_92 = arith.constant 0 : index
    %c0_93 = arith.constant 0 : index
    %137 = vector.load %arg7[%c1_91, %c0_92, %c0_93] : memref<9x8x4xf32, #tpu.memory_space<vmem>>, vector<1x8x4xf32>
    %138 = vector.shape_cast %137 : vector<1x8x4xf32> to vector<8x4xf32>
    %cst_94 = arith.constant dense<0.000000e+00> : vector<8x256xf32>
    %139 = tpu.matmul %138, %136, %cst_94 {dimension_numbers = #tpu.dot_dimension_numbers<[1], [0], [0], [1], [0, 0, 1, 1], [], []>} : vector<8x4xf32>, vector<4x256xf32>, vector<8x256xf32> -> vector<8x256xf32>
    %140 = arith.addf %132, %139 : vector<8x256xf32>
    %c15_i32_95 = arith.constant 15 : i32
    %141 = tpu.dynamic_rotate %123 by %c15_i32_95 dim 1 : vector<4x256xf32>, i32 -> vector<4x256xf32>
    %142 = vector.extract_strided_slice %0 {offsets = [2, 0], sizes = [1, 256], strides = [1, 1]} : vector<8x256xf32> to vector<1x256xf32>
    %143 = vector.broadcast %142 : vector<1x256xf32> to vector<4x256xf32>
    %144 = arith.mulf %141, %143 : vector<4x256xf32>
    %c2_96 = arith.constant 2 : index
    %c0_97 = arith.constant 0 : index
    %c0_98 = arith.constant 0 : index
    %145 = vector.load %arg7[%c2_96, %c0_97, %c0_98] : memref<9x8x4xf32, #tpu.memory_space<vmem>>, vector<1x8x4xf32>
    %146 = vector.shape_cast %145 : vector<1x8x4xf32> to vector<8x4xf32>
    %cst_99 = arith.constant dense<0.000000e+00> : vector<8x256xf32>
    %147 = tpu.matmul %146, %144, %cst_99 {dimension_numbers = #tpu.dot_dimension_numbers<[1], [0], [0], [1], [0, 0, 1, 1], [], []>} : vector<8x4xf32>, vector<4x256xf32>, vector<8x256xf32> -> vector<8x256xf32>
    %148 = arith.addf %140, %147 : vector<8x256xf32>
    %c1_i32_100 = arith.constant 1 : i32
    %149 = tpu.dynamic_rotate %123 by %c1_i32_100 dim 1 : vector<4x256xf32>, i32 -> vector<4x256xf32>
    %150 = vector.extract_strided_slice %0 {offsets = [3, 0], sizes = [1, 256], strides = [1, 1]} : vector<8x256xf32> to vector<1x256xf32>
    %151 = vector.broadcast %150 : vector<1x256xf32> to vector<4x256xf32>
    %152 = arith.mulf %149, %151 : vector<4x256xf32>
    %c3_101 = arith.constant 3 : index
    %c0_102 = arith.constant 0 : index
    %c0_103 = arith.constant 0 : index
    %153 = vector.load %arg7[%c3_101, %c0_102, %c0_103] : memref<9x8x4xf32, #tpu.memory_space<vmem>>, vector<1x8x4xf32>
    %154 = vector.shape_cast %153 : vector<1x8x4xf32> to vector<8x4xf32>
    %cst_104 = arith.constant dense<0.000000e+00> : vector<8x256xf32>
    %155 = tpu.matmul %154, %152, %cst_104 {dimension_numbers = #tpu.dot_dimension_numbers<[1], [0], [0], [1], [0, 0, 1, 1], [], []>} : vector<8x4xf32>, vector<4x256xf32>, vector<8x256xf32> -> vector<8x256xf32>
    %156 = arith.addf %148, %155 : vector<8x256xf32>
    %c4_105 = arith.constant 4 : index
    %c0_106 = arith.constant 0 : index
    %c0_107 = arith.constant 0 : index
    %157 = vector.load %arg7[%c4_105, %c0_106, %c0_107] : memref<9x8x4xf32, #tpu.memory_space<vmem>>, vector<1x8x4xf32>
    %158 = vector.shape_cast %157 : vector<1x8x4xf32> to vector<8x4xf32>
    %cst_108 = arith.constant dense<0.000000e+00> : vector<8x256xf32>
    %159 = tpu.matmul %158, %123, %cst_108 {dimension_numbers = #tpu.dot_dimension_numbers<[1], [0], [0], [1], [0, 0, 1, 1], [], []>} : vector<8x4xf32>, vector<4x256xf32>, vector<8x256xf32> -> vector<8x256xf32>
    %160 = arith.addf %156, %159 : vector<8x256xf32>
    %c255_i32_109 = arith.constant 255 : i32
    %161 = tpu.dynamic_rotate %123 by %c255_i32_109 dim 1 : vector<4x256xf32>, i32 -> vector<4x256xf32>
    %162 = vector.extract_strided_slice %0 {offsets = [4, 0], sizes = [1, 256], strides = [1, 1]} : vector<8x256xf32> to vector<1x256xf32>
    %163 = vector.broadcast %162 : vector<1x256xf32> to vector<4x256xf32>
    %164 = arith.mulf %161, %163 : vector<4x256xf32>
    %c5_110 = arith.constant 5 : index
    %c0_111 = arith.constant 0 : index
    %c0_112 = arith.constant 0 : index
    %165 = vector.load %arg7[%c5_110, %c0_111, %c0_112] : memref<9x8x4xf32, #tpu.memory_space<vmem>>, vector<1x8x4xf32>
    %166 = vector.shape_cast %165 : vector<1x8x4xf32> to vector<8x4xf32>
    %cst_113 = arith.constant dense<0.000000e+00> : vector<8x256xf32>
    %167 = tpu.matmul %166, %164, %cst_113 {dimension_numbers = #tpu.dot_dimension_numbers<[1], [0], [0], [1], [0, 0, 1, 1], [], []>} : vector<8x4xf32>, vector<4x256xf32>, vector<8x256xf32> -> vector<8x256xf32>
    %168 = arith.addf %160, %167 : vector<8x256xf32>
    %c241_i32_114 = arith.constant 241 : i32
    %169 = tpu.dynamic_rotate %123 by %c241_i32_114 dim 1 : vector<4x256xf32>, i32 -> vector<4x256xf32>
    %170 = vector.extract_strided_slice %0 {offsets = [5, 0], sizes = [1, 256], strides = [1, 1]} : vector<8x256xf32> to vector<1x256xf32>
    %171 = vector.broadcast %170 : vector<1x256xf32> to vector<4x256xf32>
    %172 = arith.mulf %169, %171 : vector<4x256xf32>
    %c6_115 = arith.constant 6 : index
    %c0_116 = arith.constant 0 : index
    %c0_117 = arith.constant 0 : index
    %173 = vector.load %arg7[%c6_115, %c0_116, %c0_117] : memref<9x8x4xf32, #tpu.memory_space<vmem>>, vector<1x8x4xf32>
    %174 = vector.shape_cast %173 : vector<1x8x4xf32> to vector<8x4xf32>
    %cst_118 = arith.constant dense<0.000000e+00> : vector<8x256xf32>
    %175 = tpu.matmul %174, %172, %cst_118 {dimension_numbers = #tpu.dot_dimension_numbers<[1], [0], [0], [1], [0, 0, 1, 1], [], []>} : vector<8x4xf32>, vector<4x256xf32>, vector<8x256xf32> -> vector<8x256xf32>
    %176 = arith.addf %168, %175 : vector<8x256xf32>
    %c240_i32_119 = arith.constant 240 : i32
    %177 = tpu.dynamic_rotate %123 by %c240_i32_119 dim 1 : vector<4x256xf32>, i32 -> vector<4x256xf32>
    %178 = vector.extract_strided_slice %0 {offsets = [6, 0], sizes = [1, 256], strides = [1, 1]} : vector<8x256xf32> to vector<1x256xf32>
    %179 = vector.broadcast %178 : vector<1x256xf32> to vector<4x256xf32>
    %180 = arith.mulf %177, %179 : vector<4x256xf32>
    %c7_120 = arith.constant 7 : index
    %c0_121 = arith.constant 0 : index
    %c0_122 = arith.constant 0 : index
    %181 = vector.load %arg7[%c7_120, %c0_121, %c0_122] : memref<9x8x4xf32, #tpu.memory_space<vmem>>, vector<1x8x4xf32>
    %182 = vector.shape_cast %181 : vector<1x8x4xf32> to vector<8x4xf32>
    %cst_123 = arith.constant dense<0.000000e+00> : vector<8x256xf32>
    %183 = tpu.matmul %182, %180, %cst_123 {dimension_numbers = #tpu.dot_dimension_numbers<[1], [0], [0], [1], [0, 0, 1, 1], [], []>} : vector<8x4xf32>, vector<4x256xf32>, vector<8x256xf32> -> vector<8x256xf32>
    %184 = arith.addf %176, %183 : vector<8x256xf32>
    %c239_i32_124 = arith.constant 239 : i32
    %185 = tpu.dynamic_rotate %123 by %c239_i32_124 dim 1 : vector<4x256xf32>, i32 -> vector<4x256xf32>
    %186 = vector.extract_strided_slice %0 {offsets = [7, 0], sizes = [1, 256], strides = [1, 1]} : vector<8x256xf32> to vector<1x256xf32>
    %187 = vector.broadcast %186 : vector<1x256xf32> to vector<4x256xf32>
    %188 = arith.mulf %185, %187 : vector<4x256xf32>
    %c8_125 = arith.constant 8 : index
    %c0_126 = arith.constant 0 : index
    %c0_127 = arith.constant 0 : index
    %189 = vector.load %arg7[%c8_125, %c0_126, %c0_127] : memref<9x8x4xf32, #tpu.memory_space<vmem>>, vector<1x8x4xf32>
    %190 = vector.shape_cast %189 : vector<1x8x4xf32> to vector<8x4xf32>
    %cst_128 = arith.constant dense<0.000000e+00> : vector<8x256xf32>
    %191 = tpu.matmul %190, %188, %cst_128 {dimension_numbers = #tpu.dot_dimension_numbers<[1], [0], [0], [1], [0, 0, 1, 1], [], []>} : vector<8x4xf32>, vector<4x256xf32>, vector<8x256xf32> -> vector<8x256xf32>
    %192 = arith.addf %184, %191 : vector<8x256xf32>
    %193 = vector.broadcast %2 : vector<8x1xf32> to vector<8x256xf32>
    %194 = arith.addf %192, %193 : vector<8x256xf32>
    %195 = vector.extract_strided_slice %194 {offsets = [0, 0], sizes = [4, 256], strides = [1, 1]} : vector<8x256xf32> to vector<4x256xf32>
    %196 = vector.extract_strided_slice %194 {offsets = [4, 0], sizes = [4, 256], strides = [1, 1]} : vector<8x256xf32> to vector<4x256xf32>
    %cst_129 = arith.constant dense<0.000000e+00> : vector<4xf32>
    %197 = vector.multi_reduction <add>, %6, %cst_129 [1] : vector<4x256xf32> to vector<4xf32>
    %198 = vector.shape_cast %197 : vector<4xf32> to vector<4x1xf32>
    %cst_130 = arith.constant 2.560000e+02 : f32
    %199 = vector.broadcast %cst_130 : f32 to vector<4x1xf32>
    %200 = arith.divf %198, %199 : vector<4x1xf32>
    %201 = vector.broadcast %200 : vector<4x1xf32> to vector<4x256xf32>
    %202 = arith.subf %6, %201 : vector<4x256xf32>
    %203 = arith.mulf %202, %202 : vector<4x256xf32>
    %cst_131 = arith.constant dense<0.000000e+00> : vector<4xf32>
    %204 = vector.multi_reduction <add>, %203, %cst_131 [1] : vector<4x256xf32> to vector<4xf32>
    %205 = vector.shape_cast %204 : vector<4xf32> to vector<4x1xf32>
    %cst_132 = arith.constant 2.560000e+02 : f32
    %206 = vector.broadcast %cst_132 : f32 to vector<4x1xf32>
    %207 = arith.divf %205, %206 : vector<4x1xf32>
    %cst_133 = arith.constant 9.99999974E-6 : f32
    %208 = vector.broadcast %cst_133 : f32 to vector<4x1xf32>
    %209 = arith.addf %207, %208 : vector<4x1xf32>
    %210 = math.rsqrt %209 : vector<4x1xf32>
    %211 = vector.broadcast %210 : vector<4x1xf32> to vector<4x256xf32>
    %212 = arith.mulf %202, %211 : vector<4x256xf32>
    %cst_134 = arith.constant dense<0.000000e+00> : vector<4xf32>
    %213 = vector.multi_reduction <add>, %4, %cst_134 [1] : vector<4x256xf32> to vector<4xf32>
    %214 = vector.shape_cast %213 : vector<4xf32> to vector<4x1xf32>
    %215 = arith.mulf %4, %4 : vector<4x256xf32>
    %cst_135 = arith.constant dense<0.000000e+00> : vector<4xf32>
    %216 = vector.multi_reduction <add>, %215, %cst_135 [1] : vector<4x256xf32> to vector<4xf32>
    %217 = vector.shape_cast %216 : vector<4xf32> to vector<4x1xf32>
    %cst_136 = arith.constant 3.906250e-03 : f32
    %218 = vector.broadcast %cst_136 : f32 to vector<4x1xf32>
    %219 = arith.mulf %214, %218 : vector<4x1xf32>
    %220 = arith.mulf %214, %219 : vector<4x1xf32>
    %221 = arith.subf %217, %220 : vector<4x1xf32>
    %cst_137 = arith.constant 0.00392156886 : f32
    %222 = vector.broadcast %cst_137 : f32 to vector<4x1xf32>
    %223 = arith.mulf %221, %222 : vector<4x1xf32>
    %cst_138 = arith.constant 0.000000e+00 : f32
    %224 = vector.broadcast %cst_138 : f32 to vector<4x1xf32>
    %225 = arith.maximumf %223, %224 : vector<4x1xf32>
    %226 = math.sqrt %225 : vector<4x1xf32>
    %227 = vector.broadcast %226 : vector<4x1xf32> to vector<4x256xf32>
    %228 = arith.addf %195, %227 : vector<4x256xf32>
    %229 = arith.mulf %212, %228 : vector<4x256xf32>
    %230 = vector.broadcast %219 : vector<4x1xf32> to vector<4x256xf32>
    %231 = arith.addf %196, %230 : vector<4x256xf32>
    %232 = arith.addf %229, %231 : vector<4x256xf32>
    %c0_139 = arith.constant 0 : index
    %c0_140 = arith.constant 0 : index
    %c0_141 = arith.constant 0 : index
    %233 = vector.load %arg9[%c0_139, %c0_140, %c0_141] : memref<1x4x256xf32, #tpu.memory_space<vmem>>, vector<1x4x256xf32>
    %234 = vector.shape_cast %233 : vector<1x4x256xf32> to vector<4x256xf32>
    %235 = vector.shape_cast %232 : vector<4x256xf32> to vector<1x4x256xf32>
    tpu.vector_store %arg9[%c0_139, %c0_140, %c0_141], %235 {strides = array<i32>} : memref<1x4x256xf32, #tpu.memory_space<vmem>>, vector<1x4x256xf32>,
    return
  }
  func.func @transform_0(%arg0: i32) -> (i32, i32, i32) {
    %c0_i32 = arith.constant 0 : i32
    %c0_i32_0 = arith.constant 0 : i32
    %c0_i32_1 = arith.constant 0 : i32
    return %arg0, %c0_i32, %c0_i32_0 : i32, i32, i32
  }
  func.func @transform_1(%arg0: i32) -> (i32, i32, i32) {
    %c0_i32 = arith.constant 0 : i32
    %c0_i32_0 = arith.constant 0 : i32
    %c0_i32_1 = arith.constant 0 : i32
    return %arg0, %c0_i32, %c0_i32_0 : i32, i32, i32
  }
  func.func @transform_2(%arg0: i32) -> (i32, i32) {
    %c0_i32 = arith.constant 0 : i32
    %c0_i32_0 = arith.constant 0 : i32
    %c0_i32_1 = arith.constant 0 : i32
    return %c0_i32, %c0_i32_0 : i32, i32
  }
  func.func @transform_3(%arg0: i32) -> (i32, i32, i32) {
    %c0_i32 = arith.constant 0 : i32
    %c0_i32_0 = arith.constant 0 : i32
    %c0_i32_1 = arith.constant 0 : i32
    %c0_i32_2 = arith.constant 0 : i32
    return %c0_i32, %c0_i32_0, %c0_i32_1 : i32, i32, i32
  }
  func.func @transform_4(%arg0: i32) -> (i32, i32, i32) {
    %c0_i32 = arith.constant 0 : i32
    %c0_i32_0 = arith.constant 0 : i32
    %c0_i32_1 = arith.constant 0 : i32
    %c0_i32_2 = arith.constant 0 : i32
    return %c0_i32, %c0_i32_0, %c0_i32_1 : i32, i32, i32
  }
  func.func @transform_5(%arg0: i32) -> (i32, i32) {
    %c0_i32 = arith.constant 0 : i32
    %c0_i32_0 = arith.constant 0 : i32
    %c0_i32_1 = arith.constant 0 : i32
    return %c0_i32, %c0_i32_0 : i32, i32
  }
  func.func @transform_6(%arg0: i32) -> (i32, i32, i32) {
    %c0_i32 = arith.constant 0 : i32
    %c0_i32_0 = arith.constant 0 : i32
    %c0_i32_1 = arith.constant 0 : i32
    %c0_i32_2 = arith.constant 0 : i32
    return %c0_i32, %c0_i32_0, %c0_i32_1 : i32, i32, i32
  }
  func.func @transform_7(%arg0: i32) -> (i32, i32) {
    %c0_i32 = arith.constant 0 : i32
    %c0_i32_0 = arith.constant 0 : i32
    %c0_i32_1 = arith.constant 0 : i32
    return %c0_i32, %c0_i32_0 : i32, i32
  }
  func.func @transform_8(%arg0: i32) -> (i32, i32, i32) {
    %c0_i32 = arith.constant 0 : i32
    %c0_i32_0 = arith.constant 0 : i32
    %c0_i32_1 = arith.constant 0 : i32
    return %arg0, %c0_i32, %c0_i32_0 : i32, i32, i32
  }
}

</mosaic_0001>

<llo_original>
// kernel: tpu_custom_call.1
$region0: #{tpu_custom_call.1}
  #allocation0 [shape = 'u32[]', space=smem, size = 0x4, offset = 0x4, fixed_abs, tag = 'smem constant byte address 0x4 - core index']
  #allocation1 [shape = 'u32[144,128]{1,0:T(1,128)}', space=vmem, size = 0x12000, scoped, tag = 'internal scratch']
  %s0 = inlined_call_operand.vmem [shape: f32[2,4,256], index: 0, kind: input, shape index: {}]
  %s1 = inlined_call_operand.vmem [shape: f32[2,4,256], index: 1, kind: input, shape index: {}]
  %s2 = inlined_call_operand.vmem [shape: f32[8,256], index: 2, kind: input, shape index: {}]
  %s3 = inlined_call_operand.vmem [shape: f32[9,4,4], index: 3, kind: input, shape index: {}]
  %s4 = inlined_call_operand.vmem [shape: f32[9,4,4], index: 4, kind: input, shape index: {}]
  %s5 = inlined_call_operand.vmem [shape: f32[4,1], index: 5, kind: input, shape index: {}]
  %s6 = inlined_call_operand.vmem [shape: f32[9,8,4], index: 6, kind: input, shape index: {}]
  %s7 = inlined_call_operand.vmem [shape: f32[8,1], index: 7, kind: input, shape index: {}]
  %s8 = inlined_call_operand.hbm [shape: f32[2,4,256], index: 8, kind: output, shape index: {}]
  %s9 = sld [smem:[#allocation0]]
  $region65: #{tpu_custom_call.1} parent=0
    _
  %s11 = ssub.s32 1, %s9
  %s12 = scalar_select 0, %s11, %s9
  $region1: #{tpu_custom_call.1} parent=0
    #allocation2 [shape = 'u8[8192]{0}', space=vmem, size = 0x2000, scoped, tag = 'output window, operand 0']
    #allocation3 [shape = 's32[2]{0}', space=sflag, size = 0x8, scoped, tag = 'scoped memory for tpu_custom_call.1']
    %13 = vsyncpa [#allocation3], 0
    %s14 = scalar_lea.sflag [#allocation3], 1
    %15 = vsyncpa %s14, 0
    loop: start=0, step=1, limit=4
    $region2: #{tpu_custom_call.1} parent=1 // loop_pre_header
      _
    $region3: #{tpu_custom_call.1} parent=1 // loop_header
      %s17 = sphi 0, %s21
      %p18 = scmp.ge.s32.totalorder %s17, 4
      %s27 = sphi 0, %s29
      %s30 = sphi 0, %s27
      %s31 = sphi 0, %s30
      %s47 = sphi 0, %s31
      %s53 = sphi 0, %s55
      %s56 = sphi 0, %s53
      %s57 = sphi 0, %s56
      %s73 = sphi 0, %s57
      %s77 = sphi 0, %s77
      %s79 = sphi 0, %s77
      %s80 = sphi 0, %s79
      %s94 = sphi 0, %s80
      %s98 = sphi 0, %s98
      %s100 = sphi 0, %s98
      %s101 = sphi 0, %s100
      %s115 = sphi 0, %s101
      %s119 = sphi 0, %s119
      %s121 = sphi 0, %s119
      %s122 = sphi 0, %s121
      %s136 = sphi 0, %s122
      %s140 = sphi 0, %s140
      %s142 = sphi 0, %s140
      %s143 = sphi 0, %s142
      %s157 = sphi 0, %s143
      %s161 = sphi 0, %s161
      %s163 = sphi 0, %s161
      %s164 = sphi 0, %s163
      %s178 = sphi 0, %s164
      %s182 = sphi 0, %s182
      %s184 = sphi 0, %s182
      %s185 = sphi 0, %s184
      %s199 = sphi 0, %s185
      %s205 = sphi 0, %s207
      %s208 = sphi 0, %s205
      %s209 = sphi 0, %s208
      %s225 = sphi 0, %s209
    $region4: #{tpu_custom_call.1} parent=1 // loop_header_branch
      %20 = sbr.rel (%p18) target = $region8
    $region5: #{tpu_custom_call.1} parent=1 // loop_body
      %s22 = ssub.s32 %s17, 1
      %s23 = ssub.s32 %s17, 2
      %s24 = sadd.s32 %s17, 1
      %s25 = ssub.s32 %s17, %s24
      %p26 = scmp.eq.s32.totalorder %s25, 0
      %s28 = sadd.s32 %s27, 1
      %s29 = scalar_select %p26, %s27, %s28
      %p32 = pneg %p26
      %p33 = scmp.eq.s32.totalorder %s17, 1
      %p34 = por %p32, %p33
      %p35 = scmp.ne.s32.totalorder %s27, %s30
      %p36 = scmp.eq.s32.totalorder %s17, 0
      %p37 = por %p35, %p36
      %p38 = scmp.ne.s32.totalorder %s27, %s30
      %p39 = scmp.eq.s32.totalorder %s22, 1
      %p40 = por %p38, %p39
      %p41 = scmp.ne.s32.totalorder %s30, %s31
      %p42 = scmp.eq.s32.totalorder %s22, 0
      %p43 = por %p41, %p42
      %p44 = scmp.ne.s32.totalorder %s30, %s31
      %p45 = scmp.eq.s32.totalorder %s23, 1
      %p46 = por %p44, %p45
      %p48 = scmp.ne.s32.totalorder %s31, %s47
      %p49 = scmp.eq.s32.totalorder %s23, 0
      %p50 = por %p48, %p49
      %s51 = ssub.s32 %s17, %s24
      %p52 = scmp.eq.s32.totalorder %s51, 0
      %s54 = sadd.s32 %s53, 1
      %s55 = scalar_select %p52, %s53, %s54
      %p58 = pneg %p52
      %p59 = scmp.eq.s32.totalorder %s17, 1
      %p60 = por %p58, %p59
      %p61 = scmp.ne.s32.totalorder %s53, %s56
      %p62 = scmp.eq.s32.totalorder %s17, 0
      %p63 = por %p61, %p62
      %p64 = scmp.ne.s32.totalorder %s53, %s56
      %p65 = scmp.eq.s32.totalorder %s22, 1
      %p66 = por %p64, %p65
      %p67 = scmp.ne.s32.totalorder %s56, %s57
      %p68 = scmp.eq.s32.totalorder %s22, 0
      %p69 = por %p67, %p68
      %p70 = scmp.ne.s32.totalorder %s56, %s57
      %p71 = scmp.eq.s32.totalorder %s23, 1
      %p72 = por %p70, %p71
      %p74 = scmp.ne.s32.totalorder %s57, %s73
      %p75 = scmp.eq.s32.totalorder %s23, 0
      %p76 = por %p74, %p75
      %s78 = sadd.s32 %s77, 1
      %p81 = scmp.eq.s32.totalorder %s17, 1
      %p82 = scmp.ne.s32.totalorder %s77, %s79
      %p83 = scmp.eq.s32.totalorder %s17, 0
      %p84 = por %p82, %p83
      %p85 = scmp.ne.s32.totalorder %s77, %s79
      %p86 = scmp.eq.s32.totalorder %s22, 1
      %p87 = por %p85, %p86
      %p88 = scmp.ne.s32.totalorder %s79, %s80
      %p89 = scmp.eq.s32.totalorder %s22, 0
      %p90 = por %p88, %p89
      %p91 = scmp.ne.s32.totalorder %s79, %s80
      %p92 = scmp.eq.s32.totalorder %s23, 1
      %p93 = por %p91, %p92
      %p95 = scmp.ne.s32.totalorder %s80, %s94
      %p96 = scmp.eq.s32.totalorder %s23, 0
      %p97 = por %p95, %p96
      %s99 = sadd.s32 %s98, 1
      %p102 = scmp.eq.s32.totalorder %s17, 1
      %p103 = scmp.ne.s32.totalorder %s98, %s100
      %p104 = scmp.eq.s32.totalorder %s17, 0
      %p105 = por %p103, %p104
      %p106 = scmp.ne.s32.totalorder %s98, %s100
      %p107 = scmp.eq.s32.totalorder %s22, 1
      %p108 = por %p106, %p107
      %p109 = scmp.ne.s32.totalorder %s100, %s101
      %p110 = scmp.eq.s32.totalorder %s22, 0
      %p111 = por %p109, %p110
      %p112 = scmp.ne.s32.totalorder %s100, %s101
      %p113 = scmp.eq.s32.totalorder %s23, 1
      %p114 = por %p112, %p113
      %p116 = scmp.ne.s32.totalorder %s101, %s115
      %p117 = scmp.eq.s32.totalorder %s23, 0
      %p118 = por %p116, %p117
      %s120 = sadd.s32 %s119, 1
      %p123 = scmp.eq.s32.totalorder %s17, 1
      %p124 = scmp.ne.s32.totalorder %s119, %s121
      %p125 = scmp.eq.s32.totalorder %s17, 0
      %p126 = por %p124, %p125
      %p127 = scmp.ne.s32.totalorder %s119, %s121
      %p128 = scmp.eq.s32.totalorder %s22, 1
      %p129 = por %p127, %p128
      %p130 = scmp.ne.s32.totalorder %s121, %s122
      %p131 = scmp.eq.s32.totalorder %s22, 0
      %p132 = por %p130, %p131
      %p133 = scmp.ne.s32.totalorder %s121, %s122
      %p134 = scmp.eq.s32.totalorder %s23, 1
      %p135 = por %p133, %p134
      %p137 = scmp.ne.s32.totalorder %s122, %s136
      %p138 = scmp.eq.s32.totalorder %s23, 0
      %p139 = por %p137, %p138
      %s141 = sadd.s32 %s140, 1
      %p144 = scmp.eq.s32.totalorder %s17, 1
      %p145 = scmp.ne.s32.totalorder %s140, %s142
      %p146 = scmp.eq.s32.totalorder %s17, 0
      %p147 = por %p145, %p146
      %p148 = scmp.ne.s32.totalorder %s140, %s142
      %p149 = scmp.eq.s32.totalorder %s22, 1
      %p150 = por %p148, %p149
      %p151 = scmp.ne.s32.totalorder %s142, %s143
      %p152 = scmp.eq.s32.totalorder %s22, 0
      %p153 = por %p151, %p152
      %p154 = scmp.ne.s32.totalorder %s142, %s143
      %p155 = scmp.eq.s32.totalorder %s23, 1
      %p156 = por %p154, %p155
      %p158 = scmp.ne.s32.totalorder %s143, %s157
      %p159 = scmp.eq.s32.totalorder %s23, 0
      %p160 = por %p158, %p159
      %s162 = sadd.s32 %s161, 1
      %p165 = scmp.eq.s32.totalorder %s17, 1
      %p166 = scmp.ne.s32.totalorder %s161, %s163
      %p167 = scmp.eq.s32.totalorder %s17, 0
      %p168 = por %p166, %p167
      %p169 = scmp.ne.s32.totalorder %s161, %s163
      %p170 = scmp.eq.s32.totalorder %s22, 1
      %p171 = por %p169, %p170
      %p172 = scmp.ne.s32.totalorder %s163, %s164
      %p173 = scmp.eq.s32.totalorder %s22, 0
      %p174 = por %p172, %p173
      %p175 = scmp.ne.s32.totalorder %s163, %s164
      %p176 = scmp.eq.s32.totalorder %s23, 1
      %p177 = por %p175, %p176
      %p179 = scmp.ne.s32.totalorder %s164, %s178
      %p180 = scmp.eq.s32.totalorder %s23, 0
      %p181 = por %p179, %p180
      %s183 = sadd.s32 %s182, 1
      %p186 = scmp.eq.s32.totalorder %s17, 1
      %p187 = scmp.ne.s32.totalorder %s182, %s184
      %p188 = scmp.eq.s32.totalorder %s17, 0
      %p189 = por %p187, %p188
      %p190 = scmp.ne.s32.totalorder %s182, %s184
      %p191 = scmp.eq.s32.totalorder %s22, 1
      %p192 = por %p190, %p191
      %p193 = scmp.ne.s32.totalorder %s184, %s185
      %p194 = scmp.eq.s32.totalorder %s22, 0
      %p195 = por %p193, %p194
      %p196 = scmp.ne.s32.totalorder %s184, %s185
      %p197 = scmp.eq.s32.totalorder %s23, 1
      %p198 = por %p196, %p197
      %p200 = scmp.ne.s32.totalorder %s185, %s199
      %p201 = scmp.eq.s32.totalorder %s23, 0
      %p202 = por %p200, %p201
      %s203 = ssub.s32 %s17, %s24
      %p204 = scmp.eq.s32.totalorder %s203, 0
      %s206 = sadd.s32 %s205, 1
      %s207 = scalar_select %p204, %s205, %s206
      %p210 = pneg %p204
      %p211 = scmp.eq.s32.totalorder %s17, 1
      %p212 = por %p210, %p211
      %p213 = scmp.ne.s32.totalorder %s205, %s208
      %p214 = scmp.eq.s32.totalorder %s17, 0
      %p215 = por %p213, %p214
      %p216 = scmp.ne.s32.totalorder %s205, %s208
      %p217 = scmp.eq.s32.totalorder %s22, 1
      %p218 = por %p216, %p217
      %p219 = scmp.ne.s32.totalorder %s208, %s209
      %p220 = scmp.eq.s32.totalorder %s22, 0
      %p221 = por %p219, %p220
      %p222 = scmp.ne.s32.totalorder %s208, %s209
      %p223 = scmp.eq.s32.totalorder %s23, 1
      %p224 = por %p222, %p223
      %p226 = scmp.ne.s32.totalorder %s209, %s225
      %p227 = scmp.eq.s32.totalorder %s23, 0
      %p228 = por %p226, %p227
      %p229 = scmp.le.s32.totalorder 1, %s17
      %p230 = scmp.lt.s32.totalorder %s17, 3
      %p231 = pnand %p229, %p230
      %p232 = pneg %p231
      // Predicated region
      $region9: #{tpu_custom_call.1} parent=5 // pred_check
        _
      $region10: #{tpu_custom_call.1} parent=5 // pred_check_branch
        %234 = sbr.rel (%p231) target = $region12
      $region11: #{tpu_custom_call.1} parent=5 // pred_region
        %s235 = ssub.s32 %s17, 1
        // Predicated region
        $region13: #{tpu_custom_call.1} parent=11 // pred_check
          %p236 = pneg %p90
        $region14: #{tpu_custom_call.1} parent=11 // pred_check_branch
          %238 = sbr.rel (%p236) target = $region16
        $region15: #{tpu_custom_call.1} parent=11 // pred_region
          _
        $region16: #{tpu_custom_call.1} parent=11 // pred_fallthru
          _
        // Predicated region
        $region17: #{tpu_custom_call.1} parent=11 // pred_check
          %p239 = pneg %p111
        $region18: #{tpu_custom_call.1} parent=11 // pred_check_branch
          %241 = sbr.rel (%p239) target = $region20
        $region19: #{tpu_custom_call.1} parent=11 // pred_region
          _
        $region20: #{tpu_custom_call.1} parent=11 // pred_fallthru
          _
        // Predicated region
        $region21: #{tpu_custom_call.1} parent=11 // pred_check
          %p242 = pneg %p132
        $region22: #{tpu_custom_call.1} parent=11 // pred_check_branch
          %244 = sbr.rel (%p242) target = $region24
        $region23: #{tpu_custom_call.1} parent=11 // pred_region
          _
        $region24: #{tpu_custom_call.1} parent=11 // pred_fallthru
          _
        // Predicated region
        $region25: #{tpu_custom_call.1} parent=11 // pred_check
          %p245 = pneg %p153
        $region26: #{tpu_custom_call.1} parent=11 // pred_check_branch
          %247 = sbr.rel (%p245) target = $region28
        $region27: #{tpu_custom_call.1} parent=11 // pred_region
          _
        $region28: #{tpu_custom_call.1} parent=11 // pred_fallthru
          _
        // Predicated region
        $region29: #{tpu_custom_call.1} parent=11 // pred_check
          %p248 = pneg %p174
        $region30: #{tpu_custom_call.1} parent=11 // pred_check_branch
          %250 = sbr.rel (%p248) target = $region32
        $region31: #{tpu_custom_call.1} parent=11 // pred_region
          _
        $region32: #{tpu_custom_call.1} parent=11 // pred_fallthru
          _
        // Predicated region
        $region33: #{tpu_custom_call.1} parent=11 // pred_check
          %p251 = pneg %p195
        $region34: #{tpu_custom_call.1} parent=11 // pred_check_branch
          %253 = sbr.rel (%p251) target = $region36
        $region35: #{tpu_custom_call.1} parent=11 // pred_region
          _
        $region36: #{tpu_custom_call.1} parent=11 // pred_fallthru
          _
      $region12: #{tpu_custom_call.1} parent=5 // pred_fallthru
        _
      %p254 = scmp.lt.s32.totalorder %s17, 2
      // Predicated region
      $region37: #{tpu_custom_call.1} parent=5 // pred_check
        %p255 = pneg %p254
      $region38: #{tpu_custom_call.1} parent=5 // pred_check_branch
        %257 = sbr.rel (%p255) target = $region40
      $region39: #{tpu_custom_call.1} parent=5 // pred_region
        // Predicated region
        $region41: #{tpu_custom_call.1} parent=39 // pred_check
          %p258 = pneg %p37
        $region42: #{tpu_custom_call.1} parent=39 // pred_check_branch
          %260 = sbr.rel (%p258) target = $region44
        $region43: #{tpu_custom_call.1} parent=39 // pred_region
          %p261 = scmp.lt.s32.totalorder %s17, 1
          %s262 = scalar_select %p261, %s17, 1
          %s263 = smul.addr %s262, 2
          %s264 = smul.addr %s263, 4
          %s265 = scalar_lea.vmem %s0, %s264
        $region44: #{tpu_custom_call.1} parent=39 // pred_fallthru
          _
        // Predicated region
        $region45: #{tpu_custom_call.1} parent=39 // pred_check
          %p266 = pneg %p63
        $region46: #{tpu_custom_call.1} parent=39 // pred_check_branch
          %268 = sbr.rel (%p266) target = $region48
        $region47: #{tpu_custom_call.1} parent=39 // pred_region
          %p269 = scmp.lt.s32.totalorder %s17, 1
          %s270 = scalar_select %p269, %s17, 1
          %s271 = smul.addr %s270, 2
          %s272 = smul.addr %s271, 4
          %s273 = scalar_lea.vmem %s1, %s272
        $region48: #{tpu_custom_call.1} parent=39 // pred_fallthru
          _
      $region40: #{tpu_custom_call.1} parent=5 // pred_fallthru
        _
      %p274 = scmp.le.s32.totalorder 1, %s17
      %p275 = scmp.lt.s32.totalorder %s17, 3
      %p276 = pnand %p274, %p275
      %p277 = pneg %p276
      // Predicated region
      $region49: #{tpu_custom_call.1} parent=5 // pred_check
        _
      $region50: #{tpu_custom_call.1} parent=5 // pred_check_branch
        %279 = sbr.rel (%p276) target = $region52
      $region51: #{tpu_custom_call.1} parent=5 // pred_region
        %s280 = ssub.s32 %s17, 1
        %p281 = scmp.lt.s32.totalorder %s22, 1
        %s282 = scalar_select %p281, %s22, 1
        %s283 = smul.addr %s282, 2
        %s284 = smul.addr %s283, 4
        %s285 = scalar_lea.vmem %s0, %s284
        %p286 = pneg %p43
        %p287 = pneg %p40
        %p288 = scmp.lt.s32.totalorder %s22, 1
        %s289 = scalar_select %p288, %s22, 1
        %s290 = smul.addr %s289, 2
        %s291 = smul.addr %s290, 4
        %s292 = scalar_lea.vmem %s1, %s291
        %p293 = pneg %p69
        %p294 = pneg %p66
        %p295 = pneg %p90
        %p296 = pneg %p87
        %p297 = pneg %p111
        %p298 = pneg %p108
        %p299 = pneg %p132
        %p300 = pneg %p129
        %p301 = pneg %p153
        %p302 = pneg %p150
        %p303 = pneg %p174
        %p304 = pneg %p171
        %p305 = pneg %p195
        %p306 = pneg %p192
        %p307 = pneg %p221
        %p308 = pneg %p218
        %s309 = sand.u32 %s208, 1
        %s310 = scalar_lea.sflag [#allocation3], %s309
        %s311 = sand.u32 %s208, 1
        %s312 = smul.addr %s311, 8
        %s313 = scalar_lea.vmem [#allocation2], %s312
        %p314 = scmp.lt.s32.totalorder %s22, 1
        %s315 = scalar_select %p314, %s22, 1
        %s316 = smul.addr %s315, 2
        %s317 = smul.addr %s316, 4
        %s318 = scalar_lea.vmem %s0, %s317
        %p319 = scmp.lt.s32.totalorder %s22, 1
        %s320 = scalar_select %p319, %s22, 1
        %s321 = smul.addr %s320, 2
        %s322 = smul.addr %s321, 4
        %s323 = scalar_lea.vmem %s1, %s322
        %v324 = vld [vmem:[%s2] sm:$0xff]
        %v325 = vld [vmem:[%s2 + $0x8] sm:$0xff]
        %v326 = vld [vmem:[%s5] sm:$0xf]
        %v327 = vld [vmem:[%s7] sm:$0xff]
        %v328 = vld [vmem:[%s318] sm:$0xff]
        %v329 = vld [vmem:[%s323] sm:$0xff]
        %v330 = vld [vmem:[%s3] sm:$0xf]
        %v332 = vcombine.high %v328, %v328
        %334 = vrot.lane.b32.xlu0 %v328, 17
        %v335 = vpop.permute.xlu0 %334
        %336 = vrot.lane.b32.xlu0 %v332, 17
        %v337 = vpop.permute.xlu0 %336
        %v338 = vlaneseq
        %v339 = vand.u32 %v338, 127
        %vm340 = vcmp.lt.s32.totalorder %v339, 17
        %v341 = vsel %vm340, %v335, %v337
        %v342 = vsel %vm340, %v337, %v335
        %v343 = vld [vmem:[%s4] sm:$0xf]
        %v345 = vcombine.high %v329, %v329
        %347 = vrot.lane.b32.xlu0 %v329, 17
        %v348 = vpop.permute.xlu0 %347
        %349 = vrot.lane.b32.xlu0 %v345, 17
        %v350 = vpop.permute.xlu0 %349
        %v351 = vsel %vm340, %v348, %v350
        %v352 = vsel %vm340, %v350, %v348
        %vm353 = vcmask 31744
        %v355 = vsel %vm353, %v343, 0
        %vm357 = vcmask 1043456
        %v359 = vsel %vm357, %v352, 0
        %v362 = vsel %vm357, %v351, 0
        %364 = vmatprep.subr.mxu0 %v362
        %365 = vmatpush1.msra.mxu0 %v359
        %366 = vmatprep.subr.mxu0 0.0
        %367 = vmatpush1.msra.mxu0 0.0
        %368 = vmatprep.subr.mxu0 0.0
        %369 = vmatpush1.msra.mxu0 0.0
        %370 = vmatprep.subr.mxu0 0.0
        %371 = vmatpush1.msra.mxu0 0.0
        %372 = vmatprep.subr.mxu0 0.0
        %373 = vmatpush1.msra.mxu0 0.0
        %374 = vmatprep.subr.mxu0 0.0
        %375 = vmatpush1.msra.mxu0 0.0
        %376 = vmatprep.subr.mxu0 0.0
        %377 = vmatpush1.msra.mxu0 0.0
        %378 = vmatprep.subr.mxu0 0.0
        %379 = vmatpush1.msra.mxu0 0.0
        %380 = vmatprep.subr.mxu0 0.0
        %381 = vmatpush1.msra.mxu0 0.0
        %382 = vmatprep.subr.mxu0 0.0
        %383 = vmatpush1.msra.mxu0 0.0
        %384 = vmatprep.subr.mxu0 0.0
        %385 = vmatpush1.msra.mxu0 0.0
        %386 = vmatprep.subr.mxu0 0.0
        %387 = vmatpush1.msra.mxu0 0.0
        %388 = vmatprep.subr.mxu0 0.0
        %389 = vmatpush1.msra.mxu0 0.0
        %390 = vmatprep.subr.mxu0 0.0
        %391 = vmatpush1.msra.mxu0 0.0
        %392 = vmatprep.subr.mxu0 0.0
        %393 = vmatpush1.msra.mxu0 0.0
        %394 = vmatprep.subr.mxu0 0.0
        %395 = vmatpush1.msra.mxu0 0.0
        %396 = vmatprep.subr.mxu0 0.0
        %397 = vmatpush1.msra.mxu0 0.0
        %398 = vmatprep.subr.mxu0 0.0
        %399 = vmatpush1.msra.mxu0 0.0
        %400 = vmatprep.subr.mxu0 0.0
        %401 = vmatpush1.msra.mxu0 0.0
        %402 = vmatprep.subr.mxu0 0.0
        %403 = vmatpush1.msra.mxu0 0.0
        %404 = vmatprep.subr.mxu0 0.0
        %405 = vmatpush1.msra.mxu0 0.0
        %406 = vmatprep.subr.mxu0 0.0
        %407 = vmatpush1.msra.mxu0 0.0
        %408 = vmatprep.subr.mxu0 0.0
        %409 = vmatpush1.msra.mxu0 0.0
        %410 = vmatprep.subr.mxu0 0.0
        %411 = vmatpush1.msra.mxu0 0.0
        %412 = vmatprep.subr.mxu0 0.0
        %413 = vmatpush1.msra.mxu0 0.0
        %414 = vmatprep.subr.mxu0 0.0
        %415 = vmatpush1.msra.mxu0 0.0
        %416 = vmatprep.subr.mxu0 0.0
        %417 = vmatpush1.msra.mxu0 0.0
        %418 = vmatprep.subr.mxu0 0.0
        %419 = vmatpush1.msra.mxu0 0.0
        %420 = vmatprep.subr.mxu0 0.0
        %421 = vmatpush1.msra.mxu0 0.0
        %422 = vmatprep.subr.mxu0 0.0
        %423 = vmatpush1.msra.mxu0 0.0
        %424 = vmatprep.subr.mxu0 0.0
        %425 = vmatpush1.msra.mxu0 0.0
        %426 = vmatprep.subr.mxu0 0.0
        %427 = vmatpush1.msra.mxu0 0.0
        %428 = vmatprep.mubr.f32.mxu0 0.0
        %429 = vmatmul.mubr.f32.gmra.mrb[0].mxu0 %v355
        %v430 = vpop.f32.mrb[0].mxu0
        %v431 = vadd.f32 0.0, %v430
        %v432 = vpop.f32.mrb[0].mxu0
        %v433 = vadd.f32 0.0, %v432
        %434 = vdwg.mxu0
        %v436 = vsel %vm353, %v330, 0
        %v439 = vsel %vm357, %v342, 0
        %v442 = vsel %vm357, %v341, 0
        %444 = vmatprep.subr.mxu0 %v442
        %445 = vmatpush1.msra.mxu0 %v439
        %446 = vmatprep.subr.mxu0 0.0
        %447 = vmatpush1.msra.mxu0 0.0
        %448 = vmatprep.subr.mxu0 0.0
        %449 = vmatpush1.msra.mxu0 0.0
        %450 = vmatprep.subr.mxu0 0.0
        %451 = vmatpush1.msra.mxu0 0.0
        %452 = vmatprep.subr.mxu0 0.0
        %453 = vmatpush1.msra.mxu0 0.0
        %454 = vmatprep.subr.mxu0 0.0
        %455 = vmatpush1.msra.mxu0 0.0
        %456 = vmatprep.subr.mxu0 0.0
        %457 = vmatpush1.msra.mxu0 0.0
        %458 = vmatprep.subr.mxu0 0.0
        %459 = vmatpush1.msra.mxu0 0.0
        %460 = vmatprep.subr.mxu0 0.0
        %461 = vmatpush1.msra.mxu0 0.0
        %462 = vmatprep.subr.mxu0 0.0
        %463 = vmatpush1.msra.mxu0 0.0
        %464 = vmatprep.subr.mxu0 0.0
        %465 = vmatpush1.msra.mxu0 0.0
        %466 = vmatprep.subr.mxu0 0.0
        %467 = vmatpush1.msra.mxu0 0.0
        %468 = vmatprep.subr.mxu0 0.0
        %469 = vmatpush1.msra.mxu0 0.0
        %470 = vmatprep.subr.mxu0 0.0
        %471 = vmatpush1.msra.mxu0 0.0
        %472 = vmatprep.subr.mxu0 0.0
        %473 = vmatpush1.msra.mxu0 0.0
        %474 = vmatprep.subr.mxu0 0.0
        %475 = vmatpush1.msra.mxu0 0.0
        %476 = vmatprep.subr.mxu0 0.0
        %477 = vmatpush1.msra.mxu0 0.0
        %478 = vmatprep.subr.mxu0 0.0
        %479 = vmatpush1.msra.mxu0 0.0
        %480 = vmatprep.subr.mxu0 0.0
        %481 = vmatpush1.msra.mxu0 0.0
        %482 = vmatprep.subr.mxu0 0.0
        %483 = vmatpush1.msra.mxu0 0.0
        %484 = vmatprep.subr.mxu0 0.0
        %485 = vmatpush1.msra.mxu0 0.0
        %486 = vmatprep.subr.mxu0 0.0
        %487 = vmatpush1.msra.mxu0 0.0
        %488 = vmatprep.subr.mxu0 0.0
        %489 = vmatpush1.msra.mxu0 0.0
        %490 = vmatprep.subr.mxu0 0.0
        %491 = vmatpush1.msra.mxu0 0.0
        %492 = vmatprep.subr.mxu0 0.0
        %493 = vmatpush1.msra.mxu0 0.0
        %494 = vmatprep.subr.mxu0 0.0
        %495 = vmatpush1.msra.mxu0 0.0
        %496 = vmatprep.subr.mxu0 0.0
        %497 = vmatpush1.msra.mxu0 0.0
        %498 = vmatprep.subr.mxu0 0.0
        %499 = vmatpush1.msra.mxu0 0.0
        %500 = vmatprep.subr.mxu0 0.0
        %501 = vmatpush1.msra.mxu0 0.0
        %502 = vmatprep.subr.mxu0 0.0
        %503 = vmatpush1.msra.mxu0 0.0
        %504 = vmatprep.subr.mxu0 0.0
        %505 = vmatpush1.msra.mxu0 0.0
        %506 = vmatprep.subr.mxu0 0.0
        %507 = vmatpush1.msra.mxu0 0.0
        %508 = vmatprep.mubr.f32.mxu0 0.0
        %509 = vmatmul.mubr.f32.gmra.mrb[0].mxu0 %v436
        %v510 = vpop.f32.mrb[0].mxu0
        %v511 = vadd.f32 %v431, %v510
        %v512 = vpop.f32.mrb[0].mxu0
        %v513 = vadd.f32 %v433, %v512
        %514 = vdwg.mxu0
        %v515 = vlaneseq
        %v516 = vshrl.u32 %v515, 7
        %v517 = vsub.s32 0, %v516
        %v518 = vrot.slane %v324, %v517
        %v519 = vlaneseq
        %v520 = vshrl.u32 %v519, 7
        %v521 = vsub.s32 0, %v520
        %v522 = vrot.slane %v325, %v521
        %v523 = vmul.f32 %v511, %v518
        %v524 = vmul.f32 %v513, %v522
        %v525 = vadd.f32 %v523, 0.0
        %v526 = vadd.f32 %v524, 0.0
        %s527 = scalar_lea.vmem %s3, 4
        %v528 = vld [vmem:[%s527] sm:$0xf]
        %529 = vrot.lane.b32.xlu0 %v328, 16
        %v530 = vpop.permute.xlu0 %529
        %531 = vrot.lane.b32.xlu0 %v332, 16
        %v532 = vpop.permute.xlu0 %531
        %vm533 = vcmp.lt.s32.totalorder %v339, 16
        %v534 = vsel %vm533, %v530, %v532
        %v535 = vsel %vm533, %v532, %v530
        %s536 = scalar_lea.vmem %s4, 4
        %v537 = vld [vmem:[%s536] sm:$0xf]
        %538 = vrot.lane.b32.xlu0 %v329, 16
        %v539 = vpop.permute.xlu0 %538
        %540 = vrot.lane.b32.xlu0 %v345, 16
        %v541 = vpop.permute.xlu0 %540
        %v542 = vsel %vm533, %v539, %v541
        %v543 = vsel %vm533, %v541, %v539
        %v545 = vsel %vm353, %v537, 0
        %v548 = vsel %vm357, %v543, 0
        %v551 = vsel %vm357, %v542, 0
        %553 = vmatprep.subr.mxu0 %v551
        %554 = vmatpush1.msra.mxu0 %v548
        %555 = vmatprep.subr.mxu0 0.0
        %556 = vmatpush1.msra.mxu0 0.0
        %557 = vmatprep.subr.mxu0 0.0
        %558 = vmatpush1.msra.mxu0 0.0
        %559 = vmatprep.subr.mxu0 0.0
        %560 = vmatpush1.msra.mxu0 0.0
        %561 = vmatprep.subr.mxu0 0.0
        %562 = vmatpush1.msra.mxu0 0.0
        %563 = vmatprep.subr.mxu0 0.0
        %564 = vmatpush1.msra.mxu0 0.0
        %565 = vmatprep.subr.mxu0 0.0
        %566 = vmatpush1.msra.mxu0 0.0
        %567 = vmatprep.subr.mxu0 0.0
        %568 = vmatpush1.msra.mxu0 0.0
        %569 = vmatprep.subr.mxu0 0.0
        %570 = vmatpush1.msra.mxu0 0.0
        %571 = vmatprep.subr.mxu0 0.0
        %572 = vmatpush1.msra.mxu0 0.0
        %573 = vmatprep.subr.mxu0 0.0
        %574 = vmatpush1.msra.mxu0 0.0
        %575 = vmatprep.subr.mxu0 0.0
        %576 = vmatpush1.msra.mxu0 0.0
        %577 = vmatprep.subr.mxu0 0.0
        %578 = vmatpush1.msra.mxu0 0.0
        %579 = vmatprep.subr.mxu0 0.0
        %580 = vmatpush1.msra.mxu0 0.0
        %581 = vmatprep.subr.mxu0 0.0
        %582 = vmatpush1.msra.mxu0 0.0
        %583 = vmatprep.subr.mxu0 0.0
        %584 = vmatpush1.msra.mxu0 0.0
        %585 = vmatprep.subr.mxu0 0.0
        %586 = vmatpush1.msra.mxu0 0.0
        %587 = vmatprep.subr.mxu0 0.0
        %588 = vmatpush1.msra.mxu0 0.0
        %589 = vmatprep.subr.mxu0 0.0
        %590 = vmatpush1.msra.mxu0 0.0
        %591 = vmatprep.subr.mxu0 0.0
        %592 = vmatpush1.msra.mxu0 0.0
        %593 = vmatprep.subr.mxu0 0.0
        %594 = vmatpush1.msra.mxu0 0.0
        %595 = vmatprep.subr.mxu0 0.0
        %596 = vmatpush1.msra.mxu0 0.0
        %597 = vmatprep.subr.mxu0 0.0
        %598 = vmatpush1.msra.mxu0 0.0
        %599 = vmatprep.subr.mxu0 0.0
        %600 = vmatpush1.msra.mxu0 0.0
        %601 = vmatprep.subr.mxu0 0.0
        %602 = vmatpush1.msra.mxu0 0.0
        %603 = vmatprep.subr.mxu0 0.0
        %604 = vmatpush1.msra.mxu0 0.0
        %605 = vmatprep.subr.mxu0 0.0
        %606 = vmatpush1.msra.mxu0 0.0
        %607 = vmatprep.subr.mxu0 0.0
        %608 = vmatpush1.msra.mxu0 0.0
        %609 = vmatprep.subr.mxu0 0.0
        %610 = vmatpush1.msra.mxu0 0.0
        %611 = vmatprep.subr.mxu0 0.0
        %612 = vmatpush1.msra.mxu0 0.0
        %613 = vmatprep.subr.mxu0 0.0
        %614 = vmatpush1.msra.mxu0 0.0
        %615 = vmatprep.subr.mxu0 0.0
        %616 = vmatpush1.msra.mxu0 0.0
        %617 = vmatprep.mubr.f32.mxu0 0.0
        %618 = vmatmul.mubr.f32.gmra.mrb[0].mxu0 %v545
        %v619 = vpop.f32.mrb[0].mxu0
        %v620 = vadd.f32 0.0, %v619
        %v621 = vpop.f32.mrb[0].mxu0
        %v622 = vadd.f32 0.0, %v621
        %623 = vdwg.mxu0
        %v625 = vsel %vm353, %v528, 0
        %v628 = vsel %vm357, %v535, 0
        %v631 = vsel %vm357, %v534, 0
        %633 = vmatprep.subr.mxu0 %v631
        %634 = vmatpush1.msra.mxu0 %v628
        %635 = vmatprep.subr.mxu0 0.0
        %636 = vmatpush1.msra.mxu0 0.0
        %637 = vmatprep.subr.mxu0 0.0
        %638 = vmatpush1.msra.mxu0 0.0
        %639 = vmatprep.subr.mxu0 0.0
        %640 = vmatpush1.msra.mxu0 0.0
        %641 = vmatprep.subr.mxu0 0.0
        %642 = vmatpush1.msra.mxu0 0.0
        %643 = vmatprep.subr.mxu0 0.0
        %644 = vmatpush1.msra.mxu0 0.0
        %645 = vmatprep.subr.mxu0 0.0
        %646 = vmatpush1.msra.mxu0 0.0
        %647 = vmatprep.subr.mxu0 0.0
        %648 = vmatpush1.msra.mxu0 0.0
        %649 = vmatprep.subr.mxu0 0.0
        %650 = vmatpush1.msra.mxu0 0.0
        %651 = vmatprep.subr.mxu0 0.0
        %652 = vmatpush1.msra.mxu0 0.0
        %653 = vmatprep.subr.mxu0 0.0
        %654 = vmatpush1.msra.mxu0 0.0
        %655 = vmatprep.subr.mxu0 0.0
        %656 = vmatpush1.msra.mxu0 0.0
        %657 = vmatprep.subr.mxu0 0.0
        %658 = vmatpush1.msra.mxu0 0.0
        %659 = vmatprep.subr.mxu0 0.0
        %660 = vmatpush1.msra.mxu0 0.0
        %661 = vmatprep.subr.mxu0 0.0
        %662 = vmatpush1.msra.mxu0 0.0
        %663 = vmatprep.subr.mxu0 0.0
        %664 = vmatpush1.msra.mxu0 0.0
        %665 = vmatprep.subr.mxu0 0.0
        %666 = vmatpush1.msra.mxu0 0.0
        %667 = vmatprep.subr.mxu0 0.0
        %668 = vmatpush1.msra.mxu0 0.0
        %669 = vmatprep.subr.mxu0 0.0
        %670 = vmatpush1.msra.mxu0 0.0
        %671 = vmatprep.subr.mxu0 0.0
        %672 = vmatpush1.msra.mxu0 0.0
        %673 = vmatprep.subr.mxu0 0.0
        %674 = vmatpush1.msra.mxu0 0.0
        %675 = vmatprep.subr.mxu0 0.0
        %676 = vmatpush1.msra.mxu0 0.0
        %677 = vmatprep.subr.mxu0 0.0
        %678 = vmatpush1.msra.mxu0 0.0
        %679 = vmatprep.subr.mxu0 0.0
        %680 = vmatpush1.msra.mxu0 0.0
        %681 = vmatprep.subr.mxu0 0.0
        %682 = vmatpush1.msra.mxu0 0.0
        %683 = vmatprep.subr.mxu0 0.0
        %684 = vmatpush1.msra.mxu0 0.0
        %685 = vmatprep.subr.mxu0 0.0
        %686 = vmatpush1.msra.mxu0 0.0
        %687 = vmatprep.subr.mxu0 0.0
        %688 = vmatpush1.msra.mxu0 0.0
        %689 = vmatprep.subr.mxu0 0.0
        %690 = vmatpush1.msra.mxu0 0.0
        %691 = vmatprep.subr.mxu0 0.0
        %692 = vmatpush1.msra.mxu0 0.0
        %693 = vmatprep.subr.mxu0 0.0
        %694 = vmatpush1.msra.mxu0 0.0
        %695 = vmatprep.subr.mxu0 0.0
        %696 = vmatpush1.msra.mxu0 0.0
        %697 = vmatprep.mubr.f32.mxu0 0.0
        %698 = vmatmul.mubr.f32.gmra.mrb[0].mxu0 %v625
        %v699 = vpop.f32.mrb[0].mxu0
        %v700 = vadd.f32 %v620, %v699
        %v701 = vpop.f32.mrb[0].mxu0
        %v702 = vadd.f32 %v622, %v701
        %703 = vdwg.mxu0
        %v704 = vlaneseq
        %v705 = vshrl.u32 %v704, 7
        %v706 = vsub.s32 1, %v705
        %v707 = vrot.slane %v324, %v706
        %v708 = vlaneseq
        %v709 = vshrl.u32 %v708, 7
        %v710 = vsub.s32 1, %v709
        %v711 = vrot.slane %v325, %v710
        %v712 = vmul.f32 %v700, %v707
        %v713 = vmul.f32 %v702, %v711
        %v714 = vadd.f32 %v525, %v712
        %v715 = vadd.f32 %v526, %v713
        %s716 = scalar_lea.vmem %s3, 8
        %v717 = vld [vmem:[%s716] sm:$0xf]
        %718 = vrot.lane.b32.xlu0 %v328, 15
        %v719 = vpop.permute.xlu0 %718
        %720 = vrot.lane.b32.xlu0 %v332, 15
        %v721 = vpop.permute.xlu0 %720
        %vm722 = vcmp.lt.s32.totalorder %v339, 15
        %v723 = vsel %vm722, %v719, %v721
        %v724 = vsel %vm722, %v721, %v719
        %s725 = scalar_lea.vmem %s4, 8
        %v726 = vld [vmem:[%s725] sm:$0xf]
        %727 = vrot.lane.b32.xlu0 %v329, 15
        %v728 = vpop.permute.xlu0 %727
        %729 = vrot.lane.b32.xlu0 %v345, 15
        %v730 = vpop.permute.xlu0 %729
        %v731 = vsel %vm722, %v728, %v730
        %v732 = vsel %vm722, %v730, %v728
        %v734 = vsel %vm353, %v726, 0
        %v737 = vsel %vm357, %v732, 0
        %v740 = vsel %vm357, %v731, 0
        %742 = vmatprep.subr.mxu0 %v740
        %743 = vmatpush1.msra.mxu0 %v737
        %744 = vmatprep.subr.mxu0 0.0
        %745 = vmatpush1.msra.mxu0 0.0
        %746 = vmatprep.subr.mxu0 0.0
        %747 = vmatpush1.msra.mxu0 0.0
        %748 = vmatprep.subr.mxu0 0.0
        %749 = vmatpush1.msra.mxu0 0.0
        %750 = vmatprep.subr.mxu0 0.0
        %751 = vmatpush1.msra.mxu0 0.0
        %752 = vmatprep.subr.mxu0 0.0
        %753 = vmatpush1.msra.mxu0 0.0
        %754 = vmatprep.subr.mxu0 0.0
        %755 = vmatpush1.msra.mxu0 0.0
        %756 = vmatprep.subr.mxu0 0.0
        %757 = vmatpush1.msra.mxu0 0.0
        %758 = vmatprep.subr.mxu0 0.0
        %759 = vmatpush1.msra.mxu0 0.0
        %760 = vmatprep.subr.mxu0 0.0
        %761 = vmatpush1.msra.mxu0 0.0
        %762 = vmatprep.subr.mxu0 0.0
        %763 = vmatpush1.msra.mxu0 0.0
        %764 = vmatprep.subr.mxu0 0.0
        %765 = vmatpush1.msra.mxu0 0.0
        %766 = vmatprep.subr.mxu0 0.0
        %767 = vmatpush1.msra.mxu0 0.0
        %768 = vmatprep.subr.mxu0 0.0
        %769 = vmatpush1.msra.mxu0 0.0
        %770 = vmatprep.subr.mxu0 0.0
        %771 = vmatpush1.msra.mxu0 0.0
        %772 = vmatprep.subr.mxu0 0.0
        %773 = vmatpush1.msra.mxu0 0.0
        %774 = vmatprep.subr.mxu0 0.0
        %775 = vmatpush1.msra.mxu0 0.0
        %776 = vmatprep.subr.mxu0 0.0
        %777 = vmatpush1.msra.mxu0 0.0
        %778 = vmatprep.subr.mxu0 0.0
        %779 = vmatpush1.msra.mxu0 0.0
        %780 = vmatprep.subr.mxu0 0.0
        %781 = vmatpush1.msra.mxu0 0.0
        %782 = vmatprep.subr.mxu0 0.0
        %783 = vmatpush1.msra.mxu0 0.0
        %784 = vmatprep.subr.mxu0 0.0
        %785 = vmatpush1.msra.mxu0 0.0
        %786 = vmatprep.subr.mxu0 0.0
        %787 = vmatpush1.msra.mxu0 0.0
        %788 = vmatprep.subr.mxu0 0.0
        %789 = vmatpush1.msra.mxu0 0.0
        %790 = vmatprep.subr.mxu0 0.0
        %791 = vmatpush1.msra.mxu0 0.0
        %792 = vmatprep.subr.mxu0 0.0
        %793 = vmatpush1.msra.mxu0 0.0
        %794 = vmatprep.subr.mxu0 0.0
        %795 = vmatpush1.msra.mxu0 0.0
        %796 = vmatprep.subr.mxu0 0.0
        %797 = vmatpush1.msra.mxu0 0.0
        %798 = vmatprep.subr.mxu0 0.0
        %799 = vmatpush1.msra.mxu0 0.0
        %800 = vmatprep.subr.mxu0 0.0
        %801 = vmatpush1.msra.mxu0 0.0
        %802 = vmatprep.subr.mxu0 0.0
        %803 = vmatpush1.msra.mxu0 0.0
        %804 = vmatprep.subr.mxu0 0.0
        %805 = vmatpush1.msra.mxu0 0.0
        %806 = vmatprep.mubr.f32.mxu0 0.0
        %807 = vmatmul.mubr.f32.gmra.mrb[0].mxu0 %v734
        %v808 = vpop.f32.mrb[0].mxu0
        %v809 = vadd.f32 0.0, %v808
        %v810 = vpop.f32.mrb[0].mxu0
        %v811 = vadd.f32 0.0, %v810
        %812 = vdwg.mxu0
        %v814 = vsel %vm353, %v717, 0
        %v817 = vsel %vm357, %v724, 0
        %v820 = vsel %vm357, %v723, 0
        %822 = vmatprep.subr.mxu0 %v820
        %823 = vmatpush1.msra.mxu0 %v817
        %824 = vmatprep.subr.mxu0 0.0
        %825 = vmatpush1.msra.mxu0 0.0
        %826 = vmatprep.subr.mxu0 0.0
        %827 = vmatpush1.msra.mxu0 0.0
        %828 = vmatprep.subr.mxu0 0.0
        %829 = vmatpush1.msra.mxu0 0.0
        %830 = vmatprep.subr.mxu0 0.0
        %831 = vmatpush1.msra.mxu0 0.0
        %832 = vmatprep.subr.mxu0 0.0
        %833 = vmatpush1.msra.mxu0 0.0
        %834 = vmatprep.subr.mxu0 0.0
        %835 = vmatpush1.msra.mxu0 0.0
        %836 = vmatprep.subr.mxu0 0.0
        %837 = vmatpush1.msra.mxu0 0.0
        %838 = vmatprep.subr.mxu0 0.0
        %839 = vmatpush1.msra.mxu0 0.0
        %840 = vmatprep.subr.mxu0 0.0
        %841 = vmatpush1.msra.mxu0 0.0
        %842 = vmatprep.subr.mxu0 0.0
        %843 = vmatpush1.msra.mxu0 0.0
        %844 = vmatprep.subr.mxu0 0.0
        %845 = vmatpush1.msra.mxu0 0.0
        %846 = vmatprep.subr.mxu0 0.0
        %847 = vmatpush1.msra.mxu0 0.0
        %848 = vmatprep.subr.mxu0 0.0
        %849 = vmatpush1.msra.mxu0 0.0
        %850 = vmatprep.subr.mxu0 0.0
        %851 = vmatpush1.msra.mxu0 0.0
        %852 = vmatprep.subr.mxu0 0.0
        %853 = vmatpush1.msra.mxu0 0.0
        %854 = vmatprep.subr.mxu0 0.0
        %855 = vmatpush1.msra.mxu0 0.0
        %856 = vmatprep.subr.mxu0 0.0
        %857 = vmatpush1.msra.mxu0 0.0
        %858 = vmatprep.subr.mxu0 0.0
        %859 = vmatpush1.msra.mxu0 0.0
        %860 = vmatprep.subr.mxu0 0.0
        %861 = vmatpush1.msra.mxu0 0.0
        %862 = vmatprep.subr.mxu0 0.0
        %863 = vmatpush1.msra.mxu0 0.0
        %864 = vmatprep.subr.mxu0 0.0
        %865 = vmatpush1.msra.mxu0 0.0
        %866 = vmatprep.subr.mxu0 0.0
        %867 = vmatpush1.msra.mxu0 0.0
        %868 = vmatprep.subr.mxu0 0.0
        %869 = vmatpush1.msra.mxu0 0.0
        %870 = vmatprep.subr.mxu0 0.0
        %871 = vmatpush1.msra.mxu0 0.0
        %872 = vmatprep.subr.mxu0 0.0
        %873 = vmatpush1.msra.mxu0 0.0
        %874 = vmatprep.subr.mxu0 0.0
        %875 = vmatpush1.msra.mxu0 0.0
        %876 = vmatprep.subr.mxu0 0.0
        %877 = vmatpush1.msra.mxu0 0.0
        %878 = vmatprep.subr.mxu0 0.0
        %879 = vmatpush1.msra.mxu0 0.0
        %880 = vmatprep.subr.mxu0 0.0
        %881 = vmatpush1.msra.mxu0 0.0
        %882 = vmatprep.subr.mxu0 0.0
        %883 = vmatpush1.msra.mxu0 0.0
        %884 = vmatprep.subr.mxu0 0.0
        %885 = vmatpush1.msra.mxu0 0.0
        %886 = vmatprep.mubr.f32.mxu0 0.0
        %887 = vmatmul.mubr.f32.gmra.mrb[0].mxu0 %v814
        %v888 = vpop.f32.mrb[0].mxu0
        %v889 = vadd.f32 %v809, %v888
        %v890 = vpop.f32.mrb[0].mxu0
        %v891 = vadd.f32 %v811, %v890
        %892 = vdwg.mxu0
        %v893 = vlaneseq
        %v894 = vshrl.u32 %v893, 7
        %v895 = vsub.s32 2, %v894
        %v896 = vrot.slane %v324, %v895
        %v897 = vlaneseq
        %v898 = vshrl.u32 %v897, 7
        %v899 = vsub.s32 2, %v898
        %v900 = vrot.slane %v325, %v899
        %v901 = vmul.f32 %v889, %v896
        %v902 = vmul.f32 %v891, %v900
        %v903 = vadd.f32 %v714, %v901
        %v904 = vadd.f32 %v715, %v902
        %s905 = scalar_lea.vmem %s3, 12
        %v906 = vld [vmem:[%s905] sm:$0xf]
        %907 = vrot.lane.b32.xlu0 %v328, 1
        %v908 = vpop.permute.xlu0 %907
        %909 = vrot.lane.b32.xlu0 %v332, 1
        %v910 = vpop.permute.xlu0 %909
        %vm911 = vcmp.lt.s32.totalorder %v339, 1
        %v912 = vsel %vm911, %v908, %v910
        %v913 = vsel %vm911, %v910, %v908
        %s914 = scalar_lea.vmem %s4, 12
        %v915 = vld [vmem:[%s914] sm:$0xf]
        %916 = vrot.lane.b32.xlu0 %v329, 1
        %v917 = vpop.permute.xlu0 %916
        %918 = vrot.lane.b32.xlu0 %v345, 1
        %v919 = vpop.permute.xlu0 %918
        %v920 = vsel %vm911, %v917, %v919
        %v921 = vsel %vm911, %v919, %v917
        %v923 = vsel %vm353, %v915, 0
        %v926 = vsel %vm357, %v921, 0
        %v929 = vsel %vm357, %v920, 0
        %931 = vmatprep.subr.mxu0 %v929
        %932 = vmatpush1.msra.mxu0 %v926
        %933 = vmatprep.subr.mxu0 0.0
        %934 = vmatpush1.msra.mxu0 0.0
        %935 = vmatprep.subr.mxu0 0.0
        %936 = vmatpush1.msra.mxu0 0.0
        %937 = vmatprep.subr.mxu0 0.0
        %938 = vmatpush1.msra.mxu0 0.0
        %939 = vmatprep.subr.mxu0 0.0
        %940 = vmatpush1.msra.mxu0 0.0
        %941 = vmatprep.subr.mxu0 0.0
        %942 = vmatpush1.msra.mxu0 0.0
        %943 = vmatprep.subr.mxu0 0.0
        %944 = vmatpush1.msra.mxu0 0.0
        %945 = vmatprep.subr.mxu0 0.0
        %946 = vmatpush1.msra.mxu0 0.0
        %947 = vmatprep.subr.mxu0 0.0
        %948 = vmatpush1.msra.mxu0 0.0
        %949 = vmatprep.subr.mxu0 0.0
        %950 = vmatpush1.msra.mxu0 0.0
        %951 = vmatprep.subr.mxu0 0.0
        %952 = vmatpush1.msra.mxu0 0.0
        %953 = vmatprep.subr.mxu0 0.0
        %954 = vmatpush1.msra.mxu0 0.0
        %955 = vmatprep.subr.mxu0 0.0
        %956 = vmatpush1.msra.mxu0 0.0
        %957 = vmatprep.subr.mxu0 0.0
        %958 = vmatpush1.msra.mxu0 0.0
        %959 = vmatprep.subr.mxu0 0.0
        %960 = vmatpush1.msra.mxu0 0.0
        %961 = vmatprep.subr.mxu0 0.0
        %962 = vmatpush1.msra.mxu0 0.0
        %963 = vmatprep.subr.mxu0 0.0
        %964 = vmatpush1.msra.mxu0 0.0
        %965 = vmatprep.subr.mxu0 0.0
        %966 = vmatpush1.msra.mxu0 0.0
        %967 = vmatprep.subr.mxu0 0.0
        %968 = vmatpush1.msra.mxu0 0.0
        %969 = vmatprep.subr.mxu0 0.0
        %970 = vmatpush1.msra.mxu0 0.0
        %971 = vmatprep.subr.mxu0 0.0
        %972 = vmatpush1.msra.mxu0 0.0
        %973 = vmatprep.subr.mxu0 0.0
        %974 = vmatpush1.msra.mxu0 0.0
        %975 = vmatprep.subr.mxu0 0.0
        %976 = vmatpush1.msra.mxu0 0.0
        %977 = vmatprep.subr.mxu0 0.0
        %978 = vmatpush1.msra.mxu0 0.0
        %979 = vmatprep.subr.mxu0 0.0
        %980 = vmatpush1.msra.mxu0 0.0
        %981 = vmatprep.subr.mxu0 0.0
        %982 = vmatpush1.msra.mxu0 0.0
        %983 = vmatprep.subr.mxu0 0.0
        %984 = vmatpush1.msra.mxu0 0.0
        %985 = vmatprep.subr.mxu0 0.0
        %986 = vmatpush1.msra.mxu0 0.0
        %987 = vmatprep.subr.mxu0 0.0
        %988 = vmatpush1.msra.mxu0 0.0
        %989 = vmatprep.subr.mxu0 0.0
        %990 = vmatpush1.msra.mxu0 0.0
        %991 = vmatprep.subr.mxu0 0.0
        %992 = vmatpush1.msra.mxu0 0.0
        %993 = vmatprep.subr.mxu0 0.0
        %994 = vmatpush1.msra.mxu0 0.0
        %995 = vmatprep.mubr.f32.mxu0 0.0
        %996 = vmatmul.mubr.f32.gmra.mrb[0].mxu0 %v923
        %v997 = vpop.f32.mrb[0].mxu0
        %v998 = vadd.f32 0.0, %v997
        %v999 = vpop.f32.mrb[0].mxu0
        %v1000 = vadd.f32 0.0, %v999
        %1001 = vdwg.mxu0
        %v1003 = vsel %vm353, %v906, 0
        %v1006 = vsel %vm357, %v913, 0
        %v1009 = vsel %vm357, %v912, 0
        %1011 = vmatprep.subr.mxu0 %v1009
        %1012 = vmatpush1.msra.mxu0 %v1006
        %1013 = vmatprep.subr.mxu0 0.0
        %1014 = vmatpush1.msra.mxu0 0.0
        %1015 = vmatprep.subr.mxu0 0.0
        %1016 = vmatpush1.msra.mxu0 0.0
        %1017 = vmatprep.subr.mxu0 0.0
        %1018 = vmatpush1.msra.mxu0 0.0
        %1019 = vmatprep.subr.mxu0 0.0
        %1020 = vmatpush1.msra.mxu0 0.0
        %1021 = vmatprep.subr.mxu0 0.0
        %1022 = vmatpush1.msra.mxu0 0.0
        %1023 = vmatprep.subr.mxu0 0.0
        %1024 = vmatpush1.msra.mxu0 0.0
        %1025 = vmatprep.subr.mxu0 0.0
        %1026 = vmatpush1.msra.mxu0 0.0
        %1027 = vmatprep.subr.mxu0 0.0
        %1028 = vmatpush1.msra.mxu0 0.0
        %1029 = vmatprep.subr.mxu0 0.0
        %1030 = vmatpush1.msra.mxu0 0.0
        %1031 = vmatprep.subr.mxu0 0.0
        %1032 = vmatpush1.msra.mxu0 0.0
        %1033 = vmatprep.subr.mxu0 0.0
        %1034 = vmatpush1.msra.mxu0 0.0
        %1035 = vmatprep.subr.mxu0 0.0
        %1036 = vmatpush1.msra.mxu0 0.0
        %1037 = vmatprep.subr.mxu0 0.0
        %1038 = vmatpush1.msra.mxu0 0.0
        %1039 = vmatprep.subr.mxu0 0.0
        %1040 = vmatpush1.msra.mxu0 0.0
        %1041 = vmatprep.subr.mxu0 0.0
        %1042 = vmatpush1.msra.mxu0 0.0
        %1043 = vmatprep.subr.mxu0 0.0
        %1044 = vmatpush1.msra.mxu0 0.0
        %1045 = vmatprep.subr.mxu0 0.0
        %1046 = vmatpush1.msra.mxu0 0.0
        %1047 = vmatprep.subr.mxu0 0.0
        %1048 = vmatpush1.msra.mxu0 0.0
        %1049 = vmatprep.subr.mxu0 0.0
        %1050 = vmatpush1.msra.mxu0 0.0
        %1051 = vmatprep.subr.mxu0 0.0
        %1052 = vmatpush1.msra.mxu0 0.0
        %1053 = vmatprep.subr.mxu0 0.0
        %1054 = vmatpush1.msra.mxu0 0.0
        %1055 = vmatprep.subr.mxu0 0.0
        %1056 = vmatpush1.msra.mxu0 0.0
        %1057 = vmatprep.subr.mxu0 0.0
        %1058 = vmatpush1.msra.mxu0 0.0
        %1059 = vmatprep.subr.mxu0 0.0
        %1060 = vmatpush1.msra.mxu0 0.0
        %1061 = vmatprep.subr.mxu0 0.0
        %1062 = vmatpush1.msra.mxu0 0.0
        %1063 = vmatprep.subr.mxu0 0.0
        %1064 = vmatpush1.msra.mxu0 0.0
        %1065 = vmatprep.subr.mxu0 0.0
        %1066 = vmatpush1.msra.mxu0 0.0
        %1067 = vmatprep.subr.mxu0 0.0
        %1068 = vmatpush1.msra.mxu0 0.0
        %1069 = vmatprep.subr.mxu0 0.0
        %1070 = vmatpush1.msra.mxu0 0.0
        %1071 = vmatprep.subr.mxu0 0.0
        %1072 = vmatpush1.msra.mxu0 0.0
        %1073 = vmatprep.subr.mxu0 0.0
        %1074 = vmatpush1.msra.mxu0 0.0
        %1075 = vmatprep.mubr.f32.mxu0 0.0
        %1076 = vmatmul.mubr.f32.gmra.mrb[0].mxu0 %v1003
        %v1077 = vpop.f32.mrb[0].mxu0
        %v1078 = vadd.f32 %v998, %v1077
        %v1079 = vpop.f32.mrb[0].mxu0
        %v1080 = vadd.f32 %v1000, %v1079
        %1081 = vdwg.mxu0
        %v1082 = vlaneseq
        %v1083 = vshrl.u32 %v1082, 7
        %v1084 = vsub.s32 3, %v1083
        %v1085 = vrot.slane %v324, %v1084
        %v1086 = vlaneseq
        %v1087 = vshrl.u32 %v1086, 7
        %v1088 = vsub.s32 3, %v1087
        %v1089 = vrot.slane %v325, %v1088
        %v1090 = vmul.f32 %v1078, %v1085
        %v1091 = vmul.f32 %v1080, %v1089
        %v1092 = vadd.f32 %v903, %v1090
        %v1093 = vadd.f32 %v904, %v1091
        %s1094 = scalar_lea.vmem %s3, 16
        %v1095 = vld [vmem:[%s1094] sm:$0xf]
        %s1096 = scalar_lea.vmem %s4, 16
        %v1097 = vld [vmem:[%s1096] sm:$0xf]
        %v1099 = vsel %vm353, %v1097, 0
        %v1101 = vsel %vm357, %v329, 0
        %v1103 = vsel %vm357, %v345, 0
        %1105 = vmatprep.subr.mxu0 %v1103
        %1106 = vmatpush1.msra.mxu0 %v1101
        %1107 = vmatprep.subr.mxu0 0.0
        %1108 = vmatpush1.msra.mxu0 0.0
        %1109 = vmatprep.subr.mxu0 0.0
        %1110 = vmatpush1.msra.mxu0 0.0
        %1111 = vmatprep.subr.mxu0 0.0
        %1112 = vmatpush1.msra.mxu0 0.0
        %1113 = vmatprep.subr.mxu0 0.0
        %1114 = vmatpush1.msra.mxu0 0.0
        %1115 = vmatprep.subr.mxu0 0.0
        %1116 = vmatpush1.msra.mxu0 0.0
        %1117 = vmatprep.subr.mxu0 0.0
        %1118 = vmatpush1.msra.mxu0 0.0
        %1119 = vmatprep.subr.mxu0 0.0
        %1120 = vmatpush1.msra.mxu0 0.0
        %1121 = vmatprep.subr.mxu0 0.0
        %1122 = vmatpush1.msra.mxu0 0.0
        %1123 = vmatprep.subr.mxu0 0.0
        %1124 = vmatpush1.msra.mxu0 0.0
        %1125 = vmatprep.subr.mxu0 0.0
        %1126 = vmatpush1.msra.mxu0 0.0
        %1127 = vmatprep.subr.mxu0 0.0
        %1128 = vmatpush1.msra.mxu0 0.0
        %1129 = vmatprep.subr.mxu0 0.0
        %1130 = vmatpush1.msra.mxu0 0.0
        %1131 = vmatprep.subr.mxu0 0.0
        %1132 = vmatpush1.msra.mxu0 0.0
        %1133 = vmatprep.subr.mxu0 0.0
        %1134 = vmatpush1.msra.mxu0 0.0
        %1135 = vmatprep.subr.mxu0 0.0
        %1136 = vmatpush1.msra.mxu0 0.0
        %1137 = vmatprep.subr.mxu0 0.0
        %1138 = vmatpush1.msra.mxu0 0.0
        %1139 = vmatprep.subr.mxu0 0.0
        %1140 = vmatpush1.msra.mxu0 0.0
        %1141 = vmatprep.subr.mxu0 0.0
        %1142 = vmatpush1.msra.mxu0 0.0
        %1143 = vmatprep.subr.mxu0 0.0
        %1144 = vmatpush1.msra.mxu0 0.0
        %1145 = vmatprep.subr.mxu0 0.0
        %1146 = vmatpush1.msra.mxu0 0.0
        %1147 = vmatprep.subr.mxu0 0.0
        %1148 = vmatpush1.msra.mxu0 0.0
        %1149 = vmatprep.subr.mxu0 0.0
        %1150 = vmatpush1.msra.mxu0 0.0
        %1151 = vmatprep.subr.mxu0 0.0
        %1152 = vmatpush1.msra.mxu0 0.0
        %1153 = vmatprep.subr.mxu0 0.0
        %1154 = vmatpush1.msra.mxu0 0.0
        %1155 = vmatprep.subr.mxu0 0.0
        %1156 = vmatpush1.msra.mxu0 0.0
        %1157 = vmatprep.subr.mxu0 0.0
        %1158 = vmatpush1.msra.mxu0 0.0
        %1159 = vmatprep.subr.mxu0 0.0
        %1160 = vmatpush1.msra.mxu0 0.0
        %1161 = vmatprep.subr.mxu0 0.0
        %1162 = vmatpush1.msra.mxu0 0.0
        %1163 = vmatprep.subr.mxu0 0.0
        %1164 = vmatpush1.msra.mxu0 0.0
        %1165 = vmatprep.subr.mxu0 0.0
        %1166 = vmatpush1.msra.mxu0 0.0
        %1167 = vmatprep.subr.mxu0 0.0
        %1168 = vmatpush1.msra.mxu0 0.0
        %1169 = vmatprep.mubr.f32.mxu0 0.0
        %1170 = vmatmul.mubr.f32.gmra.mrb[0].mxu0 %v1099
        %v1171 = vpop.f32.mrb[0].mxu0
        %v1172 = vadd.f32 0.0, %v1171
        %v1173 = vpop.f32.mrb[0].mxu0
        %v1174 = vadd.f32 0.0, %v1173
        %1175 = vdwg.mxu0
        %v1177 = vsel %vm353, %v1095, 0
        %v1179 = vsel %vm357, %v328, 0
        %v1181 = vsel %vm357, %v332, 0
        %1183 = vmatprep.subr.mxu0 %v1181
        %1184 = vmatpush1.msra.mxu0 %v1179
        %1185 = vmatprep.subr.mxu0 0.0
        %1186 = vmatpush1.msra.mxu0 0.0
        %1187 = vmatprep.subr.mxu0 0.0
        %1188 = vmatpush1.msra.mxu0 0.0
        %1189 = vmatprep.subr.mxu0 0.0
        %1190 = vmatpush1.msra.mxu0 0.0
        %1191 = vmatprep.subr.mxu0 0.0
        %1192 = vmatpush1.msra.mxu0 0.0
        %1193 = vmatprep.subr.mxu0 0.0
        %1194 = vmatpush1.msra.mxu0 0.0
        %1195 = vmatprep.subr.mxu0 0.0
        %1196 = vmatpush1.msra.mxu0 0.0
        %1197 = vmatprep.subr.mxu0 0.0
        %1198 = vmatpush1.msra.mxu0 0.0
        %1199 = vmatprep.subr.mxu0 0.0
        %1200 = vmatpush1.msra.mxu0 0.0
        %1201 = vmatprep.subr.mxu0 0.0
        %1202 = vmatpush1.msra.mxu0 0.0
        %1203 = vmatprep.subr.mxu0 0.0
        %1204 = vmatpush1.msra.mxu0 0.0
        %1205 = vmatprep.subr.mxu0 0.0
        %1206 = vmatpush1.msra.mxu0 0.0
        %1207 = vmatprep.subr.mxu0 0.0
        %1208 = vmatpush1.msra.mxu0 0.0
        %1209 = vmatprep.subr.mxu0 0.0
        %1210 = vmatpush1.msra.mxu0 0.0
        %1211 = vmatprep.subr.mxu0 0.0
        %1212 = vmatpush1.msra.mxu0 0.0
        %1213 = vmatprep.subr.mxu0 0.0
        %1214 = vmatpush1.msra.mxu0 0.0
        %1215 = vmatprep.subr.mxu0 0.0
        %1216 = vmatpush1.msra.mxu0 0.0
        %1217 = vmatprep.subr.mxu0 0.0
        %1218 = vmatpush1.msra.mxu0 0.0
        %1219 = vmatprep.subr.mxu0 0.0
        %1220 = vmatpush1.msra.mxu0 0.0
        %1221 = vmatprep.subr.mxu0 0.0
        %1222 = vmatpush1.msra.mxu0 0.0
        %1223 = vmatprep.subr.mxu0 0.0
        %1224 = vmatpush1.msra.mxu0 0.0
        %1225 = vmatprep.subr.mxu0 0.0
        %1226 = vmatpush1.msra.mxu0 0.0
        %1227 = vmatprep.subr.mxu0 0.0
        %1228 = vmatpush1.msra.mxu0 0.0
        %1229 = vmatprep.subr.mxu0 0.0
        %1230 = vmatpush1.msra.mxu0 0.0
        %1231 = vmatprep.subr.mxu0 0.0
        %1232 = vmatpush1.msra.mxu0 0.0
        %1233 = vmatprep.subr.mxu0 0.0
        %1234 = vmatpush1.msra.mxu0 0.0
        %1235 = vmatprep.subr.mxu0 0.0
        %1236 = vmatpush1.msra.mxu0 0.0
        %1237 = vmatprep.subr.mxu0 0.0
        %1238 = vmatpush1.msra.mxu0 0.0
        %1239 = vmatprep.subr.mxu0 0.0
        %1240 = vmatpush1.msra.mxu0 0.0
        %1241 = vmatprep.subr.mxu0 0.0
        %1242 = vmatpush1.msra.mxu0 0.0
        %1243 = vmatprep.subr.mxu0 0.0
        %1244 = vmatpush1.msra.mxu0 0.0
        %1245 = vmatprep.subr.mxu0 0.0
        %1246 = vmatpush1.msra.mxu0 0.0
        %1247 = vmatprep.mubr.f32.mxu0 0.0
        %1248 = vmatmul.mubr.f32.gmra.mrb[0].mxu0 %v1177
        %v1249 = vpop.f32.mrb[0].mxu0
        %v1250 = vadd.f32 %v1172, %v1249
        %v1251 = vpop.f32.mrb[0].mxu0
        %v1252 = vadd.f32 %v1174, %v1251
        %1253 = vdwg.mxu0
        %v1254 = vadd.f32 %v1092, %v1250
        %v1255 = vadd.f32 %v1093, %v1252
        %s1256 = scalar_lea.vmem %s3, 20
        %v1257 = vld [vmem:[%s1256] sm:$0xf]
        %1258 = vrot.lane.b32.xlu0 %v328, 127
        %v1259 = vpop.permute.xlu0 %1258
        %1260 = vrot.lane.b32.xlu0 %v332, 127
        %v1261 = vpop.permute.xlu0 %1260
        %vm1262 = vcmp.lt.s32.totalorder %v339, 127
        %v1263 = vsel %vm1262, %v1259, %v1261
        %v1264 = vsel %vm1262, %v1261, %v1259
        %s1265 = scalar_lea.vmem %s4, 20
        %v1266 = vld [vmem:[%s1265] sm:$0xf]
        %1267 = vrot.lane.b32.xlu0 %v329, 127
        %v1268 = vpop.permute.xlu0 %1267
        %1269 = vrot.lane.b32.xlu0 %v345, 127
        %v1270 = vpop.permute.xlu0 %1269
        %v1271 = vsel %vm1262, %v1268, %v1270
        %v1272 = vsel %vm1262, %v1270, %v1268
        %v1274 = vsel %vm353, %v1266, 0
        %v1277 = vsel %vm357, %v1271, 0
        %v1280 = vsel %vm357, %v1272, 0
        %1282 = vmatprep.subr.mxu0 %v1280
        %1283 = vmatpush1.msra.mxu0 %v1277
        %1284 = vmatprep.subr.mxu0 0.0
        %1285 = vmatpush1.msra.mxu0 0.0
        %1286 = vmatprep.subr.mxu0 0.0
        %1287 = vmatpush1.msra.mxu0 0.0
        %1288 = vmatprep.subr.mxu0 0.0
        %1289 = vmatpush1.msra.mxu0 0.0
        %1290 = vmatprep.subr.mxu0 0.0
        %1291 = vmatpush1.msra.mxu0 0.0
        %1292 = vmatprep.subr.mxu0 0.0
        %1293 = vmatpush1.msra.mxu0 0.0
        %1294 = vmatprep.subr.mxu0 0.0
        %1295 = vmatpush1.msra.mxu0 0.0
        %1296 = vmatprep.subr.mxu0 0.0
        %1297 = vmatpush1.msra.mxu0 0.0
        %1298 = vmatprep.subr.mxu0 0.0
        %1299 = vmatpush1.msra.mxu0 0.0
        %1300 = vmatprep.subr.mxu0 0.0
        %1301 = vmatpush1.msra.mxu0 0.0
        %1302 = vmatprep.subr.mxu0 0.0
        %1303 = vmatpush1.msra.mxu0 0.0
        %1304 = vmatprep.subr.mxu0 0.0
        %1305 = vmatpush1.msra.mxu0 0.0
        %1306 = vmatprep.subr.mxu0 0.0
        %1307 = vmatpush1.msra.mxu0 0.0
        %1308 = vmatprep.subr.mxu0 0.0
        %1309 = vmatpush1.msra.mxu0 0.0
        %1310 = vmatprep.subr.mxu0 0.0
        %1311 = vmatpush1.msra.mxu0 0.0
        %1312 = vmatprep.subr.mxu0 0.0
        %1313 = vmatpush1.msra.mxu0 0.0
        %1314 = vmatprep.subr.mxu0 0.0
        %1315 = vmatpush1.msra.mxu0 0.0
        %1316 = vmatprep.subr.mxu0 0.0
        %1317 = vmatpush1.msra.mxu0 0.0
        %1318 = vmatprep.subr.mxu0 0.0
        %1319 = vmatpush1.msra.mxu0 0.0
        %1320 = vmatprep.subr.mxu0 0.0
        %1321 = vmatpush1.msra.mxu0 0.0
        %1322 = vmatprep.subr.mxu0 0.0
        %1323 = vmatpush1.msra.mxu0 0.0
        %1324 = vmatprep.subr.mxu0 0.0
        %1325 = vmatpush1.msra.mxu0 0.0
        %1326 = vmatprep.subr.mxu0 0.0
        %1327 = vmatpush1.msra.mxu0 0.0
        %1328 = vmatprep.subr.mxu0 0.0
        %1329 = vmatpush1.msra.mxu0 0.0
        %1330 = vmatprep.subr.mxu0 0.0
        %1331 = vmatpush1.msra.mxu0 0.0
        %1332 = vmatprep.subr.mxu0 0.0
        %1333 = vmatpush1.msra.mxu0 0.0
        %1334 = vmatprep.subr.mxu0 0.0
        %1335 = vmatpush1.msra.mxu0 0.0
        %1336 = vmatprep.subr.mxu0 0.0
        %1337 = vmatpush1.msra.mxu0 0.0
        %1338 = vmatprep.subr.mxu0 0.0
        %1339 = vmatpush1.msra.mxu0 0.0
        %1340 = vmatprep.subr.mxu0 0.0
        %1341 = vmatpush1.msra.mxu0 0.0
        %1342 = vmatprep.subr.mxu0 0.0
        %1343 = vmatpush1.msra.mxu0 0.0
        %1344 = vmatprep.subr.mxu0 0.0
        %1345 = vmatpush1.msra.mxu0 0.0
        %1346 = vmatprep.mubr.f32.mxu0 0.0
        %1347 = vmatmul.mubr.f32.gmra.mrb[0].mxu0 %v1274
        %v1348 = vpop.f32.mrb[0].mxu0
        %v1349 = vadd.f32 0.0, %v1348
        %v1350 = vpop.f32.mrb[0].mxu0
        %v1351 = vadd.f32 0.0, %v1350
        %1352 = vdwg.mxu0
        %v1354 = vsel %vm353, %v1257, 0
        %v1357 = vsel %vm357, %v1263, 0
        %v1360 = vsel %vm357, %v1264, 0
        %1362 = vmatprep.subr.mxu0 %v1360
        %1363 = vmatpush1.msra.mxu0 %v1357
        %1364 = vmatprep.subr.mxu0 0.0
        %1365 = vmatpush1.msra.mxu0 0.0
        %1366 = vmatprep.subr.mxu0 0.0
        %1367 = vmatpush1.msra.mxu0 0.0
        %1368 = vmatprep.subr.mxu0 0.0
        %1369 = vmatpush1.msra.mxu0 0.0
        %1370 = vmatprep.subr.mxu0 0.0
        %1371 = vmatpush1.msra.mxu0 0.0
        %1372 = vmatprep.subr.mxu0 0.0
        %1373 = vmatpush1.msra.mxu0 0.0
        %1374 = vmatprep.subr.mxu0 0.0
        %1375 = vmatpush1.msra.mxu0 0.0
        %1376 = vmatprep.subr.mxu0 0.0
        %1377 = vmatpush1.msra.mxu0 0.0
        %1378 = vmatprep.subr.mxu0 0.0
        %1379 = vmatpush1.msra.mxu0 0.0
        %1380 = vmatprep.subr.mxu0 0.0
        %1381 = vmatpush1.msra.mxu0 0.0
        %1382 = vmatprep.subr.mxu0 0.0
        %1383 = vmatpush1.msra.mxu0 0.0
        %1384 = vmatprep.subr.mxu0 0.0
        %1385 = vmatpush1.msra.mxu0 0.0
        %1386 = vmatprep.subr.mxu0 0.0
        %1387 = vmatpush1.msra.mxu0 0.0
        %1388 = vmatprep.subr.mxu0 0.0
        %1389 = vmatpush1.msra.mxu0 0.0
        %1390 = vmatprep.subr.mxu0 0.0
        %1391 = vmatpush1.msra.mxu0 0.0
        %1392 = vmatprep.subr.mxu0 0.0
        %1393 = vmatpush1.msra.mxu0 0.0
        %1394 = vmatprep.subr.mxu0 0.0
        %1395 = vmatpush1.msra.mxu0 0.0
        %1396 = vmatprep.subr.mxu0 0.0
        %1397 = vmatpush1.msra.mxu0 0.0
        %1398 = vmatprep.subr.mxu0 0.0
        %1399 = vmatpush1.msra.mxu0 0.0
        %1400 = vmatprep.subr.mxu0 0.0
        %1401 = vmatpush1.msra.mxu0 0.0
        %1402 = vmatprep.subr.mxu0 0.0
        %1403 = vmatpush1.msra.mxu0 0.0
        %1404 = vmatprep.subr.mxu0 0.0
        %1405 = vmatpush1.msra.mxu0 0.0
        %1406 = vmatprep.subr.mxu0 0.0
        %1407 = vmatpush1.msra.mxu0 0.0
        %1408 = vmatprep.subr.mxu0 0.0
        %1409 = vmatpush1.msra.mxu0 0.0
        %1410 = vmatprep.subr.mxu0 0.0
        %1411 = vmatpush1.msra.mxu0 0.0
        %1412 = vmatprep.subr.mxu0 0.0
        %1413 = vmatpush1.msra.mxu0 0.0
        %1414 = vmatprep.subr.mxu0 0.0
        %1415 = vmatpush1.msra.mxu0 0.0
        %1416 = vmatprep.subr.mxu0 0.0
        %1417 = vmatpush1.msra.mxu0 0.0
        %1418 = vmatprep.subr.mxu0 0.0
        %1419 = vmatpush1.msra.mxu0 0.0
        %1420 = vmatprep.subr.mxu0 0.0
        %1421 = vmatpush1.msra.mxu0 0.0
        %1422 = vmatprep.subr.mxu0 0.0
        %1423 = vmatpush1.msra.mxu0 0.0
        %1424 = vmatprep.subr.mxu0 0.0
        %1425 = vmatpush1.msra.mxu0 0.0
        %1426 = vmatprep.mubr.f32.mxu0 0.0
        %1427 = vmatmul.mubr.f32.gmra.mrb[0].mxu0 %v1354
        %v1428 = vpop.f32.mrb[0].mxu0
        %v1429 = vadd.f32 %v1349, %v1428
        %v1430 = vpop.f32.mrb[0].mxu0
        %v1431 = vadd.f32 %v1351, %v1430
        %1432 = vdwg.mxu0
        %v1433 = vlaneseq
        %v1434 = vshrl.u32 %v1433, 7
        %v1435 = vsub.s32 4, %v1434
        %v1436 = vrot.slane %v324, %v1435
        %v1437 = vlaneseq
        %v1438 = vshrl.u32 %v1437, 7
        %v1439 = vsub.s32 4, %v1438
        %v1440 = vrot.slane %v325, %v1439
        %v1441 = vmul.f32 %v1429, %v1436
        %v1442 = vmul.f32 %v1431, %v1440
        %v1443 = vadd.f32 %v1254, %v1441
        %v1444 = vadd.f32 %v1255, %v1442
        %s1445 = scalar_lea.vmem %s3, 24
        %v1446 = vld [vmem:[%s1445] sm:$0xf]
        %1447 = vrot.lane.b32.xlu0 %v328, 113
        %v1448 = vpop.permute.xlu0 %1447
        %1449 = vrot.lane.b32.xlu0 %v332, 113
        %v1450 = vpop.permute.xlu0 %1449
        %vm1451 = vcmp.lt.s32.totalorder %v339, 113
        %v1452 = vsel %vm1451, %v1448, %v1450
        %v1453 = vsel %vm1451, %v1450, %v1448
        %s1454 = scalar_lea.vmem %s4, 24
        %v1455 = vld [vmem:[%s1454] sm:$0xf]
        %1456 = vrot.lane.b32.xlu0 %v329, 113
        %v1457 = vpop.permute.xlu0 %1456
        %1458 = vrot.lane.b32.xlu0 %v345, 113
        %v1459 = vpop.permute.xlu0 %1458
        %v1460 = vsel %vm1451, %v1457, %v1459
        %v1461 = vsel %vm1451, %v1459, %v1457
        %v1463 = vsel %vm353, %v1455, 0
        %v1466 = vsel %vm357, %v1460, 0
        %v1469 = vsel %vm357, %v1461, 0
        %1471 = vmatprep.subr.mxu0 %v1469
        %1472 = vmatpush1.msra.mxu0 %v1466
        %1473 = vmatprep.subr.mxu0 0.0
        %1474 = vmatpush1.msra.mxu0 0.0
        %1475 = vmatprep.subr.mxu0 0.0
        %1476 = vmatpush1.msra.mxu0 0.0
        %1477 = vmatprep.subr.mxu0 0.0
        %1478 = vmatpush1.msra.mxu0 0.0
        %1479 = vmatprep.subr.mxu0 0.0
        %1480 = vmatpush1.msra.mxu0 0.0
        %1481 = vmatprep.subr.mxu0 0.0
        %1482 = vmatpush1.msra.mxu0 0.0
        %1483 = vmatprep.subr.mxu0 0.0
        %1484 = vmatpush1.msra.mxu0 0.0
        %1485 = vmatprep.subr.mxu0 0.0
        %1486 = vmatpush1.msra.mxu0 0.0
        %1487 = vmatprep.subr.mxu0 0.0
        %1488 = vmatpush1.msra.mxu0 0.0
        %1489 = vmatprep.subr.mxu0 0.0
        %1490 = vmatpush1.msra.mxu0 0.0
        %1491 = vmatprep.subr.mxu0 0.0
        %1492 = vmatpush1.msra.mxu0 0.0
        %1493 = vmatprep.subr.mxu0 0.0
        %1494 = vmatpush1.msra.mxu0 0.0
        %1495 = vmatprep.subr.mxu0 0.0
        %1496 = vmatpush1.msra.mxu0 0.0
        %1497 = vmatprep.subr.mxu0 0.0
        %1498 = vmatpush1.msra.mxu0 0.0
        %1499 = vmatprep.subr.mxu0 0.0
        %1500 = vmatpush1.msra.mxu0 0.0
        %1501 = vmatprep.subr.mxu0 0.0
        %1502 = vmatpush1.msra.mxu0 0.0
        %1503 = vmatprep.subr.mxu0 0.0
        %1504 = vmatpush1.msra.mxu0 0.0
        %1505 = vmatprep.subr.mxu0 0.0
        %1506 = vmatpush1.msra.mxu0 0.0
        %1507 = vmatprep.subr.mxu0 0.0
        %1508 = vmatpush1.msra.mxu0 0.0
        %1509 = vmatprep.subr.mxu0 0.0
        %1510 = vmatpush1.msra.mxu0 0.0
        %1511 = vmatprep.subr.mxu0 0.0
        %1512 = vmatpush1.msra.mxu0 0.0
        %1513 = vmatprep.subr.mxu0 0.0
        %1514 = vmatpush1.msra.mxu0 0.0
        %1515 = vmatprep.subr.mxu0 0.0
        %1516 = vmatpush1.msra.mxu0 0.0
        %1517 = vmatprep.subr.mxu0 0.0
        %1518 = vmatpush1.msra.mxu0 0.0
        %1519 = vmatprep.subr.mxu0 0.0
        %1520 = vmatpush1.msra.mxu0 0.0
        %1521 = vmatprep.subr.mxu0 0.0
        %1522 = vmatpush1.msra.mxu0 0.0
        %1523 = vmatprep.subr.mxu0 0.0
        %1524 = vmatpush1.msra.mxu0 0.0
        %1525 = vmatprep.subr.mxu0 0.0
        %1526 = vmatpush1.msra.mxu0 0.0
        %1527 = vmatprep.subr.mxu0 0.0
        %1528 = vmatpush1.msra.mxu0 0.0
        %1529 = vmatprep.subr.mxu0 0.0
        %1530 = vmatpush1.msra.mxu0 0.0
        %1531 = vmatprep.subr.mxu0 0.0
        %1532 = vmatpush1.msra.mxu0 0.0
        %1533 = vmatprep.subr.mxu0 0.0
        %1534 = vmatpush1.msra.mxu0 0.0
        %1535 = vmatprep.mubr.f32.mxu0 0.0
        %1536 = vmatmul.mubr.f32.gmra.mrb[0].mxu0 %v1463
        %v1537 = vpop.f32.mrb[0].mxu0
        %v1538 = vadd.f32 0.0, %v1537
        %v1539 = vpop.f32.mrb[0].mxu0
        %v1540 = vadd.f32 0.0, %v1539
        %1541 = vdwg.mxu0
        %v1543 = vsel %vm353, %v1446, 0
        %v1546 = vsel %vm357, %v1452, 0
        %v1549 = vsel %vm357, %v1453, 0
        %1551 = vmatprep.subr.mxu0 %v1549
        %1552 = vmatpush1.msra.mxu0 %v1546
        %1553 = vmatprep.subr.mxu0 0.0
        %1554 = vmatpush1.msra.mxu0 0.0
        %1555 = vmatprep.subr.mxu0 0.0
        %1556 = vmatpush1.msra.mxu0 0.0
        %1557 = vmatprep.subr.mxu0 0.0
        %1558 = vmatpush1.msra.mxu0 0.0
        %1559 = vmatprep.subr.mxu0 0.0
        %1560 = vmatpush1.msra.mxu0 0.0
        %1561 = vmatprep.subr.mxu0 0.0
        %1562 = vmatpush1.msra.mxu0 0.0
        %1563 = vmatprep.subr.mxu0 0.0
        %1564 = vmatpush1.msra.mxu0 0.0
        %1565 = vmatprep.subr.mxu0 0.0
        %1566 = vmatpush1.msra.mxu0 0.0
        %1567 = vmatprep.subr.mxu0 0.0
        %1568 = vmatpush1.msra.mxu0 0.0
        %1569 = vmatprep.subr.mxu0 0.0
        %1570 = vmatpush1.msra.mxu0 0.0
        %1571 = vmatprep.subr.mxu0 0.0
        %1572 = vmatpush1.msra.mxu0 0.0
        %1573 = vmatprep.subr.mxu0 0.0
        %1574 = vmatpush1.msra.mxu0 0.0
        %1575 = vmatprep.subr.mxu0 0.0
        %1576 = vmatpush1.msra.mxu0 0.0
        %1577 = vmatprep.subr.mxu0 0.0
        %1578 = vmatpush1.msra.mxu0 0.0
        %1579 = vmatprep.subr.mxu0 0.0
        %1580 = vmatpush1.msra.mxu0 0.0
        %1581 = vmatprep.subr.mxu0 0.0
        %1582 = vmatpush1.msra.mxu0 0.0
        %1583 = vmatprep.subr.mxu0 0.0
        %1584 = vmatpush1.msra.mxu0 0.0
        %1585 = vmatprep.subr.mxu0 0.0
        %1586 = vmatpush1.msra.mxu0 0.0
        %1587 = vmatprep.subr.mxu0 0.0
        %1588 = vmatpush1.msra.mxu0 0.0
        %1589 = vmatprep.subr.mxu0 0.0
        %1590 = vmatpush1.msra.mxu0 0.0
        %1591 = vmatprep.subr.mxu0 0.0
        %1592 = vmatpush1.msra.mxu0 0.0
        %1593 = vmatprep.subr.mxu0 0.0
        %1594 = vmatpush1.msra.mxu0 0.0
        %1595 = vmatprep.subr.mxu0 0.0
        %1596 = vmatpush1.msra.mxu0 0.0
        %1597 = vmatprep.subr.mxu0 0.0
        %1598 = vmatpush1.msra.mxu0 0.0
        %1599 = vmatprep.subr.mxu0 0.0
        %1600 = vmatpush1.msra.mxu0 0.0
        %1601 = vmatprep.subr.mxu0 0.0
        %1602 = vmatpush1.msra.mxu0 0.0
        %1603 = vmatprep.subr.mxu0 0.0
        %1604 = vmatpush1.msra.mxu0 0.0
        %1605 = vmatprep.subr.mxu0 0.0
        %1606 = vmatpush1.msra.mxu0 0.0
        %1607 = vmatprep.subr.mxu0 0.0
        %1608 = vmatpush1.msra.mxu0 0.0
        %1609 = vmatprep.subr.mxu0 0.0
        %1610 = vmatpush1.msra.mxu0 0.0
        %1611 = vmatprep.subr.mxu0 0.0
        %1612 = vmatpush1.msra.mxu0 0.0
        %1613 = vmatprep.subr.mxu0 0.0
        %1614 = vmatpush1.msra.mxu0 0.0
        %1615 = vmatprep.mubr.f32.mxu0 0.0
        %1616 = vmatmul.mubr.f32.gmra.mrb[0].mxu0 %v1543
        %v1617 = vpop.f32.mrb[0].mxu0
        %v1618 = vadd.f32 %v1538, %v1617
        %v1619 = vpop.f32.mrb[0].mxu0
        %v1620 = vadd.f32 %v1540, %v1619
        %1621 = vdwg.mxu0
        %v1622 = vlaneseq
        %v1623 = vshrl.u32 %v1622, 7
        %v1624 = vsub.s32 5, %v1623
        %v1625 = vrot.slane %v324, %v1624
        %v1626 = vlaneseq
        %v1627 = vshrl.u32 %v1626, 7
        %v1628 = vsub.s32 5, %v1627
        %v1629 = vrot.slane %v325, %v1628
        %v1630 = vmul.f32 %v1618, %v1625
        %v1631 = vmul.f32 %v1620, %v1629
        %v1632 = vadd.f32 %v1443, %v1630
        %v1633 = vadd.f32 %v1444, %v1631
        %s1634 = scalar_lea.vmem %s3, 28
        %v1635 = vld [vmem:[%s1634] sm:$0xf]
        %1636 = vrot.lane.b32.xlu0 %v328, 112
        %v1637 = vpop.permute.xlu0 %1636
        %1638 = vrot.lane.b32.xlu0 %v332, 112
        %v1639 = vpop.permute.xlu0 %1638
        %vm1640 = vcmp.lt.s32.totalorder %v339, 112
        %v1641 = vsel %vm1640, %v1637, %v1639
        %v1642 = vsel %vm1640, %v1639, %v1637
        %s1643 = scalar_lea.vmem %s4, 28
        %v1644 = vld [vmem:[%s1643] sm:$0xf]
        %1645 = vrot.lane.b32.xlu0 %v329, 112
        %v1646 = vpop.permute.xlu0 %1645
        %1647 = vrot.lane.b32.xlu0 %v345, 112
        %v1648 = vpop.permute.xlu0 %1647
        %v1649 = vsel %vm1640, %v1646, %v1648
        %v1650 = vsel %vm1640, %v1648, %v1646
        %v1652 = vsel %vm353, %v1644, 0
        %v1655 = vsel %vm357, %v1649, 0
        %v1658 = vsel %vm357, %v1650, 0
        %1660 = vmatprep.subr.mxu0 %v1658
        %1661 = vmatpush1.msra.mxu0 %v1655
        %1662 = vmatprep.subr.mxu0 0.0
        %1663 = vmatpush1.msra.mxu0 0.0
        %1664 = vmatprep.subr.mxu0 0.0
        %1665 = vmatpush1.msra.mxu0 0.0
        %1666 = vmatprep.subr.mxu0 0.0
        %1667 = vmatpush1.msra.mxu0 0.0
        %1668 = vmatprep.subr.mxu0 0.0
        %1669 = vmatpush1.msra.mxu0 0.0
        %1670 = vmatprep.subr.mxu0 0.0
        %1671 = vmatpush1.msra.mxu0 0.0
        %1672 = vmatprep.subr.mxu0 0.0
        %1673 = vmatpush1.msra.mxu0 0.0
        %1674 = vmatprep.subr.mxu0 0.0
        %1675 = vmatpush1.msra.mxu0 0.0
        %1676 = vmatprep.subr.mxu0 0.0
        %1677 = vmatpush1.msra.mxu0 0.0
        %1678 = vmatprep.subr.mxu0 0.0
        %1679 = vmatpush1.msra.mxu0 0.0
        %1680 = vmatprep.subr.mxu0 0.0
        %1681 = vmatpush1.msra.mxu0 0.0
        %1682 = vmatprep.subr.mxu0 0.0
        %1683 = vmatpush1.msra.mxu0 0.0
        %1684 = vmatprep.subr.mxu0 0.0
        %1685 = vmatpush1.msra.mxu0 0.0
        %1686 = vmatprep.subr.mxu0 0.0
        %1687 = vmatpush1.msra.mxu0 0.0
        %1688 = vmatprep.subr.mxu0 0.0
        %1689 = vmatpush1.msra.mxu0 0.0
        %1690 = vmatprep.subr.mxu0 0.0
        %1691 = vmatpush1.msra.mxu0 0.0
        %1692 = vmatprep.subr.mxu0 0.0
        %1693 = vmatpush1.msra.mxu0 0.0
        %1694 = vmatprep.subr.mxu0 0.0
        %1695 = vmatpush1.msra.mxu0 0.0
        %1696 = vmatprep.subr.mxu0 0.0
        %1697 = vmatpush1.msra.mxu0 0.0
        %1698 = vmatprep.subr.mxu0 0.0
        %1699 = vmatpush1.msra.mxu0 0.0
        %1700 = vmatprep.subr.mxu0 0.0
        %1701 = vmatpush1.msra.mxu0 0.0
        %1702 = vmatprep.subr.mxu0 0.0
        %1703 = vmatpush1.msra.mxu0 0.0
        %1704 = vmatprep.subr.mxu0 0.0
        %1705 = vmatpush1.msra.mxu0 0.0
        %1706 = vmatprep.subr.mxu0 0.0
        %1707 = vmatpush1.msra.mxu0 0.0
        %1708 = vmatprep.subr.mxu0 0.0
        %1709 = vmatpush1.msra.mxu0 0.0
        %1710 = vmatprep.subr.mxu0 0.0
        %1711 = vmatpush1.msra.mxu0 0.0
        %1712 = vmatprep.subr.mxu0 0.0
        %1713 = vmatpush1.msra.mxu0 0.0
        %1714 = vmatprep.subr.mxu0 0.0
        %1715 = vmatpush1.msra.mxu0 0.0
        %1716 = vmatprep.subr.mxu0 0.0
        %1717 = vmatpush1.msra.mxu0 0.0
        %1718 = vmatprep.subr.mxu0 0.0
        %1719 = vmatpush1.msra.mxu0 0.0
        %1720 = vmatprep.subr.mxu0 0.0
        %1721 = vmatpush1.msra.mxu0 0.0
        %1722 = vmatprep.subr.mxu0 0.0
        %1723 = vmatpush1.msra.mxu0 0.0
        %1724 = vmatprep.mubr.f32.mxu0 0.0
        %1725 = vmatmul.mubr.f32.gmra.mrb[0].mxu0 %v1652
        %v1726 = vpop.f32.mrb[0].mxu0
        %v1727 = vadd.f32 0.0, %v1726
        %v1728 = vpop.f32.mrb[0].mxu0
        %v1729 = vadd.f32 0.0, %v1728
        %1730 = vdwg.mxu0
        %v1732 = vsel %vm353, %v1635, 0
        %v1735 = vsel %vm357, %v1641, 0
        %v1738 = vsel %vm357, %v1642, 0
        %1740 = vmatprep.subr.mxu0 %v1738
        %1741 = vmatpush1.msra.mxu0 %v1735
        %1742 = vmatprep.subr.mxu0 0.0
        %1743 = vmatpush1.msra.mxu0 0.0
        %1744 = vmatprep.subr.mxu0 0.0
        %1745 = vmatpush1.msra.mxu0 0.0
        %1746 = vmatprep.subr.mxu0 0.0
        %1747 = vmatpush1.msra.mxu0 0.0
        %1748 = vmatprep.subr.mxu0 0.0
        %1749 = vmatpush1.msra.mxu0 0.0
        %1750 = vmatprep.subr.mxu0 0.0
        %1751 = vmatpush1.msra.mxu0 0.0
        %1752 = vmatprep.subr.mxu0 0.0
        %1753 = vmatpush1.msra.mxu0 0.0
        %1754 = vmatprep.subr.mxu0 0.0
        %1755 = vmatpush1.msra.mxu0 0.0
        %1756 = vmatprep.subr.mxu0 0.0
        %1757 = vmatpush1.msra.mxu0 0.0
        %1758 = vmatprep.subr.mxu0 0.0
        %1759 = vmatpush1.msra.mxu0 0.0
        %1760 = vmatprep.subr.mxu0 0.0
        %1761 = vmatpush1.msra.mxu0 0.0
        %1762 = vmatprep.subr.mxu0 0.0
        %1763 = vmatpush1.msra.mxu0 0.0
        %1764 = vmatprep.subr.mxu0 0.0
        %1765 = vmatpush1.msra.mxu0 0.0
        %1766 = vmatprep.subr.mxu0 0.0
        %1767 = vmatpush1.msra.mxu0 0.0
        %1768 = vmatprep.subr.mxu0 0.0
        %1769 = vmatpush1.msra.mxu0 0.0
        %1770 = vmatprep.subr.mxu0 0.0
        %1771 = vmatpush1.msra.mxu0 0.0
        %1772 = vmatprep.subr.mxu0 0.0
        %1773 = vmatpush1.msra.mxu0 0.0
        %1774 = vmatprep.subr.mxu0 0.0
        %1775 = vmatpush1.msra.mxu0 0.0
        %1776 = vmatprep.subr.mxu0 0.0
        %1777 = vmatpush1.msra.mxu0 0.0
        %1778 = vmatprep.subr.mxu0 0.0
        %1779 = vmatpush1.msra.mxu0 0.0
        %1780 = vmatprep.subr.mxu0 0.0
        %1781 = vmatpush1.msra.mxu0 0.0
        %1782 = vmatprep.subr.mxu0 0.0
        %1783 = vmatpush1.msra.mxu0 0.0
        %1784 = vmatprep.subr.mxu0 0.0
        %1785 = vmatpush1.msra.mxu0 0.0
        %1786 = vmatprep.subr.mxu0 0.0
        %1787 = vmatpush1.msra.mxu0 0.0
        %1788 = vmatprep.subr.mxu0 0.0
        %1789 = vmatpush1.msra.mxu0 0.0
        %1790 = vmatprep.subr.mxu0 0.0
        %1791 = vmatpush1.msra.mxu0 0.0
        %1792 = vmatprep.subr.mxu0 0.0
        %1793 = vmatpush1.msra.mxu0 0.0
        %1794 = vmatprep.subr.mxu0 0.0
        %1795 = vmatpush1.msra.mxu0 0.0
        %1796 = vmatprep.subr.mxu0 0.0
        %1797 = vmatpush1.msra.mxu0 0.0
        %1798 = vmatprep.subr.mxu0 0.0
        %1799 = vmatpush1.msra.mxu0 0.0
        %1800 = vmatprep.subr.mxu0 0.0
        %1801 = vmatpush1.msra.mxu0 0.0
        %1802 = vmatprep.subr.mxu0 0.0
        %1803 = vmatpush1.msra.mxu0 0.0
        %1804 = vmatprep.mubr.f32.mxu0 0.0
        %1805 = vmatmul.mubr.f32.gmra.mrb[0].mxu0 %v1732
        %v1806 = vpop.f32.mrb[0].mxu0
        %v1807 = vadd.f32 %v1727, %v1806
        %v1808 = vpop.f32.mrb[0].mxu0
        %v1809 = vadd.f32 %v1729, %v1808
        %1810 = vdwg.mxu0
        %v1811 = vlaneseq
        %v1812 = vshrl.u32 %v1811, 7
        %v1813 = vsub.s32 6, %v1812
        %v1814 = vrot.slane %v324, %v1813
        %v1815 = vlaneseq
        %v1816 = vshrl.u32 %v1815, 7
        %v1817 = vsub.s32 6, %v1816
        %v1818 = vrot.slane %v325, %v1817
        %v1819 = vmul.f32 %v1807, %v1814
        %v1820 = vmul.f32 %v1809, %v1818
        %v1821 = vadd.f32 %v1632, %v1819
        %v1822 = vadd.f32 %v1633, %v1820
        %s1823 = scalar_lea.vmem %s3, 32
        %v1824 = vld [vmem:[%s1823] sm:$0xf]
        %1825 = vrot.lane.b32.xlu0 %v328, 111
        %v1826 = vpop.permute.xlu0 %1825
        %1827 = vrot.lane.b32.xlu0 %v332, 111
        %v1828 = vpop.permute.xlu0 %1827
        %vm1829 = vcmp.lt.s32.totalorder %v339, 111
        %v1830 = vsel %vm1829, %v1826, %v1828
        %v1831 = vsel %vm1829, %v1828, %v1826
        %s1832 = scalar_lea.vmem %s4, 32
        %v1833 = vld [vmem:[%s1832] sm:$0xf]
        %1834 = vrot.lane.b32.xlu0 %v329, 111
        %v1835 = vpop.permute.xlu0 %1834
        %1836 = vrot.lane.b32.xlu0 %v345, 111
        %v1837 = vpop.permute.xlu0 %1836
        %v1838 = vsel %vm1829, %v1835, %v1837
        %v1839 = vsel %vm1829, %v1837, %v1835
        %v1841 = vsel %vm353, %v1833, 0
        %v1844 = vsel %vm357, %v1838, 0
        %v1847 = vsel %vm357, %v1839, 0
        %1849 = vmatprep.subr.mxu0 %v1847
        %1850 = vmatpush1.msra.mxu0 %v1844
        %1851 = vmatprep.subr.mxu0 0.0
        %1852 = vmatpush1.msra.mxu0 0.0
        %1853 = vmatprep.subr.mxu0 0.0
        %1854 = vmatpush1.msra.mxu0 0.0
        %1855 = vmatprep.subr.mxu0 0.0
        %1856 = vmatpush1.msra.mxu0 0.0
        %1857 = vmatprep.subr.mxu0 0.0
        %1858 = vmatpush1.msra.mxu0 0.0
        %1859 = vmatprep.subr.mxu0 0.0
        %1860 = vmatpush1.msra.mxu0 0.0
        %1861 = vmatprep.subr.mxu0 0.0
        %1862 = vmatpush1.msra.mxu0 0.0
        %1863 = vmatprep.subr.mxu0 0.0
        %1864 = vmatpush1.msra.mxu0 0.0
        %1865 = vmatprep.subr.mxu0 0.0
        %1866 = vmatpush1.msra.mxu0 0.0
        %1867 = vmatprep.subr.mxu0 0.0
        %1868 = vmatpush1.msra.mxu0 0.0
        %1869 = vmatprep.subr.mxu0 0.0
        %1870 = vmatpush1.msra.mxu0 0.0
        %1871 = vmatprep.subr.mxu0 0.0
        %1872 = vmatpush1.msra.mxu0 0.0
        %1873 = vmatprep.subr.mxu0 0.0
        %1874 = vmatpush1.msra.mxu0 0.0
        %1875 = vmatprep.subr.mxu0 0.0
        %1876 = vmatpush1.msra.mxu0 0.0
        %1877 = vmatprep.subr.mxu0 0.0
        %1878 = vmatpush1.msra.mxu0 0.0
        %1879 = vmatprep.subr.mxu0 0.0
        %1880 = vmatpush1.msra.mxu0 0.0
        %1881 = vmatprep.subr.mxu0 0.0
        %1882 = vmatpush1.msra.mxu0 0.0
        %1883 = vmatprep.subr.mxu0 0.0
        %1884 = vmatpush1.msra.mxu0 0.0
        %1885 = vmatprep.subr.mxu0 0.0
        %1886 = vmatpush1.msra.mxu0 0.0
        %1887 = vmatprep.subr.mxu0 0.0
        %1888 = vmatpush1.msra.mxu0 0.0
        %1889 = vmatprep.subr.mxu0 0.0
        %1890 = vmatpush1.msra.mxu0 0.0
        %1891 = vmatprep.subr.mxu0 0.0
        %1892 = vmatpush1.msra.mxu0 0.0
        %1893 = vmatprep.subr.mxu0 0.0
        %1894 = vmatpush1.msra.mxu0 0.0
        %1895 = vmatprep.subr.mxu0 0.0
        %1896 = vmatpush1.msra.mxu0 0.0
        %1897 = vmatprep.subr.mxu0 0.0
        %1898 = vmatpush1.msra.mxu0 0.0
        %1899 = vmatprep.subr.mxu0 0.0
        %1900 = vmatpush1.msra.mxu0 0.0
        %1901 = vmatprep.subr.mxu0 0.0
        %1902 = vmatpush1.msra.mxu0 0.0
        %1903 = vmatprep.subr.mxu0 0.0
        %1904 = vmatpush1.msra.mxu0 0.0
        %1905 = vmatprep.subr.mxu0 0.0
        %1906 = vmatpush1.msra.mxu0 0.0
        %1907 = vmatprep.subr.mxu0 0.0
        %1908 = vmatpush1.msra.mxu0 0.0
        %1909 = vmatprep.subr.mxu0 0.0
        %1910 = vmatpush1.msra.mxu0 0.0
        %1911 = vmatprep.subr.mxu0 0.0
        %1912 = vmatpush1.msra.mxu0 0.0
        %1913 = vmatprep.mubr.f32.mxu0 0.0
        %1914 = vmatmul.mubr.f32.gmra.mrb[0].mxu0 %v1841
        %v1915 = vpop.f32.mrb[0].mxu0
        %v1916 = vadd.f32 0.0, %v1915
        %v1917 = vpop.f32.mrb[0].mxu0
        %v1918 = vadd.f32 0.0, %v1917
        %1919 = vdwg.mxu0
        %v1921 = vsel %vm353, %v1824, 0
        %v1924 = vsel %vm357, %v1830, 0
        %v1927 = vsel %vm357, %v1831, 0
        %1929 = vmatprep.subr.mxu0 %v1927
        %1930 = vmatpush1.msra.mxu0 %v1924
        %1931 = vmatprep.subr.mxu0 0.0
        %1932 = vmatpush1.msra.mxu0 0.0
        %1933 = vmatprep.subr.mxu0 0.0
        %1934 = vmatpush1.msra.mxu0 0.0
        %1935 = vmatprep.subr.mxu0 0.0
        %1936 = vmatpush1.msra.mxu0 0.0
        %1937 = vmatprep.subr.mxu0 0.0
        %1938 = vmatpush1.msra.mxu0 0.0
        %1939 = vmatprep.subr.mxu0 0.0
        %1940 = vmatpush1.msra.mxu0 0.0
        %1941 = vmatprep.subr.mxu0 0.0
        %1942 = vmatpush1.msra.mxu0 0.0
        %1943 = vmatprep.subr.mxu0 0.0
        %1944 = vmatpush1.msra.mxu0 0.0
        %1945 = vmatprep.subr.mxu0 0.0
        %1946 = vmatpush1.msra.mxu0 0.0
        %1947 = vmatprep.subr.mxu0 0.0
        %1948 = vmatpush1.msra.mxu0 0.0
        %1949 = vmatprep.subr.mxu0 0.0
        %1950 = vmatpush1.msra.mxu0 0.0
        %1951 = vmatprep.subr.mxu0 0.0
        %1952 = vmatpush1.msra.mxu0 0.0
        %1953 = vmatprep.subr.mxu0 0.0
        %1954 = vmatpush1.msra.mxu0 0.0
        %1955 = vmatprep.subr.mxu0 0.0
        %1956 = vmatpush1.msra.mxu0 0.0
        %1957 = vmatprep.subr.mxu0 0.0
        %1958 = vmatpush1.msra.mxu0 0.0
        %1959 = vmatprep.subr.mxu0 0.0
        %1960 = vmatpush1.msra.mxu0 0.0
        %1961 = vmatprep.subr.mxu0 0.0
        %1962 = vmatpush1.msra.mxu0 0.0
        %1963 = vmatprep.subr.mxu0 0.0
        %1964 = vmatpush1.msra.mxu0 0.0
        %1965 = vmatprep.subr.mxu0 0.0
        %1966 = vmatpush1.msra.mxu0 0.0
        %1967 = vmatprep.subr.mxu0 0.0
        %1968 = vmatpush1.msra.mxu0 0.0
        %1969 = vmatprep.subr.mxu0 0.0
        %1970 = vmatpush1.msra.mxu0 0.0
        %1971 = vmatprep.subr.mxu0 0.0
        %1972 = vmatpush1.msra.mxu0 0.0
        %1973 = vmatprep.subr.mxu0 0.0
        %1974 = vmatpush1.msra.mxu0 0.0
        %1975 = vmatprep.subr.mxu0 0.0
        %1976 = vmatpush1.msra.mxu0 0.0
        %1977 = vmatprep.subr.mxu0 0.0
        %1978 = vmatpush1.msra.mxu0 0.0
        %1979 = vmatprep.subr.mxu0 0.0
        %1980 = vmatpush1.msra.mxu0 0.0
        %1981 = vmatprep.subr.mxu0 0.0
        %1982 = vmatpush1.msra.mxu0 0.0
        %1983 = vmatprep.subr.mxu0 0.0
        %1984 = vmatpush1.msra.mxu0 0.0
        %1985 = vmatprep.subr.mxu0 0.0
        %1986 = vmatpush1.msra.mxu0 0.0
        %1987 = vmatprep.subr.mxu0 0.0
        %1988 = vmatpush1.msra.mxu0 0.0
        %1989 = vmatprep.subr.mxu0 0.0
        %1990 = vmatpush1.msra.mxu0 0.0
        %1991 = vmatprep.subr.mxu0 0.0
        %1992 = vmatpush1.msra.mxu0 0.0
        %1993 = vmatprep.mubr.f32.mxu0 0.0
        %1994 = vmatmul.mubr.f32.gmra.mrb[0].mxu0 %v1921
        %v1995 = vpop.f32.mrb[0].mxu0
        %v1996 = vadd.f32 %v1916, %v1995
        %v1997 = vpop.f32.mrb[0].mxu0
        %v1998 = vadd.f32 %v1918, %v1997
        %1999 = vdwg.mxu0
        %v2000 = vlaneseq
        %v2001 = vshrl.u32 %v2000, 7
        %v2002 = vsub.s32 7, %v2001
        %v2003 = vrot.slane %v324, %v2002
        %v2004 = vlaneseq
        %v2005 = vshrl.u32 %v2004, 7
        %v2006 = vsub.s32 7, %v2005
        %v2007 = vrot.slane %v325, %v2006
        %v2008 = vmul.f32 %v1996, %v2003
        %v2009 = vmul.f32 %v1998, %v2007
        %v2010 = vadd.f32 %v1821, %v2008
        %v2011 = vadd.f32 %v1822, %v2009
        %2013 = vset.pattern.permute.xlu0 0
        %2014 = vperm.xlu0 %2013, %v326
        %v2015 = vpop.permute.xlu0 %2014
        %v2017 = vadd.f32 %v2010, %v2015
        %v2018 = vadd.f32 %v2011, %v2015
        %v2019 = vmax.f32 %v2017, 0.0
        %v2020 = vmax.f32 %v2018, 0.0
        %2021 = vrot.lane.b32.xlu0 %v2019, 17
        %v2022 = vpop.permute.xlu0 %2021
        %2023 = vrot.lane.b32.xlu0 %v2020, 17
        %v2024 = vpop.permute.xlu0 %2023
        %v2025 = vsel %vm340, %v2022, %v2024
        %v2026 = vsel %vm340, %v2024, %v2022
        %v2027 = vmul.f32 %v2026, %v518
        %v2028 = vmul.f32 %v2025, %v522
        %v2029 = vld [vmem:[%s6] sm:$0xff]
        %2030 = vrot.lane.b32.xlu0 %v2019, 16
        %v2031 = vpop.permute.xlu0 %2030
        %2032 = vrot.lane.b32.xlu0 %v2020, 16
        %v2033 = vpop.permute.xlu0 %2032
        %v2034 = vsel %vm533, %v2031, %v2033
        %v2035 = vsel %vm533, %v2033, %v2031
        %v2036 = vmul.f32 %v2035, %v707
        %v2037 = vmul.f32 %v2034, %v711
        %s2038 = scalar_lea.vmem %s6, 8
        %v2039 = vld [vmem:[%s2038] sm:$0xff]
        %v2041 = vsel %vm353, %v2039, 0
        %v2044 = vsel %vm357, %v2036, 0
        %v2047 = vsel %vm357, %v2037, 0
        %2049 = vmatprep.subr.mxu0 %v2047
        %2050 = vmatpush1.msra.mxu0 %v2044
        %2051 = vmatprep.subr.mxu0 0.0
        %2052 = vmatpush1.msra.mxu0 0.0
        %2053 = vmatprep.subr.mxu0 0.0
        %2054 = vmatpush1.msra.mxu0 0.0
        %2055 = vmatprep.subr.mxu0 0.0
        %2056 = vmatpush1.msra.mxu0 0.0
        %2057 = vmatprep.subr.mxu0 0.0
        %2058 = vmatpush1.msra.mxu0 0.0
        %2059 = vmatprep.subr.mxu0 0.0
        %2060 = vmatpush1.msra.mxu0 0.0
        %2061 = vmatprep.subr.mxu0 0.0
        %2062 = vmatpush1.msra.mxu0 0.0
        %2063 = vmatprep.subr.mxu0 0.0
        %2064 = vmatpush1.msra.mxu0 0.0
        %2065 = vmatprep.subr.mxu0 0.0
        %2066 = vmatpush1.msra.mxu0 0.0
        %2067 = vmatprep.subr.mxu0 0.0
        %2068 = vmatpush1.msra.mxu0 0.0
        %2069 = vmatprep.subr.mxu0 0.0
        %2070 = vmatpush1.msra.mxu0 0.0
        %2071 = vmatprep.subr.mxu0 0.0
        %2072 = vmatpush1.msra.mxu0 0.0
        %2073 = vmatprep.subr.mxu0 0.0
        %2074 = vmatpush1.msra.mxu0 0.0
        %2075 = vmatprep.subr.mxu0 0.0
        %2076 = vmatpush1.msra.mxu0 0.0
        %2077 = vmatprep.subr.mxu0 0.0
        %2078 = vmatpush1.msra.mxu0 0.0
        %2079 = vmatprep.subr.mxu0 0.0
        %2080 = vmatpush1.msra.mxu0 0.0
        %2081 = vmatprep.subr.mxu0 0.0
        %2082 = vmatpush1.msra.mxu0 0.0
        %2083 = vmatprep.subr.mxu0 0.0
        %2084 = vmatpush1.msra.mxu0 0.0
        %2085 = vmatprep.subr.mxu0 0.0
        %2086 = vmatpush1.msra.mxu0 0.0
        %2087 = vmatprep.subr.mxu0 0.0
        %2088 = vmatpush1.msra.mxu0 0.0
        %2089 = vmatprep.subr.mxu0 0.0
        %2090 = vmatpush1.msra.mxu0 0.0
        %2091 = vmatprep.subr.mxu0 0.0
        %2092 = vmatpush1.msra.mxu0 0.0
        %2093 = vmatprep.subr.mxu0 0.0
        %2094 = vmatpush1.msra.mxu0 0.0
        %2095 = vmatprep.subr.mxu0 0.0
        %2096 = vmatpush1.msra.mxu0 0.0
        %2097 = vmatprep.subr.mxu0 0.0
        %2098 = vmatpush1.msra.mxu0 0.0
        %2099 = vmatprep.subr.mxu0 0.0
        %2100 = vmatpush1.msra.mxu0 0.0
        %2101 = vmatprep.subr.mxu0 0.0
        %2102 = vmatpush1.msra.mxu0 0.0
        %2103 = vmatprep.subr.mxu0 0.0
        %2104 = vmatpush1.msra.mxu0 0.0
        %2105 = vmatprep.subr.mxu0 0.0
        %2106 = vmatpush1.msra.mxu0 0.0
        %2107 = vmatprep.subr.mxu0 0.0
        %2108 = vmatpush1.msra.mxu0 0.0
        %2109 = vmatprep.subr.mxu0 0.0
        %2110 = vmatpush1.msra.mxu0 0.0
        %2111 = vmatprep.subr.mxu0 0.0
        %2112 = vmatpush1.msra.mxu0 0.0
        %2113 = vmatprep.mubr.f32.mxu0 0.0
        %2114 = vmatmul.mubr.f32.gmra.mrb[0].mxu0 %v2041
        %v2115 = vpop.f32.mrb[0].mxu0
        %v2116 = vadd.f32 0.0, %v2115
        %v2117 = vpop.f32.mrb[0].mxu0
        %v2118 = vadd.f32 0.0, %v2117
        %2119 = vdwg.mxu0
        %v2121 = vsel %vm353, %v2029, 0
        %v2124 = vsel %vm357, %v2027, 0
        %v2127 = vsel %vm357, %v2028, 0
        %2129 = vmatprep.subr.mxu0 %v2127
        %2130 = vmatpush1.msra.mxu0 %v2124
        %2131 = vmatprep.subr.mxu0 0.0
        %2132 = vmatpush1.msra.mxu0 0.0
        %2133 = vmatprep.subr.mxu0 0.0
        %2134 = vmatpush1.msra.mxu0 0.0
        %2135 = vmatprep.subr.mxu0 0.0
        %2136 = vmatpush1.msra.mxu0 0.0
        %2137 = vmatprep.subr.mxu0 0.0
        %2138 = vmatpush1.msra.mxu0 0.0
        %2139 = vmatprep.subr.mxu0 0.0
        %2140 = vmatpush1.msra.mxu0 0.0
        %2141 = vmatprep.subr.mxu0 0.0
        %2142 = vmatpush1.msra.mxu0 0.0
        %2143 = vmatprep.subr.mxu0 0.0
        %2144 = vmatpush1.msra.mxu0 0.0
        %2145 = vmatprep.subr.mxu0 0.0
        %2146 = vmatpush1.msra.mxu0 0.0
        %2147 = vmatprep.subr.mxu0 0.0
        %2148 = vmatpush1.msra.mxu0 0.0
        %2149 = vmatprep.subr.mxu0 0.0
        %2150 = vmatpush1.msra.mxu0 0.0
        %2151 = vmatprep.subr.mxu0 0.0
        %2152 = vmatpush1.msra.mxu0 0.0
        %2153 = vmatprep.subr.mxu0 0.0
        %2154 = vmatpush1.msra.mxu0 0.0
        %2155 = vmatprep.subr.mxu0 0.0
        %2156 = vmatpush1.msra.mxu0 0.0
        %2157 = vmatprep.subr.mxu0 0.0
        %2158 = vmatpush1.msra.mxu0 0.0
        %2159 = vmatprep.subr.mxu0 0.0
        %2160 = vmatpush1.msra.mxu0 0.0
        %2161 = vmatprep.subr.mxu0 0.0
        %2162 = vmatpush1.msra.mxu0 0.0
        %2163 = vmatprep.subr.mxu0 0.0
        %2164 = vmatpush1.msra.mxu0 0.0
        %2165 = vmatprep.subr.mxu0 0.0
        %2166 = vmatpush1.msra.mxu0 0.0
        %2167 = vmatprep.subr.mxu0 0.0
        %2168 = vmatpush1.msra.mxu0 0.0
        %2169 = vmatprep.subr.mxu0 0.0
        %2170 = vmatpush1.msra.mxu0 0.0
        %2171 = vmatprep.subr.mxu0 0.0
        %2172 = vmatpush1.msra.mxu0 0.0
        %2173 = vmatprep.subr.mxu0 0.0
        %2174 = vmatpush1.msra.mxu0 0.0
        %2175 = vmatprep.subr.mxu0 0.0
        %2176 = vmatpush1.msra.mxu0 0.0
        %2177 = vmatprep.subr.mxu0 0.0
        %2178 = vmatpush1.msra.mxu0 0.0
        %2179 = vmatprep.subr.mxu0 0.0
        %2180 = vmatpush1.msra.mxu0 0.0
        %2181 = vmatprep.subr.mxu0 0.0
        %2182 = vmatpush1.msra.mxu0 0.0
        %2183 = vmatprep.subr.mxu0 0.0
        %2184 = vmatpush1.msra.mxu0 0.0
        %2185 = vmatprep.subr.mxu0 0.0
        %2186 = vmatpush1.msra.mxu0 0.0
        %2187 = vmatprep.subr.mxu0 0.0
        %2188 = vmatpush1.msra.mxu0 0.0
        %2189 = vmatprep.subr.mxu0 0.0
        %2190 = vmatpush1.msra.mxu0 0.0
        %2191 = vmatprep.subr.mxu0 0.0
        %2192 = vmatpush1.msra.mxu0 0.0
        %2193 = vmatprep.mubr.f32.mxu0 0.0
        %2194 = vmatmul.mubr.f32.gmra.mrb[0].mxu0 %v2121
        %v2195 = vpop.f32.mrb[0].mxu0
        %v2196 = vadd.f32 %v2116, %v2195
        %v2197 = vpop.f32.mrb[0].mxu0
        %v2198 = vadd.f32 %v2118, %v2197
        %2199 = vdwg.mxu0
        %2200 = vrot.lane.b32.xlu0 %v2019, 15
        %v2201 = vpop.permute.xlu0 %2200
        %2202 = vrot.lane.b32.xlu0 %v2020, 15
        %v2203 = vpop.permute.xlu0 %2202
        %v2204 = vsel %vm722, %v2201, %v2203
        %v2205 = vsel %vm722, %v2203, %v2201
        %v2206 = vmul.f32 %v2205, %v896
        %v2207 = vmul.f32 %v2204, %v900
        %s2208 = scalar_lea.vmem %s6, 16
        %v2209 = vld [vmem:[%s2208] sm:$0xff]
        %v2211 = vsel %vm353, %v2209, 0
        %v2214 = vsel %vm357, %v2206, 0
        %v2217 = vsel %vm357, %v2207, 0
        %2219 = vmatprep.subr.mxu0 %v2217
        %2220 = vmatpush1.msra.mxu0 %v2214
        %2221 = vmatprep.subr.mxu0 0.0
        %2222 = vmatpush1.msra.mxu0 0.0
        %2223 = vmatprep.subr.mxu0 0.0
        %2224 = vmatpush1.msra.mxu0 0.0
        %2225 = vmatprep.subr.mxu0 0.0
        %2226 = vmatpush1.msra.mxu0 0.0
        %2227 = vmatprep.subr.mxu0 0.0
        %2228 = vmatpush1.msra.mxu0 0.0
        %2229 = vmatprep.subr.mxu0 0.0
        %2230 = vmatpush1.msra.mxu0 0.0
        %2231 = vmatprep.subr.mxu0 0.0
        %2232 = vmatpush1.msra.mxu0 0.0
        %2233 = vmatprep.subr.mxu0 0.0
        %2234 = vmatpush1.msra.mxu0 0.0
        %2235 = vmatprep.subr.mxu0 0.0
        %2236 = vmatpush1.msra.mxu0 0.0
        %2237 = vmatprep.subr.mxu0 0.0
        %2238 = vmatpush1.msra.mxu0 0.0
        %2239 = vmatprep.subr.mxu0 0.0
        %2240 = vmatpush1.msra.mxu0 0.0
        %2241 = vmatprep.subr.mxu0 0.0
        %2242 = vmatpush1.msra.mxu0 0.0
        %2243 = vmatprep.subr.mxu0 0.0
        %2244 = vmatpush1.msra.mxu0 0.0
        %2245 = vmatprep.subr.mxu0 0.0
        %2246 = vmatpush1.msra.mxu0 0.0
        %2247 = vmatprep.subr.mxu0 0.0
        %2248 = vmatpush1.msra.mxu0 0.0
        %2249 = vmatprep.subr.mxu0 0.0
        %2250 = vmatpush1.msra.mxu0 0.0
        %2251 = vmatprep.subr.mxu0 0.0
        %2252 = vmatpush1.msra.mxu0 0.0
        %2253 = vmatprep.subr.mxu0 0.0
        %2254 = vmatpush1.msra.mxu0 0.0
        %2255 = vmatprep.subr.mxu0 0.0
        %2256 = vmatpush1.msra.mxu0 0.0
        %2257 = vmatprep.subr.mxu0 0.0
        %2258 = vmatpush1.msra.mxu0 0.0
        %2259 = vmatprep.subr.mxu0 0.0
        %2260 = vmatpush1.msra.mxu0 0.0
        %2261 = vmatprep.subr.mxu0 0.0
        %2262 = vmatpush1.msra.mxu0 0.0
        %2263 = vmatprep.subr.mxu0 0.0
        %2264 = vmatpush1.msra.mxu0 0.0
        %2265 = vmatprep.subr.mxu0 0.0
        %2266 = vmatpush1.msra.mxu0 0.0
        %2267 = vmatprep.subr.mxu0 0.0
        %2268 = vmatpush1.msra.mxu0 0.0
        %2269 = vmatprep.subr.mxu0 0.0
        %2270 = vmatpush1.msra.mxu0 0.0
        %2271 = vmatprep.subr.mxu0 0.0
        %2272 = vmatpush1.msra.mxu0 0.0
        %2273 = vmatprep.subr.mxu0 0.0
        %2274 = vmatpush1.msra.mxu0 0.0
        %2275 = vmatprep.subr.mxu0 0.0
        %2276 = vmatpush1.msra.mxu0 0.0
        %2277 = vmatprep.subr.mxu0 0.0
        %2278 = vmatpush1.msra.mxu0 0.0
        %2279 = vmatprep.subr.mxu0 0.0
        %2280 = vmatpush1.msra.mxu0 0.0
        %2281 = vmatprep.subr.mxu0 0.0
        %2282 = vmatpush1.msra.mxu0 0.0
        %2283 = vmatprep.mubr.f32.mxu0 0.0
        %2284 = vmatmul.mubr.f32.gmra.mrb[0].mxu0 %v2211
        %v2285 = vpop.f32.mrb[0].mxu0
        %v2286 = vadd.f32 0.0, %v2285
        %v2287 = vpop.f32.mrb[0].mxu0
        %v2288 = vadd.f32 0.0, %v2287
        %2289 = vdwg.mxu0
        %v2290 = vadd.f32 %v2196, %v2286
        %v2291 = vadd.f32 %v2198, %v2288
        %2292 = vrot.lane.b32.xlu0 %v2019, 1
        %v2293 = vpop.permute.xlu0 %2292
        %2294 = vrot.lane.b32.xlu0 %v2020, 1
        %v2295 = vpop.permute.xlu0 %2294
        %v2296 = vsel %vm911, %v2293, %v2295
        %v2297 = vsel %vm911, %v2295, %v2293
        %v2298 = vmul.f32 %v2297, %v1085
        %v2299 = vmul.f32 %v2296, %v1089
        %s2300 = scalar_lea.vmem %s6, 24
        %v2301 = vld [vmem:[%s2300] sm:$0xff]
        %v2303 = vsel %vm353, %v2301, 0
        %v2306 = vsel %vm357, %v2298, 0
        %v2309 = vsel %vm357, %v2299, 0
        %2311 = vmatprep.subr.mxu0 %v2309
        %2312 = vmatpush1.msra.mxu0 %v2306
        %2313 = vmatprep.subr.mxu0 0.0
        %2314 = vmatpush1.msra.mxu0 0.0
        %2315 = vmatprep.subr.mxu0 0.0
        %2316 = vmatpush1.msra.mxu0 0.0
        %2317 = vmatprep.subr.mxu0 0.0
        %2318 = vmatpush1.msra.mxu0 0.0
        %2319 = vmatprep.subr.mxu0 0.0
        %2320 = vmatpush1.msra.mxu0 0.0
        %2321 = vmatprep.subr.mxu0 0.0
        %2322 = vmatpush1.msra.mxu0 0.0
        %2323 = vmatprep.subr.mxu0 0.0
        %2324 = vmatpush1.msra.mxu0 0.0
        %2325 = vmatprep.subr.mxu0 0.0
        %2326 = vmatpush1.msra.mxu0 0.0
        %2327 = vmatprep.subr.mxu0 0.0
        %2328 = vmatpush1.msra.mxu0 0.0
        %2329 = vmatprep.subr.mxu0 0.0
        %2330 = vmatpush1.msra.mxu0 0.0
        %2331 = vmatprep.subr.mxu0 0.0
        %2332 = vmatpush1.msra.mxu0 0.0
        %2333 = vmatprep.subr.mxu0 0.0
        %2334 = vmatpush1.msra.mxu0 0.0
        %2335 = vmatprep.subr.mxu0 0.0
        %2336 = vmatpush1.msra.mxu0 0.0
        %2337 = vmatprep.subr.mxu0 0.0
        %2338 = vmatpush1.msra.mxu0 0.0
        %2339 = vmatprep.subr.mxu0 0.0
        %2340 = vmatpush1.msra.mxu0 0.0
        %2341 = vmatprep.subr.mxu0 0.0
        %2342 = vmatpush1.msra.mxu0 0.0
        %2343 = vmatprep.subr.mxu0 0.0
        %2344 = vmatpush1.msra.mxu0 0.0
        %2345 = vmatprep.subr.mxu0 0.0
        %2346 = vmatpush1.msra.mxu0 0.0
        %2347 = vmatprep.subr.mxu0 0.0
        %2348 = vmatpush1.msra.mxu0 0.0
        %2349 = vmatprep.subr.mxu0 0.0
        %2350 = vmatpush1.msra.mxu0 0.0
        %2351 = vmatprep.subr.mxu0 0.0
        %2352 = vmatpush1.msra.mxu0 0.0
        %2353 = vmatprep.subr.mxu0 0.0
        %2354 = vmatpush1.msra.mxu0 0.0
        %2355 = vmatprep.subr.mxu0 0.0
        %2356 = vmatpush1.msra.mxu0 0.0
        %2357 = vmatprep.subr.mxu0 0.0
        %2358 = vmatpush1.msra.mxu0 0.0
        %2359 = vmatprep.subr.mxu0 0.0
        %2360 = vmatpush1.msra.mxu0 0.0
        %2361 = vmatprep.subr.mxu0 0.0
        %2362 = vmatpush1.msra.mxu0 0.0
        %2363 = vmatprep.subr.mxu0 0.0
        %2364 = vmatpush1.msra.mxu0 0.0
        %2365 = vmatprep.subr.mxu0 0.0
        %2366 = vmatpush1.msra.mxu0 0.0
        %2367 = vmatprep.subr.mxu0 0.0
        %2368 = vmatpush1.msra.mxu0 0.0
        %2369 = vmatprep.subr.mxu0 0.0
        %2370 = vmatpush1.msra.mxu0 0.0
        %2371 = vmatprep.subr.mxu0 0.0
        %2372 = vmatpush1.msra.mxu0 0.0
        %2373 = vmatprep.subr.mxu0 0.0
        %2374 = vmatpush1.msra.mxu0 0.0
        %2375 = vmatprep.mubr.f32.mxu0 0.0
        %2376 = vmatmul.mubr.f32.gmra.mrb[0].mxu0 %v2303
        %v2377 = vpop.f32.mrb[0].mxu0
        %v2378 = vadd.f32 0.0, %v2377
        %v2379 = vpop.f32.mrb[0].mxu0
        %v2380 = vadd.f32 0.0, %v2379
        %2381 = vdwg.mxu0
        %v2382 = vadd.f32 %v2290, %v2378
        %v2383 = vadd.f32 %v2291, %v2380
        %s2384 = scalar_lea.vmem %s6, 32
        %v2385 = vld [vmem:[%s2384] sm:$0xff]
        %v2387 = vsel %vm353, %v2385, 0
        %v2390 = vsel %vm357, %v2019, 0
        %v2393 = vsel %vm357, %v2020, 0
        %2395 = vmatprep.subr.mxu0 %v2393
        %2396 = vmatpush1.msra.mxu0 %v2390
        %2397 = vmatprep.subr.mxu0 0.0
        %2398 = vmatpush1.msra.mxu0 0.0
        %2399 = vmatprep.subr.mxu0 0.0
        %2400 = vmatpush1.msra.mxu0 0.0
        %2401 = vmatprep.subr.mxu0 0.0
        %2402 = vmatpush1.msra.mxu0 0.0
        %2403 = vmatprep.subr.mxu0 0.0
        %2404 = vmatpush1.msra.mxu0 0.0
        %2405 = vmatprep.subr.mxu0 0.0
        %2406 = vmatpush1.msra.mxu0 0.0
        %2407 = vmatprep.subr.mxu0 0.0
        %2408 = vmatpush1.msra.mxu0 0.0
        %2409 = vmatprep.subr.mxu0 0.0
        %2410 = vmatpush1.msra.mxu0 0.0
        %2411 = vmatprep.subr.mxu0 0.0
        %2412 = vmatpush1.msra.mxu0 0.0
        %2413 = vmatprep.subr.mxu0 0.0
        %2414 = vmatpush1.msra.mxu0 0.0
        %2415 = vmatprep.subr.mxu0 0.0
        %2416 = vmatpush1.msra.mxu0 0.0
        %2417 = vmatprep.subr.mxu0 0.0
        %2418 = vmatpush1.msra.mxu0 0.0
        %2419 = vmatprep.subr.mxu0 0.0
        %2420 = vmatpush1.msra.mxu0 0.0
        %2421 = vmatprep.subr.mxu0 0.0
        %2422 = vmatpush1.msra.mxu0 0.0
        %2423 = vmatprep.subr.mxu0 0.0
        %2424 = vmatpush1.msra.mxu0 0.0
        %2425 = vmatprep.subr.mxu0 0.0
        %2426 = vmatpush1.msra.mxu0 0.0
        %2427 = vmatprep.subr.mxu0 0.0
        %2428 = vmatpush1.msra.mxu0 0.0
        %2429 = vmatprep.subr.mxu0 0.0
        %2430 = vmatpush1.msra.mxu0 0.0
        %2431 = vmatprep.subr.mxu0 0.0
        %2432 = vmatpush1.msra.mxu0 0.0
        %2433 = vmatprep.subr.mxu0 0.0
        %2434 = vmatpush1.msra.mxu0 0.0
        %2435 = vmatprep.subr.mxu0 0.0
        %2436 = vmatpush1.msra.mxu0 0.0
        %2437 = vmatprep.subr.mxu0 0.0
        %2438 = vmatpush1.msra.mxu0 0.0
        %2439 = vmatprep.subr.mxu0 0.0
        %2440 = vmatpush1.msra.mxu0 0.0
        %2441 = vmatprep.subr.mxu0 0.0
        %2442 = vmatpush1.msra.mxu0 0.0
        %2443 = vmatprep.subr.mxu0 0.0
        %2444 = vmatpush1.msra.mxu0 0.0
        %2445 = vmatprep.subr.mxu0 0.0
        %2446 = vmatpush1.msra.mxu0 0.0
        %2447 = vmatprep.subr.mxu0 0.0
        %2448 = vmatpush1.msra.mxu0 0.0
        %2449 = vmatprep.subr.mxu0 0.0
        %2450 = vmatpush1.msra.mxu0 0.0
        %2451 = vmatprep.subr.mxu0 0.0
        %2452 = vmatpush1.msra.mxu0 0.0
        %2453 = vmatprep.subr.mxu0 0.0
        %2454 = vmatpush1.msra.mxu0 0.0
        %2455 = vmatprep.subr.mxu0 0.0
        %2456 = vmatpush1.msra.mxu0 0.0
        %2457 = vmatprep.subr.mxu0 0.0
        %2458 = vmatpush1.msra.mxu0 0.0
        %2459 = vmatprep.mubr.f32.mxu0 0.0
        %2460 = vmatmul.mubr.f32.gmra.mrb[0].mxu0 %v2387
        %v2461 = vpop.f32.mrb[0].mxu0
        %v2462 = vadd.f32 0.0, %v2461
        %v2463 = vpop.f32.mrb[0].mxu0
        %v2464 = vadd.f32 0.0, %v2463
        %2465 = vdwg.mxu0
        %v2466 = vadd.f32 %v2382, %v2462
        %v2467 = vadd.f32 %v2383, %v2464
        %2468 = vrot.lane.b32.xlu0 %v2019, 127
        %v2469 = vpop.permute.xlu0 %2468
        %2470 = vrot.lane.b32.xlu0 %v2020, 127
        %v2471 = vpop.permute.xlu0 %2470
        %v2472 = vsel %vm1262, %v2469, %v2471
        %v2473 = vsel %vm1262, %v2471, %v2469
        %v2474 = vmul.f32 %v2472, %v1436
        %v2475 = vmul.f32 %v2473, %v1440
        %s2476 = scalar_lea.vmem %s6, 40
        %v2477 = vld [vmem:[%s2476] sm:$0xff]
        %v2479 = vsel %vm353, %v2477, 0
        %v2482 = vsel %vm357, %v2474, 0
        %v2485 = vsel %vm357, %v2475, 0
        %2487 = vmatprep.subr.mxu0 %v2485
        %2488 = vmatpush1.msra.mxu0 %v2482
        %2489 = vmatprep.subr.mxu0 0.0
        %2490 = vmatpush1.msra.mxu0 0.0
        %2491 = vmatprep.subr.mxu0 0.0
        %2492 = vmatpush1.msra.mxu0 0.0
        %2493 = vmatprep.subr.mxu0 0.0
        %2494 = vmatpush1.msra.mxu0 0.0
        %2495 = vmatprep.subr.mxu0 0.0
        %2496 = vmatpush1.msra.mxu0 0.0
        %2497 = vmatprep.subr.mxu0 0.0
        %2498 = vmatpush1.msra.mxu0 0.0
        %2499 = vmatprep.subr.mxu0 0.0
        %2500 = vmatpush1.msra.mxu0 0.0
        %2501 = vmatprep.subr.mxu0 0.0
        %2502 = vmatpush1.msra.mxu0 0.0
        %2503 = vmatprep.subr.mxu0 0.0
        %2504 = vmatpush1.msra.mxu0 0.0
        %2505 = vmatprep.subr.mxu0 0.0
        %2506 = vmatpush1.msra.mxu0 0.0
        %2507 = vmatprep.subr.mxu0 0.0
        %2508 = vmatpush1.msra.mxu0 0.0
        %2509 = vmatprep.subr.mxu0 0.0
        %2510 = vmatpush1.msra.mxu0 0.0
        %2511 = vmatprep.subr.mxu0 0.0
        %2512 = vmatpush1.msra.mxu0 0.0
        %2513 = vmatprep.subr.mxu0 0.0
        %2514 = vmatpush1.msra.mxu0 0.0
        %2515 = vmatprep.subr.mxu0 0.0
        %2516 = vmatpush1.msra.mxu0 0.0
        %2517 = vmatprep.subr.mxu0 0.0
        %2518 = vmatpush1.msra.mxu0 0.0
        %2519 = vmatprep.subr.mxu0 0.0
        %2520 = vmatpush1.msra.mxu0 0.0
        %2521 = vmatprep.subr.mxu0 0.0
        %2522 = vmatpush1.msra.mxu0 0.0
        %2523 = vmatprep.subr.mxu0 0.0
        %2524 = vmatpush1.msra.mxu0 0.0
        %2525 = vmatprep.subr.mxu0 0.0
        %2526 = vmatpush1.msra.mxu0 0.0
        %2527 = vmatprep.subr.mxu0 0.0
        %2528 = vmatpush1.msra.mxu0 0.0
        %2529 = vmatprep.subr.mxu0 0.0
        %2530 = vmatpush1.msra.mxu0 0.0
        %2531 = vmatprep.subr.mxu0 0.0
        %2532 = vmatpush1.msra.mxu0 0.0
        %2533 = vmatprep.subr.mxu0 0.0
        %2534 = vmatpush1.msra.mxu0 0.0
        %2535 = vmatprep.subr.mxu0 0.0
        %2536 = vmatpush1.msra.mxu0 0.0
        %2537 = vmatprep.subr.mxu0 0.0
        %2538 = vmatpush1.msra.mxu0 0.0
        %2539 = vmatprep.subr.mxu0 0.0
        %2540 = vmatpush1.msra.mxu0 0.0
        %2541 = vmatprep.subr.mxu0 0.0
        %2542 = vmatpush1.msra.mxu0 0.0
        %2543 = vmatprep.subr.mxu0 0.0
        %2544 = vmatpush1.msra.mxu0 0.0
        %2545 = vmatprep.subr.mxu0 0.0
        %2546 = vmatpush1.msra.mxu0 0.0
        %2547 = vmatprep.subr.mxu0 0.0
        %2548 = vmatpush1.msra.mxu0 0.0
        %2549 = vmatprep.subr.mxu0 0.0
        %2550 = vmatpush1.msra.mxu0 0.0
        %2551 = vmatprep.mubr.f32.mxu0 0.0
        %2552 = vmatmul.mubr.f32.gmra.mrb[0].mxu0 %v2479
        %v2553 = vpop.f32.mrb[0].mxu0
        %v2554 = vadd.f32 0.0, %v2553
        %v2555 = vpop.f32.mrb[0].mxu0
        %v2556 = vadd.f32 0.0, %v2555
        %2557 = vdwg.mxu0
        %v2558 = vadd.f32 %v2466, %v2554
        %v2559 = vadd.f32 %v2467, %v2556
        %2560 = vrot.lane.b32.xlu0 %v2019, 113
        %v2561 = vpop.permute.xlu0 %2560
        %2562 = vrot.lane.b32.xlu0 %v2020, 113
        %v2563 = vpop.permute.xlu0 %2562
        %v2564 = vsel %vm1451, %v2561, %v2563
        %v2565 = vsel %vm1451, %v2563, %v2561
        %v2566 = vmul.f32 %v2564, %v1625
        %v2567 = vmul.f32 %v2565, %v1629
        %s2568 = scalar_lea.vmem %s6, 48
        %v2569 = vld [vmem:[%s2568] sm:$0xff]
        %v2571 = vsel %vm353, %v2569, 0
        %v2574 = vsel %vm357, %v2566, 0
        %v2577 = vsel %vm357, %v2567, 0
        %2579 = vmatprep.subr.mxu0 %v2577
        %2580 = vmatpush1.msra.mxu0 %v2574
        %2581 = vmatprep.subr.mxu0 0.0
        %2582 = vmatpush1.msra.mxu0 0.0
        %2583 = vmatprep.subr.mxu0 0.0
        %2584 = vmatpush1.msra.mxu0 0.0
        %2585 = vmatprep.subr.mxu0 0.0
        %2586 = vmatpush1.msra.mxu0 0.0
        %2587 = vmatprep.subr.mxu0 0.0
        %2588 = vmatpush1.msra.mxu0 0.0
        %2589 = vmatprep.subr.mxu0 0.0
        %2590 = vmatpush1.msra.mxu0 0.0
        %2591 = vmatprep.subr.mxu0 0.0
        %2592 = vmatpush1.msra.mxu0 0.0
        %2593 = vmatprep.subr.mxu0 0.0
        %2594 = vmatpush1.msra.mxu0 0.0
        %2595 = vmatprep.subr.mxu0 0.0
        %2596 = vmatpush1.msra.mxu0 0.0
        %2597 = vmatprep.subr.mxu0 0.0
        %2598 = vmatpush1.msra.mxu0 0.0
        %2599 = vmatprep.subr.mxu0 0.0
        %2600 = vmatpush1.msra.mxu0 0.0
        %2601 = vmatprep.subr.mxu0 0.0
        %2602 = vmatpush1.msra.mxu0 0.0
        %2603 = vmatprep.subr.mxu0 0.0
        %2604 = vmatpush1.msra.mxu0 0.0
        %2605 = vmatprep.subr.mxu0 0.0
        %2606 = vmatpush1.msra.mxu0 0.0
        %2607 = vmatprep.subr.mxu0 0.0
        %2608 = vmatpush1.msra.mxu0 0.0
        %2609 = vmatprep.subr.mxu0 0.0
        %2610 = vmatpush1.msra.mxu0 0.0
        %2611 = vmatprep.subr.mxu0 0.0
        %2612 = vmatpush1.msra.mxu0 0.0
        %2613 = vmatprep.subr.mxu0 0.0
        %2614 = vmatpush1.msra.mxu0 0.0
        %2615 = vmatprep.subr.mxu0 0.0
        %2616 = vmatpush1.msra.mxu0 0.0
        %2617 = vmatprep.subr.mxu0 0.0
        %2618 = vmatpush1.msra.mxu0 0.0
        %2619 = vmatprep.subr.mxu0 0.0
        %2620 = vmatpush1.msra.mxu0 0.0
        %2621 = vmatprep.subr.mxu0 0.0
        %2622 = vmatpush1.msra.mxu0 0.0
        %2623 = vmatprep.subr.mxu0 0.0
        %2624 = vmatpush1.msra.mxu0 0.0
        %2625 = vmatprep.subr.mxu0 0.0
        %2626 = vmatpush1.msra.mxu0 0.0
        %2627 = vmatprep.subr.mxu0 0.0
        %2628 = vmatpush1.msra.mxu0 0.0
        %2629 = vmatprep.subr.mxu0 0.0
        %2630 = vmatpush1.msra.mxu0 0.0
        %2631 = vmatprep.subr.mxu0 0.0
        %2632 = vmatpush1.msra.mxu0 0.0
        %2633 = vmatprep.subr.mxu0 0.0
        %2634 = vmatpush1.msra.mxu0 0.0
        %2635 = vmatprep.subr.mxu0 0.0
        %2636 = vmatpush1.msra.mxu0 0.0
        %2637 = vmatprep.subr.mxu0 0.0
        %2638 = vmatpush1.msra.mxu0 0.0
        %2639 = vmatprep.subr.mxu0 0.0
        %2640 = vmatpush1.msra.mxu0 0.0
        %2641 = vmatprep.subr.mxu0 0.0
        %2642 = vmatpush1.msra.mxu0 0.0
        %2643 = vmatprep.mubr.f32.mxu0 0.0
        %2644 = vmatmul.mubr.f32.gmra.mrb[0].mxu0 %v2571
        %v2645 = vpop.f32.mrb[0].mxu0
        %v2646 = vadd.f32 0.0, %v2645
        %v2647 = vpop.f32.mrb[0].mxu0
        %v2648 = vadd.f32 0.0, %v2647
        %2649 = vdwg.mxu0
        %v2650 = vadd.f32 %v2558, %v2646
        %v2651 = vadd.f32 %v2559, %v2648
        %2652 = vrot.lane.b32.xlu0 %v2019, 112
        %v2653 = vpop.permute.xlu0 %2652
        %2654 = vrot.lane.b32.xlu0 %v2020, 112
        %v2655 = vpop.permute.xlu0 %2654
        %v2656 = vsel %vm1640, %v2653, %v2655
        %v2657 = vsel %vm1640, %v2655, %v2653
        %v2658 = vmul.f32 %v2656, %v1814
        %v2659 = vmul.f32 %v2657, %v1818
        %s2660 = scalar_lea.vmem %s6, 56
        %v2661 = vld [vmem:[%s2660] sm:$0xff]
        %v2663 = vsel %vm353, %v2661, 0
        %v2666 = vsel %vm357, %v2658, 0
        %v2669 = vsel %vm357, %v2659, 0
        %2671 = vmatprep.subr.mxu0 %v2669
        %2672 = vmatpush1.msra.mxu0 %v2666
        %2673 = vmatprep.subr.mxu0 0.0
        %2674 = vmatpush1.msra.mxu0 0.0
        %2675 = vmatprep.subr.mxu0 0.0
        %2676 = vmatpush1.msra.mxu0 0.0
        %2677 = vmatprep.subr.mxu0 0.0
        %2678 = vmatpush1.msra.mxu0 0.0
        %2679 = vmatprep.subr.mxu0 0.0
        %2680 = vmatpush1.msra.mxu0 0.0
        %2681 = vmatprep.subr.mxu0 0.0
        %2682 = vmatpush1.msra.mxu0 0.0
        %2683 = vmatprep.subr.mxu0 0.0
        %2684 = vmatpush1.msra.mxu0 0.0
        %2685 = vmatprep.subr.mxu0 0.0
        %2686 = vmatpush1.msra.mxu0 0.0
        %2687 = vmatprep.subr.mxu0 0.0
        %2688 = vmatpush1.msra.mxu0 0.0
        %2689 = vmatprep.subr.mxu0 0.0
        %2690 = vmatpush1.msra.mxu0 0.0
        %2691 = vmatprep.subr.mxu0 0.0
        %2692 = vmatpush1.msra.mxu0 0.0
        %2693 = vmatprep.subr.mxu0 0.0
        %2694 = vmatpush1.msra.mxu0 0.0
        %2695 = vmatprep.subr.mxu0 0.0
        %2696 = vmatpush1.msra.mxu0 0.0
        %2697 = vmatprep.subr.mxu0 0.0
        %2698 = vmatpush1.msra.mxu0 0.0
        %2699 = vmatprep.subr.mxu0 0.0
        %2700 = vmatpush1.msra.mxu0 0.0
        %2701 = vmatprep.subr.mxu0 0.0
        %2702 = vmatpush1.msra.mxu0 0.0
        %2703 = vmatprep.subr.mxu0 0.0
        %2704 = vmatpush1.msra.mxu0 0.0
        %2705 = vmatprep.subr.mxu0 0.0
        %2706 = vmatpush1.msra.mxu0 0.0
        %2707 = vmatprep.subr.mxu0 0.0
        %2708 = vmatpush1.msra.mxu0 0.0
        %2709 = vmatprep.subr.mxu0 0.0
        %2710 = vmatpush1.msra.mxu0 0.0
        %2711 = vmatprep.subr.mxu0 0.0
        %2712 = vmatpush1.msra.mxu0 0.0
        %2713 = vmatprep.subr.mxu0 0.0
        %2714 = vmatpush1.msra.mxu0 0.0
        %2715 = vmatprep.subr.mxu0 0.0
        %2716 = vmatpush1.msra.mxu0 0.0
        %2717 = vmatprep.subr.mxu0 0.0
        %2718 = vmatpush1.msra.mxu0 0.0
        %2719 = vmatprep.subr.mxu0 0.0
        %2720 = vmatpush1.msra.mxu0 0.0
        %2721 = vmatprep.subr.mxu0 0.0
        %2722 = vmatpush1.msra.mxu0 0.0
        %2723 = vmatprep.subr.mxu0 0.0
        %2724 = vmatpush1.msra.mxu0 0.0
        %2725 = vmatprep.subr.mxu0 0.0
        %2726 = vmatpush1.msra.mxu0 0.0
        %2727 = vmatprep.subr.mxu0 0.0
        %2728 = vmatpush1.msra.mxu0 0.0
        %2729 = vmatprep.subr.mxu0 0.0
        %2730 = vmatpush1.msra.mxu0 0.0
        %2731 = vmatprep.subr.mxu0 0.0
        %2732 = vmatpush1.msra.mxu0 0.0
        %2733 = vmatprep.subr.mxu0 0.0
        %2734 = vmatpush1.msra.mxu0 0.0
        %2735 = vmatprep.mubr.f32.mxu0 0.0
        %2736 = vmatmul.mubr.f32.gmra.mrb[0].mxu0 %v2663
        %v2737 = vpop.f32.mrb[0].mxu0
        %v2738 = vadd.f32 0.0, %v2737
        %v2739 = vpop.f32.mrb[0].mxu0
        %v2740 = vadd.f32 0.0, %v2739
        %2741 = vdwg.mxu0
        %v2742 = vadd.f32 %v2650, %v2738
        %v2743 = vadd.f32 %v2651, %v2740
        %2744 = vrot.lane.b32.xlu0 %v2019, 111
        %v2745 = vpop.permute.xlu0 %2744
        %2746 = vrot.lane.b32.xlu0 %v2020, 111
        %v2747 = vpop.permute.xlu0 %2746
        %v2748 = vsel %vm1829, %v2745, %v2747
        %v2749 = vsel %vm1829, %v2747, %v2745
        %v2750 = vmul.f32 %v2748, %v2003
        %v2751 = vmul.f32 %v2749, %v2007
        %s2752 = scalar_lea.vmem %s6, 64
        %v2753 = vld [vmem:[%s2752] sm:$0xff]
        %v2755 = vsel %vm353, %v2753, 0
        %v2758 = vsel %vm357, %v2750, 0
        %v2761 = vsel %vm357, %v2751, 0
        %2763 = vmatprep.subr.mxu0 %v2761
        %2764 = vmatpush1.msra.mxu0 %v2758
        %2765 = vmatprep.subr.mxu0 0.0
        %2766 = vmatpush1.msra.mxu0 0.0
        %2767 = vmatprep.subr.mxu0 0.0
        %2768 = vmatpush1.msra.mxu0 0.0
        %2769 = vmatprep.subr.mxu0 0.0
        %2770 = vmatpush1.msra.mxu0 0.0
        %2771 = vmatprep.subr.mxu0 0.0
        %2772 = vmatpush1.msra.mxu0 0.0
        %2773 = vmatprep.subr.mxu0 0.0
        %2774 = vmatpush1.msra.mxu0 0.0
        %2775 = vmatprep.subr.mxu0 0.0
        %2776 = vmatpush1.msra.mxu0 0.0
        %2777 = vmatprep.subr.mxu0 0.0
        %2778 = vmatpush1.msra.mxu0 0.0
        %2779 = vmatprep.subr.mxu0 0.0
        %2780 = vmatpush1.msra.mxu0 0.0
        %2781 = vmatprep.subr.mxu0 0.0
        %2782 = vmatpush1.msra.mxu0 0.0
        %2783 = vmatprep.subr.mxu0 0.0
        %2784 = vmatpush1.msra.mxu0 0.0
        %2785 = vmatprep.subr.mxu0 0.0
        %2786 = vmatpush1.msra.mxu0 0.0
        %2787 = vmatprep.subr.mxu0 0.0
        %2788 = vmatpush1.msra.mxu0 0.0
        %2789 = vmatprep.subr.mxu0 0.0
        %2790 = vmatpush1.msra.mxu0 0.0
        %2791 = vmatprep.subr.mxu0 0.0
        %2792 = vmatpush1.msra.mxu0 0.0
        %2793 = vmatprep.subr.mxu0 0.0
        %2794 = vmatpush1.msra.mxu0 0.0
        %2795 = vmatprep.subr.mxu0 0.0
        %2796 = vmatpush1.msra.mxu0 0.0
        %2797 = vmatprep.subr.mxu0 0.0
        %2798 = vmatpush1.msra.mxu0 0.0
        %2799 = vmatprep.subr.mxu0 0.0
        %2800 = vmatpush1.msra.mxu0 0.0
        %2801 = vmatprep.subr.mxu0 0.0
        %2802 = vmatpush1.msra.mxu0 0.0
        %2803 = vmatprep.subr.mxu0 0.0
        %2804 = vmatpush1.msra.mxu0 0.0
        %2805 = vmatprep.subr.mxu0 0.0
        %2806 = vmatpush1.msra.mxu0 0.0
        %2807 = vmatprep.subr.mxu0 0.0
        %2808 = vmatpush1.msra.mxu0 0.0
        %2809 = vmatprep.subr.mxu0 0.0
        %2810 = vmatpush1.msra.mxu0 0.0
        %2811 = vmatprep.subr.mxu0 0.0
        %2812 = vmatpush1.msra.mxu0 0.0
        %2813 = vmatprep.subr.mxu0 0.0
        %2814 = vmatpush1.msra.mxu0 0.0
        %2815 = vmatprep.subr.mxu0 0.0
        %2816 = vmatpush1.msra.mxu0 0.0
        %2817 = vmatprep.subr.mxu0 0.0
        %2818 = vmatpush1.msra.mxu0 0.0
        %2819 = vmatprep.subr.mxu0 0.0
        %2820 = vmatpush1.msra.mxu0 0.0
        %2821 = vmatprep.subr.mxu0 0.0
        %2822 = vmatpush1.msra.mxu0 0.0
        %2823 = vmatprep.subr.mxu0 0.0
        %2824 = vmatpush1.msra.mxu0 0.0
        %2825 = vmatprep.subr.mxu0 0.0
        %2826 = vmatpush1.msra.mxu0 0.0
        %2827 = vmatprep.mubr.f32.mxu0 0.0
        %2828 = vmatmul.mubr.f32.gmra.mrb[0].mxu0 %v2755
        %v2829 = vpop.f32.mrb[0].mxu0
        %v2830 = vadd.f32 0.0, %v2829
        %v2831 = vpop.f32.mrb[0].mxu0
        %v2832 = vadd.f32 0.0, %v2831
        %2833 = vdwg.mxu0
        %v2834 = vadd.f32 %v2742, %v2830
        %v2835 = vadd.f32 %v2743, %v2832
        %2837 = vset.pattern.permute.xlu0 0
        %2838 = vperm.xlu0 %2837, %v327
        %v2839 = vpop.permute.xlu0 %2838
        %v2841 = vadd.f32 %v2834, %v2839
        %v2842 = vadd.f32 %v2835, %v2839
        %v2843 = vsel %vm357, %v329, 0.0
        %v2844 = vsel %vm357, %v345, 0.0
        %v2845 = vadd.f32 %v2843, %v2844
        %2846 = vadd.xlane.f32.xlu0 %v2845
        %v2847 = vpop.xlane.xlu0 %2846
        %v2848 = vrcp.pop 256.0
        %v2849 = vmul.f32 %v2847, %v2848
        %v2852 = vunpack.c.l.s4 839922192
        %v2853 = vunpack.c.0.s8 %v2852
        %v2854 = vlaneseq
        %v2855 = vshrl.u32 %v2854, 7
        %v2856 = vsub.s32 %v2853, %v2855
        %v2857 = vrot.slane %v2849, %v2856
        %v2859 = vsub.f32 %v329, %v2857
        %v2860 = vmul.f32 %v2859, %v2859
        %v2862 = vcombine.high %v2860, %v2860
        %v2864 = vsel %vm357, %v2860, 0.0
        %v2865 = vsel %vm357, %v2862, 0.0
        %v2866 = vadd.f32 %v2864, %v2865
        %2867 = vadd.xlane.f32.xlu0 %v2866
        %v2868 = vpop.xlane.xlu0 %2867
        %v2869 = vmul.f32 %v2868, %v2848
        %v2870 = vadd.f32 %v2869, 1e-05
        %v2871 = vrsqrt.pop %v2870
        %v2874 = vunpack.c.l.s4 839922192
        %v2875 = vunpack.c.0.s8 %v2874
        %v2876 = vlaneseq
        %v2877 = vshrl.u32 %v2876, 7
        %v2878 = vsub.s32 %v2875, %v2877
        %v2879 = vrot.slane %v2871, %v2878
        %v2881 = vmul.f32 %v2859, %v2879
        %v2882 = vsel %vm357, %v328, 0.0
        %v2883 = vsel %vm357, %v332, 0.0
        %v2884 = vadd.f32 %v2882, %v2883
        %2885 = vadd.xlane.f32.xlu0 %v2884
        %v2886 = vpop.xlane.xlu0 %2885
        %v2887 = vmul.f32 %v328, %v328
        %v2889 = vcombine.high %v2887, %v2887
        %v2891 = vsel %vm357, %v2887, 0.0
        %v2892 = vsel %vm357, %v2889, 0.0
        %v2893 = vadd.f32 %v2891, %v2892
        %2894 = vadd.xlane.f32.xlu0 %v2893
        %v2895 = vpop.xlane.xlu0 %2894
        %v2896 = vmul.f32 %v2886, 0.00390625
        %v2897 = vmul.f32 %v2886, %v2896
        %v2898 = vsub.f32 %v2895, %v2897
        %v2899 = vmul.f32 %v2898, 0.003921569
        %v2900 = vmax.f32 %v2899, 0.0
        %v2901 = vrsqrt.pop %v2900
        %v2902 = vmul.f32 %v2900, %v2901
        %vm2903 = vcmp.eq.f32.partialorder %v2900, inf
        %v2904 = vsel %vm2903, %v2900, %v2902
        %vm2905 = vcmp.eq.f32.partialorder %v2900, 0.0
        %v2906 = vand.u32 %v2900, 2147483648
        %v2907 = vsel %vm2905, %v2906, %v2904
        %v2908 = vadd.f32 %v2841, %v2907
        %v2909 = vadd.f32 %v2842, %v2907
        %v2912 = vcombine.low %v2908, %v2909
        %v2914 = vmul.f32 %v2881, %v2912
        %v2916 = vrot.slane %v2896, 4
        %v2918 = vadd.f32 %v2841, %v2916
        %v2919 = vadd.f32 %v2842, %v2916
        %v2922 = vcombine.high %v2918, %v2919
        %v2924 = vadd.f32 %v2914, %v2922
        %2925 = vst [vmem:[%s313] sm:$0xff] %v2924
        %s2926 = sand.u32 %s208, 1
        %s2927 = scalar_lea.sflag [#allocation3], %s2926
        %s2928 = sand.u32 %s208, 1
        %s2929 = smul.addr %s2928, 8
        %s2930 = scalar_lea.vmem [#allocation2], %s2929
        // Predicated region
        $region53: #{tpu_custom_call.1} parent=51 // pred_check
          %p2931 = pneg %p218
        $region54: #{tpu_custom_call.1} parent=51 // pred_check_branch
          %2933 = sbr.rel (%p2931) target = $region56
        $region55: #{tpu_custom_call.1} parent=51 // pred_region
          %s2935 = ssub.s32 128, 128
          %2936 = vsyncadd %s2927, %s2935
          %s2937 = smul.addr %s22, 2
          %s2938 = smul.addr %s2937, 64
          %s2939 = scalar_lea.hbm %s8, %s2938
          %s2941 = sshll.u32 %s2930, 4
          %s2942 = int_to_ptr.vmem [resolvable:$true] %s2941
          %2944 = dma.vmem_to_hbm [thread:$0]  %s2942, 128, %s2939, %s2927
        $region56: #{tpu_custom_call.1} parent=51 // pred_fallthru
          _
      $region52: #{tpu_custom_call.1} parent=5 // pred_fallthru
        _
      %p2945 = scmp.le.s32.totalorder 2, %s17
      // Predicated region
      $region57: #{tpu_custom_call.1} parent=5 // pred_check
        %p2946 = pneg %p2945
      $region58: #{tpu_custom_call.1} parent=5 // pred_check_branch
        %2948 = sbr.rel (%p2946) target = $region60
      $region59: #{tpu_custom_call.1} parent=5 // pred_region
        %s2949 = ssub.s32 %s17, 2
        // Predicated region
        $region61: #{tpu_custom_call.1} parent=59 // pred_check
          %p2950 = pneg %p224
        $region62: #{tpu_custom_call.1} parent=59 // pred_check_branch
          %2952 = sbr.rel (%p2950) target = $region64
        $region63: #{tpu_custom_call.1} parent=59 // pred_region
          %s2953 = sand.u32 %s209, 1
          %s2954 = scalar_lea.sflag [#allocation3], %s2953
          %s2955 = sand.u32 %s209, 1
          %s2956 = smul.addr %s2955, 8
          %s2957 = scalar_lea.vmem [#allocation2], %s2956
          %2958 = dma.done %s2954, 128
        $region64: #{tpu_custom_call.1} parent=59 // pred_fallthru
          _
      $region60: #{tpu_custom_call.1} parent=5 // pred_fallthru
        _
    $region6: #{tpu_custom_call.1} parent=1 // loop_footer
      %s21 = sadd.s32 1, %s17
    $region7: #{tpu_custom_call.1} parent=1 // loop_footer_branch
      %16 = sbr.rel target = $region3
    $region8: #{tpu_custom_call.1} parent=1 // loop_exit
      _
    %2959 = vsyncpa [#allocation3], 1
    %s2960 = scalar_lea.sflag [#allocation3], 1
    %2961 = vsyncpa %s2960, 1

</llo_original>
